<compile_context>
chip_gen: v6e
topology: v6e:2x2x1
jax: 0.10.0
libtpu: 0.0.40
codegen_flags: <defaults>
</compile_context>

<pallas_src>
import jax
import jax.numpy as jnp
from jax.experimental import pallas as pl
from jax.experimental.pallas import tpu as pltpu

# Model hyper-parameters (small, consistent with the PyTorch module's __init__).
VOCAB = 100       # vocab_size
EMB = 32          # embedding_dim (d_model)
HEADS = 4         # num_heads
FFN = 64          # ffn_hid_dim (dim_feedforward)
LAYERS = 2        # num_layers
BATCH = 2
SEQ = 8
HEAD_DIM = EMB // HEADS
EPS = 1e-5        # PyTorch LayerNorm default eps

# ---- packed parameter slab layout (lane width = 3*EMB = 96) -------------------
LANES = 3 * EMB
O_WQKV = 0                    # (EMB, 3*EMB)  rows [0, 32)
O_WOUT = EMB                  # (EMB, EMB)    rows [32, 64)   lanes [:EMB]
O_W1 = 2 * EMB                # (EMB, FFN)    rows [64, 96)   lanes [:FFN]
O_W2 = 3 * EMB                # (FFN, EMB)    rows [96, 160)  lanes [:EMB]
O_BIAS = 3 * EMB + FFN        # 8 bias/gamma rows             rows [160, 168)
PER_LAYER_ROWS = 3 * EMB + FFN + 8   # 168
TOTAL_ROWS = LAYERS * PER_LAYER_ROWS + 2   # + wfc row + bfc row


def _layer_norm(x, gamma, beta):
    # LayerNorm over the last (feature) dim, biased variance — matches nn.LayerNorm.
    mu = jnp.mean(x, axis=-1, keepdims=True)
    xc = x - mu
    var = jnp.mean(xc * xc, axis=-1, keepdims=True)
    return xc * jax.lax.rsqrt(var + EPS) * gamma + beta


def sentiment_transformer_kernel(tok_ref, emb_ref, p_ref, out_ref):
    B, S, E, H, Dh, F = BATCH, SEQ, EMB, HEADS, HEAD_DIM, FFN
    N = B * S
    scale = 1.0 / float(Dh) ** 0.5

    # ---- fused embedding lookup: one-hot(tokens) @ table on the MXU ----------
    tok = tok_ref[...]                                              # (N, 1) int32
    vocab_ids = jax.lax.broadcasted_iota(jnp.int32, (N, VOCAB), 1)  # (N, VOCAB)
    onehot = (tok == vocab_ids).astype(jnp.float32)
    x = jnp.dot(onehot, emb_ref[...], preferred_element_type=jnp.float32)  # (N, E)

    for layer in range(LAYERS):
        base = layer * PER_LAYER_ROWS
        # weights are already in "x @ W" orientation (host-side pre-transpose).
        wqkv = p_ref[base + O_WQKV: base + O_WQKV + E, :]             # (E, 3E)
        wout = p_ref[base + O_WOUT: base + O_WOUT + E, :][:, :E]      # (E, E)
        w1 = p_ref[base + O_W1: base + O_W1 + E, :][:, :F]            # (E, F)
        w2 = p_ref[base + O_W2: base + O_W2 + F, :][:, :E]            # (F, E)
        br = p_ref[base + O_BIAS: base + O_BIAS + 8, :]               # (8, 3E)
        bqkv = br[0:1, :]                                             # (1, 3E)
        bout = br[1:2, :E]
        b1 = br[2:3, :F]
        b2 = br[3:4, :E]
        g1, be1 = br[4:5, :E], br[5:6, :E]
        g2, be2 = br[6:7, :E], br[7:8, :E]

        # --- multi-head self-attention (batched over B, static unroll over H) ---
        qkv = jnp.dot(x, wqkv, preferred_element_type=jnp.float32) + bqkv   # (N, 3E)
        qkv = qkv.reshape(B, S, 3 * E)                                      # layout no-op
        q = qkv[:, :, 0:E] * scale
        k = qkv[:, :, E:2 * E]
        v = qkv[:, :, 2 * E:3 * E]

        heads = []
        for h in range(H):
            lo, hi = h * Dh, (h + 1) * Dh
            sc = jnp.einsum("bqd,bkd->bqk", q[:, :, lo:hi], k[:, :, lo:hi],
                            preferred_element_type=jnp.float32)             # (B, S, S)
            sc = sc - jnp.max(sc, axis=-1, keepdims=True)
            pr = jnp.exp(sc)
            pr = pr / jnp.sum(pr, axis=-1, keepdims=True)
            heads.append(jnp.einsum("bqk,bkd->bqd", pr, v[:, :, lo:hi],
                                    preferred_element_type=jnp.float32))    # (B, S, Dh)
        attn = jnp.concatenate(heads, axis=-1).reshape(N, E)                # (N, E)
        attn = jnp.dot(attn, wout, preferred_element_type=jnp.float32) + bout

        # --- residual + LayerNorm (post-norm, PyTorch default) ---------------
        x = _layer_norm(x + attn, g1, be1)

        # --- feed-forward ------------------------------------------------------
        h1 = jnp.maximum(jnp.dot(x, w1, preferred_element_type=jnp.float32) + b1, 0.0)
        ff = jnp.dot(h1, w2, preferred_element_type=jnp.float32) + b2
        x = _layer_norm(x + ff, g2, be2)

    # --- mean pool over sequence, final linear + sigmoid ----------------------
    pooled = jnp.mean(x.reshape(B, S, E), axis=1)                           # (B, E)
    tail = LAYERS * PER_LAYER_ROWS
    wfc = p_ref[tail: tail + 1, :][:, :E]                                   # (1, E)
    bfc = p_ref[tail + 1: tail + 2, :][:, 0:1]                              # (1, 1)
    logits = jnp.sum(pooled * wfc, axis=-1, keepdims=True) + bfc            # (B, 1)
    out_ref[...] = 1.0 / (1.0 + jnp.exp(-logits))


# ------------------------- host-side parameter packing ------------------------
def _pad_lanes(a, width):
    a = jnp.asarray(a, jnp.float32)
    if a.ndim == 1:
        a = a[None, :]
    return jnp.pad(a, ((0, 0), (0, width - a.shape[1])))


def pack_params(params):
    blocks = []
    for lp in params["layers"]:
        blocks.append(_pad_lanes(lp["wqkv"].T, LANES))   # (32, 96)  in_proj
        blocks.append(_pad_lanes(lp["wout"].T, LANES))   # (32, 96)  out_proj
        blocks.append(_pad_lanes(lp["w1"].T, LANES))     # (32, 96)  linear1
        blocks.append(_pad_lanes(lp["w2"].T, LANES))     # (64, 96)  linear2
        for b in (lp["bqkv"], lp["bout"], lp["b1"], lp["b2"],
                  lp["g1"], lp["be1"], lp["g2"], lp["be2"]):
            blocks.append(_pad_lanes(b, LANES))          # 8 x (1, 96)
    blocks.append(_pad_lanes(params["wfc"], LANES))      # (1, 96)
    blocks.append(_pad_lanes(params["bfc"], LANES))      # (1, 96)
    return jnp.concatenate(blocks, axis=0)               # (TOTAL_ROWS, 96)


@jax.jit
def sentiment_transformer(tokens, params):
    tok = tokens.reshape(BATCH * SEQ, 1).astype(jnp.int32)
    emb = params["embedding"].astype(jnp.float32)        # (VOCAB, EMB)
    pslab = pack_params(params)                          # (338, 96)

    out = pl.pallas_call(
        sentiment_transformer_kernel,
        out_shape=jax.ShapeDtypeStruct((BATCH, 1), jnp.float32),
        in_specs=[pl.BlockSpec(memory_space=pltpu.MemorySpace.VMEM)] * 3,
        out_specs=pl.BlockSpec(memory_space=pltpu.MemorySpace.VMEM),
    )(tok, emb, pslab)
    return out[:, 0]  # .squeeze() -> (B,)


# -------------------------- pure-JAX reference -------------------------------
def reference(tokens, params):
    x = params["embedding"][tokens].astype(jnp.float32)   # (B, S, E)
    B, S, E = x.shape
    H, Dh = HEADS, HEAD_DIM
    for lp in params["layers"]:
        qkv = x @ lp["wqkv"].T + lp["bqkv"]                # (B, S, 3E)
        q, k, v = jnp.split(qkv, 3, axis=-1)

        def split_heads(t):
            return t.reshape(B, S, H, Dh).transpose(0, 2, 1, 3)

        qh = split_heads(q) / jnp.sqrt(jnp.float32(Dh))
        kh = split_heads(k)
        vh = split_heads(v)
        sc = jnp.einsum("bhqd,bhkd->bhqk", qh, kh)
        p = jax.nn.softmax(sc, axis=-1)
        o = jnp.einsum("bhqk,bhkd->bhqd", p, vh).transpose(0, 2, 1, 3).reshape(B, S, E)
        o = o @ lp["wout"].T + lp["bout"]
        x = _layer_norm(x + o, lp["g1"], lp["be1"])
        f = jnp.maximum(x @ lp["w1"].T + lp["b1"], 0.0) @ lp["w2"].T + lp["b2"]
        x = _layer_norm(x + f, lp["g2"], lp["be2"])
    pooled = x.mean(axis=1)                                # mean over seq
    logits = pooled @ params["wfc"].T + params["bfc"]
    return jax.nn.sigmoid(logits)[:, 0]


# ----------------------------- parameter init ---------------------------------
def init_params(key):
    keys = jax.random.split(key, 3 + LAYERS * 8)
    ki = iter(range(len(keys)))

    def nrm(shape, scale=0.1):
        return jax.random.normal(keys[next(ki)], shape, dtype=jnp.float32) * scale

    params = {
        "embedding": nrm((VOCAB, EMB), 0.5),
        "layers": [],
        "wfc": nrm((1, EMB), 0.2),
        "bfc": jnp.zeros((1,), jnp.float32),
    }
    for _ in range(LAYERS):
        params["layers"].append(dict(
            wqkv=nrm((3 * EMB, EMB)), bqkv=nrm((3 * EMB,), 0.02),
            wout=nrm((EMB, EMB)), bout=nrm((EMB,), 0.02),
            w1=nrm((FFN, EMB)), b1=nrm((FFN,), 0.02),
            w2=nrm((EMB, FFN)), b2=nrm((EMB,), 0.02),
            g1=jnp.ones((EMB,), jnp.float32), be1=jnp.zeros((EMB,), jnp.float32),
            g2=jnp.ones((EMB,), jnp.float32), be2=jnp.zeros((EMB,), jnp.float32),
        ))
    return params


if __name__ == "__main__":
    key = jax.random.PRNGKey(0)
    pkey, tkey = jax.random.split(key)
    params = init_params(pkey)
    tokens = jax.random.randint(tkey, (BATCH, SEQ), 0, VOCAB, dtype=jnp.int32)

    out = sentiment_transformer(tokens, params)
    out = jax.block_until_ready(out)

    ref = reference(tokens, params)
    assert out.shape == (BATCH,), f"unexpected output shape {out.shape}"
    assert jnp.allclose(out, ref, atol=1e-4, rtol=1e-4), (out, ref)

    print("KERNEL_OK")
</pallas_src>

<mosaic_0001>
module attributes {stable_mosaic.version = 11 : i64} {
  func.func @sentiment_transformer_kernel(%arg0: memref<16x1xi32, #tpu.memory_space<vmem>>, %arg1: memref<100x32xf32, #tpu.memory_space<vmem>>, %arg2: memref<338x96xf32, #tpu.memory_space<vmem>>, %arg3: memref<2x1xf32, #tpu.memory_space<vmem>>) attributes {dimension_semantics = [], scalar_prefetch = 0 : i64, scratch_operands = 0 : i64, tpu.core_type = #tpu.core_type<tc>} {
    %c0 = arith.constant 0 : index
    %c0_0 = arith.constant 0 : index
    %0 = vector.load %arg0[%c0, %c0_0] : memref<16x1xi32, #tpu.memory_space<vmem>>, vector<16x1xi32>
    %1 = tpu.iota {dimensions = array<i32: 1>} : vector<16x100xi32>
    %2 = vector.broadcast %0 : vector<16x1xi32> to vector<16x100xi32>
    %3 = arith.cmpi eq, %2, %1 : vector<16x100xi32>
    %4 = arith.extui %3 : vector<16x100xi1> to vector<16x100xi32>
    %5 = arith.sitofp %4 : vector<16x100xi32> to vector<16x100xf32>
    %c0_1 = arith.constant 0 : index
    %c0_2 = arith.constant 0 : index
    %6 = vector.load %arg1[%c0_1, %c0_2] : memref<100x32xf32, #tpu.memory_space<vmem>>, vector<100x32xf32>
    %cst = arith.constant dense<0.000000e+00> : vector<16x32xf32>
    %7 = tpu.matmul %5, %6, %cst {dimension_numbers = #tpu.dot_dimension_numbers<[1], [0], [0], [1], [0, 0, 1, 1], [], []>} : vector<16x100xf32>, vector<100x32xf32>, vector<16x32xf32> -> vector<16x32xf32>
    %c0_3 = arith.constant 0 : index
    %c0_4 = arith.constant 0 : index
    %8 = vector.load %arg2[%c0_3, %c0_4] : memref<338x96xf32, #tpu.memory_space<vmem>>, vector<32x96xf32>
    %c32 = arith.constant 32 : index
    %c0_5 = arith.constant 0 : index
    %9 = vector.load %arg2[%c32, %c0_5] : memref<338x96xf32, #tpu.memory_space<vmem>>, vector<32x96xf32>
    %10 = vector.extract_strided_slice %9 {offsets = [0, 0], sizes = [32, 32], strides = [1, 1]} : vector<32x96xf32> to vector<32x32xf32>
    %c64 = arith.constant 64 : index
    %c0_6 = arith.constant 0 : index
    %11 = vector.load %arg2[%c64, %c0_6] : memref<338x96xf32, #tpu.memory_space<vmem>>, vector<32x96xf32>
    %12 = vector.extract_strided_slice %11 {offsets = [0, 0], sizes = [32, 64], strides = [1, 1]} : vector<32x96xf32> to vector<32x64xf32>
    %c96 = arith.constant 96 : index
    %c0_7 = arith.constant 0 : index
    %13 = vector.load %arg2[%c96, %c0_7] : memref<338x96xf32, #tpu.memory_space<vmem>>, vector<64x96xf32>
    %14 = vector.extract_strided_slice %13 {offsets = [0, 0], sizes = [64, 32], strides = [1, 1]} : vector<64x96xf32> to vector<64x32xf32>
    %c160 = arith.constant 160 : index
    %c0_8 = arith.constant 0 : index
    %15 = vector.load %arg2[%c160, %c0_8] : memref<338x96xf32, #tpu.memory_space<vmem>>, vector<8x96xf32>
    %16 = vector.extract_strided_slice %15 {offsets = [0, 0], sizes = [1, 96], strides = [1, 1]} : vector<8x96xf32> to vector<1x96xf32>
    %17 = vector.extract_strided_slice %15 {offsets = [1, 0], sizes = [1, 32], strides = [1, 1]} : vector<8x96xf32> to vector<1x32xf32>
    %18 = vector.extract_strided_slice %15 {offsets = [2, 0], sizes = [1, 64], strides = [1, 1]} : vector<8x96xf32> to vector<1x64xf32>
    %19 = vector.extract_strided_slice %15 {offsets = [3, 0], sizes = [1, 32], strides = [1, 1]} : vector<8x96xf32> to vector<1x32xf32>
    %20 = vector.extract_strided_slice %15 {offsets = [4, 0], sizes = [1, 32], strides = [1, 1]} : vector<8x96xf32> to vector<1x32xf32>
    %21 = vector.extract_strided_slice %15 {offsets = [5, 0], sizes = [1, 32], strides = [1, 1]} : vector<8x96xf32> to vector<1x32xf32>
    %22 = vector.extract_strided_slice %15 {offsets = [6, 0], sizes = [1, 32], strides = [1, 1]} : vector<8x96xf32> to vector<1x32xf32>
    %23 = vector.extract_strided_slice %15 {offsets = [7, 0], sizes = [1, 32], strides = [1, 1]} : vector<8x96xf32> to vector<1x32xf32>
    %cst_9 = arith.constant dense<0.000000e+00> : vector<16x96xf32>
    %24 = tpu.matmul %7, %8, %cst_9 {dimension_numbers = #tpu.dot_dimension_numbers<[1], [0], [0], [1], [0, 0, 1, 1], [], []>} : vector<16x32xf32>, vector<32x96xf32>, vector<16x96xf32> -> vector<16x96xf32>
    %25 = vector.broadcast %16 : vector<1x96xf32> to vector<16x96xf32>
    %26 = arith.addf %24, %25 : vector<16x96xf32>
    %27 = vector.shape_cast %26 : vector<16x96xf32> to vector<2x8x96xf32>
    %28 = vector.extract_strided_slice %27 {offsets = [0, 0, 0], sizes = [2, 8, 32], strides = [1, 1, 1]} : vector<2x8x96xf32> to vector<2x8x32xf32>
    %cst_10 = arith.constant 0.353553385 : f32
    %29 = vector.broadcast %cst_10 : f32 to vector<2x8x32xf32>
    %30 = arith.mulf %28, %29 : vector<2x8x32xf32>
    %31 = vector.extract_strided_slice %27 {offsets = [0, 0, 32], sizes = [2, 8, 32], strides = [1, 1, 1]} : vector<2x8x96xf32> to vector<2x8x32xf32>
    %32 = vector.extract_strided_slice %27 {offsets = [0, 0, 64], sizes = [2, 8, 32], strides = [1, 1, 1]} : vector<2x8x96xf32> to vector<2x8x32xf32>
    %33 = vector.extract_strided_slice %30 {offsets = [0, 0, 0], sizes = [2, 8, 8], strides = [1, 1, 1]} : vector<2x8x32xf32> to vector<2x8x8xf32>
    %34 = vector.extract_strided_slice %31 {offsets = [0, 0, 0], sizes = [2, 8, 8], strides = [1, 1, 1]} : vector<2x8x32xf32> to vector<2x8x8xf32>
    "tpu.trace_start"() <{level = 10 : i32, message = "bqd,bkd->bqk"}> : () -> ()
    %cst_11 = arith.constant dense<0.000000e+00> : vector<2x8x8xf32>
    %35 = tpu.matmul %33, %34, %cst_11 {dimension_numbers = #tpu.dot_dimension_numbers<[2], [2], [1], [1], [0, 0, 0, 1, 1, 1], [0], [0]>} : vector<2x8x8xf32>, vector<2x8x8xf32>, vector<2x8x8xf32> -> vector<2x8x8xf32>
    "tpu.trace_stop"() : () -> ()
    %cst_12 = arith.constant dense<0xFF800000> : vector<2x8xf32>
    %36 = vector.multi_reduction <maximumf>, %35, %cst_12 [2] : vector<2x8x8xf32> to vector<2x8xf32>
    %37 = vector.shape_cast %36 : vector<2x8xf32> to vector<2x8x1xf32>
    %38 = vector.broadcast %37 : vector<2x8x1xf32> to vector<2x8x8xf32>
    %39 = arith.subf %35, %38 : vector<2x8x8xf32>
    %40 = math.exp %39 : vector<2x8x8xf32>
    %cst_13 = arith.constant dense<0.000000e+00> : vector<2x8xf32>
    %41 = vector.multi_reduction <add>, %40, %cst_13 [2] : vector<2x8x8xf32> to vector<2x8xf32>
    %42 = vector.shape_cast %41 : vector<2x8xf32> to vector<2x8x1xf32>
    %43 = vector.broadcast %42 : vector<2x8x1xf32> to vector<2x8x8xf32>
    %44 = arith.divf %40, %43 : vector<2x8x8xf32>
    %45 = vector.extract_strided_slice %32 {offsets = [0, 0, 0], sizes = [2, 8, 8], strides = [1, 1, 1]} : vector<2x8x32xf32> to vector<2x8x8xf32>
    "tpu.trace_start"() <{level = 10 : i32, message = "bqk,bkd->bqd"}> : () -> ()
    %cst_14 = arith.constant dense<0.000000e+00> : vector<2x8x8xf32>
    %46 = tpu.matmul %44, %45, %cst_14 {dimension_numbers = #tpu.dot_dimension_numbers<[2], [1], [1], [2], [0, 0, 0, 1, 1, 2], [0], [0]>} : vector<2x8x8xf32>, vector<2x8x8xf32>, vector<2x8x8xf32> -> vector<2x8x8xf32>
    "tpu.trace_stop"() : () -> ()
    %47 = vector.extract_strided_slice %30 {offsets = [0, 0, 8], sizes = [2, 8, 8], strides = [1, 1, 1]} : vector<2x8x32xf32> to vector<2x8x8xf32>
    %48 = vector.extract_strided_slice %31 {offsets = [0, 0, 8], sizes = [2, 8, 8], strides = [1, 1, 1]} : vector<2x8x32xf32> to vector<2x8x8xf32>
    "tpu.trace_start"() <{level = 10 : i32, message = "bqd,bkd->bqk"}> : () -> ()
    %cst_15 = arith.constant dense<0.000000e+00> : vector<2x8x8xf32>
    %49 = tpu.matmul %47, %48, %cst_15 {dimension_numbers = #tpu.dot_dimension_numbers<[2], [2], [1], [1], [0, 0, 0, 1, 1, 1], [0], [0]>} : vector<2x8x8xf32>, vector<2x8x8xf32>, vector<2x8x8xf32> -> vector<2x8x8xf32>
    "tpu.trace_stop"() : () -> ()
    %cst_16 = arith.constant dense<0xFF800000> : vector<2x8xf32>
    %50 = vector.multi_reduction <maximumf>, %49, %cst_16 [2] : vector<2x8x8xf32> to vector<2x8xf32>
    %51 = vector.shape_cast %50 : vector<2x8xf32> to vector<2x8x1xf32>
    %52 = vector.broadcast %51 : vector<2x8x1xf32> to vector<2x8x8xf32>
    %53 = arith.subf %49, %52 : vector<2x8x8xf32>
    %54 = math.exp %53 : vector<2x8x8xf32>
    %cst_17 = arith.constant dense<0.000000e+00> : vector<2x8xf32>
    %55 = vector.multi_reduction <add>, %54, %cst_17 [2] : vector<2x8x8xf32> to vector<2x8xf32>
    %56 = vector.shape_cast %55 : vector<2x8xf32> to vector<2x8x1xf32>
    %57 = vector.broadcast %56 : vector<2x8x1xf32> to vector<2x8x8xf32>
    %58 = arith.divf %54, %57 : vector<2x8x8xf32>
    %59 = vector.extract_strided_slice %32 {offsets = [0, 0, 8], sizes = [2, 8, 8], strides = [1, 1, 1]} : vector<2x8x32xf32> to vector<2x8x8xf32>
    "tpu.trace_start"() <{level = 10 : i32, message = "bqk,bkd->bqd"}> : () -> ()
    %cst_18 = arith.constant dense<0.000000e+00> : vector<2x8x8xf32>
    %60 = tpu.matmul %58, %59, %cst_18 {dimension_numbers = #tpu.dot_dimension_numbers<[2], [1], [1], [2], [0, 0, 0, 1, 1, 2], [0], [0]>} : vector<2x8x8xf32>, vector<2x8x8xf32>, vector<2x8x8xf32> -> vector<2x8x8xf32>
    "tpu.trace_stop"() : () -> ()
    %61 = vector.extract_strided_slice %30 {offsets = [0, 0, 16], sizes = [2, 8, 8], strides = [1, 1, 1]} : vector<2x8x32xf32> to vector<2x8x8xf32>
    %62 = vector.extract_strided_slice %31 {offsets = [0, 0, 16], sizes = [2, 8, 8], strides = [1, 1, 1]} : vector<2x8x32xf32> to vector<2x8x8xf32>
    "tpu.trace_start"() <{level = 10 : i32, message = "bqd,bkd->bqk"}> : () -> ()
    %cst_19 = arith.constant dense<0.000000e+00> : vector<2x8x8xf32>
    %63 = tpu.matmul %61, %62, %cst_19 {dimension_numbers = #tpu.dot_dimension_numbers<[2], [2], [1], [1], [0, 0, 0, 1, 1, 1], [0], [0]>} : vector<2x8x8xf32>, vector<2x8x8xf32>, vector<2x8x8xf32> -> vector<2x8x8xf32>
    "tpu.trace_stop"() : () -> ()
    %cst_20 = arith.constant dense<0xFF800000> : vector<2x8xf32>
    %64 = vector.multi_reduction <maximumf>, %63, %cst_20 [2] : vector<2x8x8xf32> to vector<2x8xf32>
    %65 = vector.shape_cast %64 : vector<2x8xf32> to vector<2x8x1xf32>
    %66 = vector.broadcast %65 : vector<2x8x1xf32> to vector<2x8x8xf32>
    %67 = arith.subf %63, %66 : vector<2x8x8xf32>
    %68 = math.exp %67 : vector<2x8x8xf32>
    %cst_21 = arith.constant dense<0.000000e+00> : vector<2x8xf32>
    %69 = vector.multi_reduction <add>, %68, %cst_21 [2] : vector<2x8x8xf32> to vector<2x8xf32>
    %70 = vector.shape_cast %69 : vector<2x8xf32> to vector<2x8x1xf32>
    %71 = vector.broadcast %70 : vector<2x8x1xf32> to vector<2x8x8xf32>
    %72 = arith.divf %68, %71 : vector<2x8x8xf32>
    %73 = vector.extract_strided_slice %32 {offsets = [0, 0, 16], sizes = [2, 8, 8], strides = [1, 1, 1]} : vector<2x8x32xf32> to vector<2x8x8xf32>
    "tpu.trace_start"() <{level = 10 : i32, message = "bqk,bkd->bqd"}> : () -> ()
    %cst_22 = arith.constant dense<0.000000e+00> : vector<2x8x8xf32>
    %74 = tpu.matmul %72, %73, %cst_22 {dimension_numbers = #tpu.dot_dimension_numbers<[2], [1], [1], [2], [0, 0, 0, 1, 1, 2], [0], [0]>} : vector<2x8x8xf32>, vector<2x8x8xf32>, vector<2x8x8xf32> -> vector<2x8x8xf32>
    "tpu.trace_stop"() : () -> ()
    %75 = vector.extract_strided_slice %30 {offsets = [0, 0, 24], sizes = [2, 8, 8], strides = [1, 1, 1]} : vector<2x8x32xf32> to vector<2x8x8xf32>
    %76 = vector.extract_strided_slice %31 {offsets = [0, 0, 24], sizes = [2, 8, 8], strides = [1, 1, 1]} : vector<2x8x32xf32> to vector<2x8x8xf32>
    "tpu.trace_start"() <{level = 10 : i32, message = "bqd,bkd->bqk"}> : () -> ()
    %cst_23 = arith.constant dense<0.000000e+00> : vector<2x8x8xf32>
    %77 = tpu.matmul %75, %76, %cst_23 {dimension_numbers = #tpu.dot_dimension_numbers<[2], [2], [1], [1], [0, 0, 0, 1, 1, 1], [0], [0]>} : vector<2x8x8xf32>, vector<2x8x8xf32>, vector<2x8x8xf32> -> vector<2x8x8xf32>
    "tpu.trace_stop"() : () -> ()
    %cst_24 = arith.constant dense<0xFF800000> : vector<2x8xf32>
    %78 = vector.multi_reduction <maximumf>, %77, %cst_24 [2] : vector<2x8x8xf32> to vector<2x8xf32>
    %79 = vector.shape_cast %78 : vector<2x8xf32> to vector<2x8x1xf32>
    %80 = vector.broadcast %79 : vector<2x8x1xf32> to vector<2x8x8xf32>
    %81 = arith.subf %77, %80 : vector<2x8x8xf32>
    %82 = math.exp %81 : vector<2x8x8xf32>
    %cst_25 = arith.constant dense<0.000000e+00> : vector<2x8xf32>
    %83 = vector.multi_reduction <add>, %82, %cst_25 [2] : vector<2x8x8xf32> to vector<2x8xf32>
    %84 = vector.shape_cast %83 : vector<2x8xf32> to vector<2x8x1xf32>
    %85 = vector.broadcast %84 : vector<2x8x1xf32> to vector<2x8x8xf32>
    %86 = arith.divf %82, %85 : vector<2x8x8xf32>
    %87 = vector.extract_strided_slice %32 {offsets = [0, 0, 24], sizes = [2, 8, 8], strides = [1, 1, 1]} : vector<2x8x32xf32> to vector<2x8x8xf32>
    "tpu.trace_start"() <{level = 10 : i32, message = "bqk,bkd->bqd"}> : () -> ()
    %cst_26 = arith.constant dense<0.000000e+00> : vector<2x8x8xf32>
    %88 = tpu.matmul %86, %87, %cst_26 {dimension_numbers = #tpu.dot_dimension_numbers<[2], [1], [1], [2], [0, 0, 0, 1, 1, 2], [0], [0]>} : vector<2x8x8xf32>, vector<2x8x8xf32>, vector<2x8x8xf32> -> vector<2x8x8xf32>
    "tpu.trace_stop"() : () -> ()
    %89 = tpu.concatenate %46, %60, %74, %88 in 2 : vector<2x8x8xf32>, vector<2x8x8xf32>, vector<2x8x8xf32>, vector<2x8x8xf32> -> vector<2x8x32xf32>
    %90 = vector.shape_cast %89 : vector<2x8x32xf32> to vector<16x32xf32>
    %cst_27 = arith.constant dense<0.000000e+00> : vector<16x32xf32>
    %91 = tpu.matmul %90, %10, %cst_27 {dimension_numbers = #tpu.dot_dimension_numbers<[1], [0], [0], [1], [0, 0, 1, 1], [], []>} : vector<16x32xf32>, vector<32x32xf32>, vector<16x32xf32> -> vector<16x32xf32>
    %92 = vector.broadcast %17 : vector<1x32xf32> to vector<16x32xf32>
    %93 = arith.addf %91, %92 : vector<16x32xf32>
    %94 = arith.addf %7, %93 : vector<16x32xf32>
    %cst_28 = arith.constant dense<0.000000e+00> : vector<16xf32>
    %95 = vector.multi_reduction <add>, %94, %cst_28 [1] : vector<16x32xf32> to vector<16xf32>
    %96 = vector.shape_cast %95 : vector<16xf32> to vector<16x1xf32>
    %cst_29 = arith.constant 3.200000e+01 : f32
    %97 = vector.broadcast %cst_29 : f32 to vector<16x1xf32>
    %98 = arith.divf %96, %97 : vector<16x1xf32>
    %99 = vector.broadcast %98 : vector<16x1xf32> to vector<16x32xf32>
    %100 = arith.subf %94, %99 : vector<16x32xf32>
    %101 = arith.mulf %100, %100 : vector<16x32xf32>
    %cst_30 = arith.constant dense<0.000000e+00> : vector<16xf32>
    %102 = vector.multi_reduction <add>, %101, %cst_30 [1] : vector<16x32xf32> to vector<16xf32>
    %103 = vector.shape_cast %102 : vector<16xf32> to vector<16x1xf32>
    %cst_31 = arith.constant 3.200000e+01 : f32
    %104 = vector.broadcast %cst_31 : f32 to vector<16x1xf32>
    %105 = arith.divf %103, %104 : vector<16x1xf32>
    %cst_32 = arith.constant 9.99999974E-6 : f32
    %106 = vector.broadcast %cst_32 : f32 to vector<16x1xf32>
    %107 = arith.addf %105, %106 : vector<16x1xf32>
    %108 = math.rsqrt %107 : vector<16x1xf32>
    %109 = vector.broadcast %108 : vector<16x1xf32> to vector<16x32xf32>
    %110 = arith.mulf %100, %109 : vector<16x32xf32>
    %111 = vector.broadcast %20 : vector<1x32xf32> to vector<16x32xf32>
    %112 = arith.mulf %110, %111 : vector<16x32xf32>
    %113 = vector.broadcast %21 : vector<1x32xf32> to vector<16x32xf32>
    %114 = arith.addf %112, %113 : vector<16x32xf32>
    %cst_33 = arith.constant dense<0.000000e+00> : vector<16x64xf32>
    %115 = tpu.matmul %114, %12, %cst_33 {dimension_numbers = #tpu.dot_dimension_numbers<[1], [0], [0], [1], [0, 0, 1, 1], [], []>} : vector<16x32xf32>, vector<32x64xf32>, vector<16x64xf32> -> vector<16x64xf32>
    %116 = vector.broadcast %18 : vector<1x64xf32> to vector<16x64xf32>
    %117 = arith.addf %115, %116 : vector<16x64xf32>
    %cst_34 = arith.constant 0.000000e+00 : f32
    %118 = vector.broadcast %cst_34 : f32 to vector<16x64xf32>
    %119 = arith.maximumf %117, %118 : vector<16x64xf32>
    %cst_35 = arith.constant dense<0.000000e+00> : vector<16x32xf32>
    %120 = tpu.matmul %119, %14, %cst_35 {dimension_numbers = #tpu.dot_dimension_numbers<[1], [0], [0], [1], [0, 0, 1, 1], [], []>} : vector<16x64xf32>, vector<64x32xf32>, vector<16x32xf32> -> vector<16x32xf32>
    %121 = vector.broadcast %19 : vector<1x32xf32> to vector<16x32xf32>
    %122 = arith.addf %120, %121 : vector<16x32xf32>
    %123 = arith.addf %114, %122 : vector<16x32xf32>
    %cst_36 = arith.constant dense<0.000000e+00> : vector<16xf32>
    %124 = vector.multi_reduction <add>, %123, %cst_36 [1] : vector<16x32xf32> to vector<16xf32>
    %125 = vector.shape_cast %124 : vector<16xf32> to vector<16x1xf32>
    %cst_37 = arith.constant 3.200000e+01 : f32
    %126 = vector.broadcast %cst_37 : f32 to vector<16x1xf32>
    %127 = arith.divf %125, %126 : vector<16x1xf32>
    %128 = vector.broadcast %127 : vector<16x1xf32> to vector<16x32xf32>
    %129 = arith.subf %123, %128 : vector<16x32xf32>
    %130 = arith.mulf %129, %129 : vector<16x32xf32>
    %cst_38 = arith.constant dense<0.000000e+00> : vector<16xf32>
    %131 = vector.multi_reduction <add>, %130, %cst_38 [1] : vector<16x32xf32> to vector<16xf32>
    %132 = vector.shape_cast %131 : vector<16xf32> to vector<16x1xf32>
    %cst_39 = arith.constant 3.200000e+01 : f32
    %133 = vector.broadcast %cst_39 : f32 to vector<16x1xf32>
    %134 = arith.divf %132, %133 : vector<16x1xf32>
    %cst_40 = arith.constant 9.99999974E-6 : f32
    %135 = vector.broadcast %cst_40 : f32 to vector<16x1xf32>
    %136 = arith.addf %134, %135 : vector<16x1xf32>
    %137 = math.rsqrt %136 : vector<16x1xf32>
    %138 = vector.broadcast %137 : vector<16x1xf32> to vector<16x32xf32>
    %139 = arith.mulf %129, %138 : vector<16x32xf32>
    %140 = vector.broadcast %22 : vector<1x32xf32> to vector<16x32xf32>
    %141 = arith.mulf %139, %140 : vector<16x32xf32>
    %142 = vector.broadcast %23 : vector<1x32xf32> to vector<16x32xf32>
    %143 = arith.addf %141, %142 : vector<16x32xf32>
    %c168 = arith.constant 168 : index
    %c0_41 = arith.constant 0 : index
    %144 = vector.load %arg2[%c168, %c0_41] : memref<338x96xf32, #tpu.memory_space<vmem>>, vector<32x96xf32>
    %c200 = arith.constant 200 : index
    %c0_42 = arith.constant 0 : index
    %145 = vector.load %arg2[%c200, %c0_42] : memref<338x96xf32, #tpu.memory_space<vmem>>, vector<32x96xf32>
    %146 = vector.extract_strided_slice %145 {offsets = [0, 0], sizes = [32, 32], strides = [1, 1]} : vector<32x96xf32> to vector<32x32xf32>
    %c232 = arith.constant 232 : index
    %c0_43 = arith.constant 0 : index
    %147 = vector.load %arg2[%c232, %c0_43] : memref<338x96xf32, #tpu.memory_space<vmem>>, vector<32x96xf32>
    %148 = vector.extract_strided_slice %147 {offsets = [0, 0], sizes = [32, 64], strides = [1, 1]} : vector<32x96xf32> to vector<32x64xf32>
    %c264 = arith.constant 264 : index
    %c0_44 = arith.constant 0 : index
    %149 = vector.load %arg2[%c264, %c0_44] : memref<338x96xf32, #tpu.memory_space<vmem>>, vector<64x96xf32>
    %150 = vector.extract_strided_slice %149 {offsets = [0, 0], sizes = [64, 32], strides = [1, 1]} : vector<64x96xf32> to vector<64x32xf32>
    %c328 = arith.constant 328 : index
    %c0_45 = arith.constant 0 : index
    %151 = vector.load %arg2[%c328, %c0_45] : memref<338x96xf32, #tpu.memory_space<vmem>>, vector<8x96xf32>
    %152 = vector.extract_strided_slice %151 {offsets = [0, 0], sizes = [1, 96], strides = [1, 1]} : vector<8x96xf32> to vector<1x96xf32>
    %153 = vector.extract_strided_slice %151 {offsets = [1, 0], sizes = [1, 32], strides = [1, 1]} : vector<8x96xf32> to vector<1x32xf32>
    %154 = vector.extract_strided_slice %151 {offsets = [2, 0], sizes = [1, 64], strides = [1, 1]} : vector<8x96xf32> to vector<1x64xf32>
    %155 = vector.extract_strided_slice %151 {offsets = [3, 0], sizes = [1, 32], strides = [1, 1]} : vector<8x96xf32> to vector<1x32xf32>
    %156 = vector.extract_strided_slice %151 {offsets = [4, 0], sizes = [1, 32], strides = [1, 1]} : vector<8x96xf32> to vector<1x32xf32>
    %157 = vector.extract_strided_slice %151 {offsets = [5, 0], sizes = [1, 32], strides = [1, 1]} : vector<8x96xf32> to vector<1x32xf32>
    %158 = vector.extract_strided_slice %151 {offsets = [6, 0], sizes = [1, 32], strides = [1, 1]} : vector<8x96xf32> to vector<1x32xf32>
    %159 = vector.extract_strided_slice %151 {offsets = [7, 0], sizes = [1, 32], strides = [1, 1]} : vector<8x96xf32> to vector<1x32xf32>
    %cst_46 = arith.constant dense<0.000000e+00> : vector<16x96xf32>
    %160 = tpu.matmul %143, %144, %cst_46 {dimension_numbers = #tpu.dot_dimension_numbers<[1], [0], [0], [1], [0, 0, 1, 1], [], []>} : vector<16x32xf32>, vector<32x96xf32>, vector<16x96xf32> -> vector<16x96xf32>
    %161 = vector.broadcast %152 : vector<1x96xf32> to vector<16x96xf32>
    %162 = arith.addf %160, %161 : vector<16x96xf32>
    %163 = vector.shape_cast %162 : vector<16x96xf32> to vector<2x8x96xf32>
    %164 = vector.extract_strided_slice %163 {offsets = [0, 0, 0], sizes = [2, 8, 32], strides = [1, 1, 1]} : vector<2x8x96xf32> to vector<2x8x32xf32>
    %cst_47 = arith.constant 0.353553385 : f32
    %165 = vector.broadcast %cst_47 : f32 to vector<2x8x32xf32>
    %166 = arith.mulf %164, %165 : vector<2x8x32xf32>
    %167 = vector.extract_strided_slice %163 {offsets = [0, 0, 32], sizes = [2, 8, 32], strides = [1, 1, 1]} : vector<2x8x96xf32> to vector<2x8x32xf32>
    %168 = vector.extract_strided_slice %163 {offsets = [0, 0, 64], sizes = [2, 8, 32], strides = [1, 1, 1]} : vector<2x8x96xf32> to vector<2x8x32xf32>
    %169 = vector.extract_strided_slice %166 {offsets = [0, 0, 0], sizes = [2, 8, 8], strides = [1, 1, 1]} : vector<2x8x32xf32> to vector<2x8x8xf32>
    %170 = vector.extract_strided_slice %167 {offsets = [0, 0, 0], sizes = [2, 8, 8], strides = [1, 1, 1]} : vector<2x8x32xf32> to vector<2x8x8xf32>
    "tpu.trace_start"() <{level = 10 : i32, message = "bqd,bkd->bqk"}> : () -> ()
    %cst_48 = arith.constant dense<0.000000e+00> : vector<2x8x8xf32>
    %171 = tpu.matmul %169, %170, %cst_48 {dimension_numbers = #tpu.dot_dimension_numbers<[2], [2], [1], [1], [0, 0, 0, 1, 1, 1], [0], [0]>} : vector<2x8x8xf32>, vector<2x8x8xf32>, vector<2x8x8xf32> -> vector<2x8x8xf32>
    "tpu.trace_stop"() : () -> ()
    %cst_49 = arith.constant dense<0xFF800000> : vector<2x8xf32>
    %172 = vector.multi_reduction <maximumf>, %171, %cst_49 [2] : vector<2x8x8xf32> to vector<2x8xf32>
    %173 = vector.shape_cast %172 : vector<2x8xf32> to vector<2x8x1xf32>
    %174 = vector.broadcast %173 : vector<2x8x1xf32> to vector<2x8x8xf32>
    %175 = arith.subf %171, %174 : vector<2x8x8xf32>
    %176 = math.exp %175 : vector<2x8x8xf32>
    %cst_50 = arith.constant dense<0.000000e+00> : vector<2x8xf32>
    %177 = vector.multi_reduction <add>, %176, %cst_50 [2] : vector<2x8x8xf32> to vector<2x8xf32>
    %178 = vector.shape_cast %177 : vector<2x8xf32> to vector<2x8x1xf32>
    %179 = vector.broadcast %178 : vector<2x8x1xf32> to vector<2x8x8xf32>
    %180 = arith.divf %176, %179 : vector<2x8x8xf32>
    %181 = vector.extract_strided_slice %168 {offsets = [0, 0, 0], sizes = [2, 8, 8], strides = [1, 1, 1]} : vector<2x8x32xf32> to vector<2x8x8xf32>
    "tpu.trace_start"() <{level = 10 : i32, message = "bqk,bkd->bqd"}> : () -> ()
    %cst_51 = arith.constant dense<0.000000e+00> : vector<2x8x8xf32>
    %182 = tpu.matmul %180, %181, %cst_51 {dimension_numbers = #tpu.dot_dimension_numbers<[2], [1], [1], [2], [0, 0, 0, 1, 1, 2], [0], [0]>} : vector<2x8x8xf32>, vector<2x8x8xf32>, vector<2x8x8xf32> -> vector<2x8x8xf32>
    "tpu.trace_stop"() : () -> ()
    %183 = vector.extract_strided_slice %166 {offsets = [0, 0, 8], sizes = [2, 8, 8], strides = [1, 1, 1]} : vector<2x8x32xf32> to vector<2x8x8xf32>
    %184 = vector.extract_strided_slice %167 {offsets = [0, 0, 8], sizes = [2, 8, 8], strides = [1, 1, 1]} : vector<2x8x32xf32> to vector<2x8x8xf32>
    "tpu.trace_start"() <{level = 10 : i32, message = "bqd,bkd->bqk"}> : () -> ()
    %cst_52 = arith.constant dense<0.000000e+00> : vector<2x8x8xf32>
    %185 = tpu.matmul %183, %184, %cst_52 {dimension_numbers = #tpu.dot_dimension_numbers<[2], [2], [1], [1], [0, 0, 0, 1, 1, 1], [0], [0]>} : vector<2x8x8xf32>, vector<2x8x8xf32>, vector<2x8x8xf32> -> vector<2x8x8xf32>
    "tpu.trace_stop"() : () -> ()
    %cst_53 = arith.constant dense<0xFF800000> : vector<2x8xf32>
    %186 = vector.multi_reduction <maximumf>, %185, %cst_53 [2] : vector<2x8x8xf32> to vector<2x8xf32>
    %187 = vector.shape_cast %186 : vector<2x8xf32> to vector<2x8x1xf32>
    %188 = vector.broadcast %187 : vector<2x8x1xf32> to vector<2x8x8xf32>
    %189 = arith.subf %185, %188 : vector<2x8x8xf32>
    %190 = math.exp %189 : vector<2x8x8xf32>
    %cst_54 = arith.constant dense<0.000000e+00> : vector<2x8xf32>
    %191 = vector.multi_reduction <add>, %190, %cst_54 [2] : vector<2x8x8xf32> to vector<2x8xf32>
    %192 = vector.shape_cast %191 : vector<2x8xf32> to vector<2x8x1xf32>
    %193 = vector.broadcast %192 : vector<2x8x1xf32> to vector<2x8x8xf32>
    %194 = arith.divf %190, %193 : vector<2x8x8xf32>
    %195 = vector.extract_strided_slice %168 {offsets = [0, 0, 8], sizes = [2, 8, 8], strides = [1, 1, 1]} : vector<2x8x32xf32> to vector<2x8x8xf32>
    "tpu.trace_start"() <{level = 10 : i32, message = "bqk,bkd->bqd"}> : () -> ()
    %cst_55 = arith.constant dense<0.000000e+00> : vector<2x8x8xf32>
    %196 = tpu.matmul %194, %195, %cst_55 {dimension_numbers = #tpu.dot_dimension_numbers<[2], [1], [1], [2], [0, 0, 0, 1, 1, 2], [0], [0]>} : vector<2x8x8xf32>, vector<2x8x8xf32>, vector<2x8x8xf32> -> vector<2x8x8xf32>
    "tpu.trace_stop"() : () -> ()
    %197 = vector.extract_strided_slice %166 {offsets = [0, 0, 16], sizes = [2, 8, 8], strides = [1, 1, 1]} : vector<2x8x32xf32> to vector<2x8x8xf32>
    %198 = vector.extract_strided_slice %167 {offsets = [0, 0, 16], sizes = [2, 8, 8], strides = [1, 1, 1]} : vector<2x8x32xf32> to vector<2x8x8xf32>
    "tpu.trace_start"() <{level = 10 : i32, message = "bqd,bkd->bqk"}> : () -> ()
    %cst_56 = arith.constant dense<0.000000e+00> : vector<2x8x8xf32>
    %199 = tpu.matmul %197, %198, %cst_56 {dimension_numbers = #tpu.dot_dimension_numbers<[2], [2], [1], [1], [0, 0, 0, 1, 1, 1], [0], [0]>} : vector<2x8x8xf32>, vector<2x8x8xf32>, vector<2x8x8xf32> -> vector<2x8x8xf32>
    "tpu.trace_stop"() : () -> ()
    %cst_57 = arith.constant dense<0xFF800000> : vector<2x8xf32>
    %200 = vector.multi_reduction <maximumf>, %199, %cst_57 [2] : vector<2x8x8xf32> to vector<2x8xf32>
    %201 = vector.shape_cast %200 : vector<2x8xf32> to vector<2x8x1xf32>
    %202 = vector.broadcast %201 : vector<2x8x1xf32> to vector<2x8x8xf32>
    %203 = arith.subf %199, %202 : vector<2x8x8xf32>
    %204 = math.exp %203 : vector<2x8x8xf32>
    %cst_58 = arith.constant dense<0.000000e+00> : vector<2x8xf32>
    %205 = vector.multi_reduction <add>, %204, %cst_58 [2] : vector<2x8x8xf32> to vector<2x8xf32>
    %206 = vector.shape_cast %205 : vector<2x8xf32> to vector<2x8x1xf32>
    %207 = vector.broadcast %206 : vector<2x8x1xf32> to vector<2x8x8xf32>
    %208 = arith.divf %204, %207 : vector<2x8x8xf32>
    %209 = vector.extract_strided_slice %168 {offsets = [0, 0, 16], sizes = [2, 8, 8], strides = [1, 1, 1]} : vector<2x8x32xf32> to vector<2x8x8xf32>
    "tpu.trace_start"() <{level = 10 : i32, message = "bqk,bkd->bqd"}> : () -> ()
    %cst_59 = arith.constant dense<0.000000e+00> : vector<2x8x8xf32>
    %210 = tpu.matmul %208, %209, %cst_59 {dimension_numbers = #tpu.dot_dimension_numbers<[2], [1], [1], [2], [0, 0, 0, 1, 1, 2], [0], [0]>} : vector<2x8x8xf32>, vector<2x8x8xf32>, vector<2x8x8xf32> -> vector<2x8x8xf32>
    "tpu.trace_stop"() : () -> ()
    %211 = vector.extract_strided_slice %166 {offsets = [0, 0, 24], sizes = [2, 8, 8], strides = [1, 1, 1]} : vector<2x8x32xf32> to vector<2x8x8xf32>
    %212 = vector.extract_strided_slice %167 {offsets = [0, 0, 24], sizes = [2, 8, 8], strides = [1, 1, 1]} : vector<2x8x32xf32> to vector<2x8x8xf32>
    "tpu.trace_start"() <{level = 10 : i32, message = "bqd,bkd->bqk"}> : () -> ()
    %cst_60 = arith.constant dense<0.000000e+00> : vector<2x8x8xf32>
    %213 = tpu.matmul %211, %212, %cst_60 {dimension_numbers = #tpu.dot_dimension_numbers<[2], [2], [1], [1], [0, 0, 0, 1, 1, 1], [0], [0]>} : vector<2x8x8xf32>, vector<2x8x8xf32>, vector<2x8x8xf32> -> vector<2x8x8xf32>
    "tpu.trace_stop"() : () -> ()
    %cst_61 = arith.constant dense<0xFF800000> : vector<2x8xf32>
    %214 = vector.multi_reduction <maximumf>, %213, %cst_61 [2] : vector<2x8x8xf32> to vector<2x8xf32>
    %215 = vector.shape_cast %214 : vector<2x8xf32> to vector<2x8x1xf32>
    %216 = vector.broadcast %215 : vector<2x8x1xf32> to vector<2x8x8xf32>
    %217 = arith.subf %213, %216 : vector<2x8x8xf32>
    %218 = math.exp %217 : vector<2x8x8xf32>
    %cst_62 = arith.constant dense<0.000000e+00> : vector<2x8xf32>
    %219 = vector.multi_reduction <add>, %218, %cst_62 [2] : vector<2x8x8xf32> to vector<2x8xf32>
    %220 = vector.shape_cast %219 : vector<2x8xf32> to vector<2x8x1xf32>
    %221 = vector.broadcast %220 : vector<2x8x1xf32> to vector<2x8x8xf32>
    %222 = arith.divf %218, %221 : vector<2x8x8xf32>
    %223 = vector.extract_strided_slice %168 {offsets = [0, 0, 24], sizes = [2, 8, 8], strides = [1, 1, 1]} : vector<2x8x32xf32> to vector<2x8x8xf32>
    "tpu.trace_start"() <{level = 10 : i32, message = "bqk,bkd->bqd"}> : () -> ()
    %cst_63 = arith.constant dense<0.000000e+00> : vector<2x8x8xf32>
    %224 = tpu.matmul %222, %223, %cst_63 {dimension_numbers = #tpu.dot_dimension_numbers<[2], [1], [1], [2], [0, 0, 0, 1, 1, 2], [0], [0]>} : vector<2x8x8xf32>, vector<2x8x8xf32>, vector<2x8x8xf32> -> vector<2x8x8xf32>
    "tpu.trace_stop"() : () -> ()
    %225 = tpu.concatenate %182, %196, %210, %224 in 2 : vector<2x8x8xf32>, vector<2x8x8xf32>, vector<2x8x8xf32>, vector<2x8x8xf32> -> vector<2x8x32xf32>
    %226 = vector.shape_cast %225 : vector<2x8x32xf32> to vector<16x32xf32>
    %cst_64 = arith.constant dense<0.000000e+00> : vector<16x32xf32>
    %227 = tpu.matmul %226, %146, %cst_64 {dimension_numbers = #tpu.dot_dimension_numbers<[1], [0], [0], [1], [0, 0, 1, 1], [], []>} : vector<16x32xf32>, vector<32x32xf32>, vector<16x32xf32> -> vector<16x32xf32>
    %228 = vector.broadcast %153 : vector<1x32xf32> to vector<16x32xf32>
    %229 = arith.addf %227, %228 : vector<16x32xf32>
    %230 = arith.addf %143, %229 : vector<16x32xf32>
    %cst_65 = arith.constant dense<0.000000e+00> : vector<16xf32>
    %231 = vector.multi_reduction <add>, %230, %cst_65 [1] : vector<16x32xf32> to vector<16xf32>
    %232 = vector.shape_cast %231 : vector<16xf32> to vector<16x1xf32>
    %cst_66 = arith.constant 3.200000e+01 : f32
    %233 = vector.broadcast %cst_66 : f32 to vector<16x1xf32>
    %234 = arith.divf %232, %233 : vector<16x1xf32>
    %235 = vector.broadcast %234 : vector<16x1xf32> to vector<16x32xf32>
    %236 = arith.subf %230, %235 : vector<16x32xf32>
    %237 = arith.mulf %236, %236 : vector<16x32xf32>
    %cst_67 = arith.constant dense<0.000000e+00> : vector<16xf32>
    %238 = vector.multi_reduction <add>, %237, %cst_67 [1] : vector<16x32xf32> to vector<16xf32>
    %239 = vector.shape_cast %238 : vector<16xf32> to vector<16x1xf32>
    %cst_68 = arith.constant 3.200000e+01 : f32
    %240 = vector.broadcast %cst_68 : f32 to vector<16x1xf32>
    %241 = arith.divf %239, %240 : vector<16x1xf32>
    %cst_69 = arith.constant 9.99999974E-6 : f32
    %242 = vector.broadcast %cst_69 : f32 to vector<16x1xf32>
    %243 = arith.addf %241, %242 : vector<16x1xf32>
    %244 = math.rsqrt %243 : vector<16x1xf32>
    %245 = vector.broadcast %244 : vector<16x1xf32> to vector<16x32xf32>
    %246 = arith.mulf %236, %245 : vector<16x32xf32>
    %247 = vector.broadcast %156 : vector<1x32xf32> to vector<16x32xf32>
    %248 = arith.mulf %246, %247 : vector<16x32xf32>
    %249 = vector.broadcast %157 : vector<1x32xf32> to vector<16x32xf32>
    %250 = arith.addf %248, %249 : vector<16x32xf32>
    %cst_70 = arith.constant dense<0.000000e+00> : vector<16x64xf32>
    %251 = tpu.matmul %250, %148, %cst_70 {dimension_numbers = #tpu.dot_dimension_numbers<[1], [0], [0], [1], [0, 0, 1, 1], [], []>} : vector<16x32xf32>, vector<32x64xf32>, vector<16x64xf32> -> vector<16x64xf32>
    %252 = vector.broadcast %154 : vector<1x64xf32> to vector<16x64xf32>
    %253 = arith.addf %251, %252 : vector<16x64xf32>
    %cst_71 = arith.constant 0.000000e+00 : f32
    %254 = vector.broadcast %cst_71 : f32 to vector<16x64xf32>
    %255 = arith.maximumf %253, %254 : vector<16x64xf32>
    %cst_72 = arith.constant dense<0.000000e+00> : vector<16x32xf32>
    %256 = tpu.matmul %255, %150, %cst_72 {dimension_numbers = #tpu.dot_dimension_numbers<[1], [0], [0], [1], [0, 0, 1, 1], [], []>} : vector<16x64xf32>, vector<64x32xf32>, vector<16x32xf32> -> vector<16x32xf32>
    %257 = vector.broadcast %155 : vector<1x32xf32> to vector<16x32xf32>
    %258 = arith.addf %256, %257 : vector<16x32xf32>
    %259 = arith.addf %250, %258 : vector<16x32xf32>
    %cst_73 = arith.constant dense<0.000000e+00> : vector<16xf32>
    %260 = vector.multi_reduction <add>, %259, %cst_73 [1] : vector<16x32xf32> to vector<16xf32>
    %261 = vector.shape_cast %260 : vector<16xf32> to vector<16x1xf32>
    %cst_74 = arith.constant 3.200000e+01 : f32
    %262 = vector.broadcast %cst_74 : f32 to vector<16x1xf32>
    %263 = arith.divf %261, %262 : vector<16x1xf32>
    %264 = vector.broadcast %263 : vector<16x1xf32> to vector<16x32xf32>
    %265 = arith.subf %259, %264 : vector<16x32xf32>
    %266 = arith.mulf %265, %265 : vector<16x32xf32>
    %cst_75 = arith.constant dense<0.000000e+00> : vector<16xf32>
    %267 = vector.multi_reduction <add>, %266, %cst_75 [1] : vector<16x32xf32> to vector<16xf32>
    %268 = vector.shape_cast %267 : vector<16xf32> to vector<16x1xf32>
    %cst_76 = arith.constant 3.200000e+01 : f32
    %269 = vector.broadcast %cst_76 : f32 to vector<16x1xf32>
    %270 = arith.divf %268, %269 : vector<16x1xf32>
    %cst_77 = arith.constant 9.99999974E-6 : f32
    %271 = vector.broadcast %cst_77 : f32 to vector<16x1xf32>
    %272 = arith.addf %270, %271 : vector<16x1xf32>
    %273 = math.rsqrt %272 : vector<16x1xf32>
    %274 = vector.broadcast %273 : vector<16x1xf32> to vector<16x32xf32>
    %275 = arith.mulf %265, %274 : vector<16x32xf32>
    %276 = vector.broadcast %158 : vector<1x32xf32> to vector<16x32xf32>
    %277 = arith.mulf %275, %276 : vector<16x32xf32>
    %278 = vector.broadcast %159 : vector<1x32xf32> to vector<16x32xf32>
    %279 = arith.addf %277, %278 : vector<16x32xf32>
    %280 = vector.shape_cast %279 : vector<16x32xf32> to vector<2x8x32xf32>
    %cst_78 = arith.constant dense<0.000000e+00> : vector<2x32xf32>
    %281 = vector.multi_reduction <add>, %280, %cst_78 [1] : vector<2x8x32xf32> to vector<2x32xf32>
    %cst_79 = arith.constant 8.000000e+00 : f32
    %282 = vector.broadcast %cst_79 : f32 to vector<2x32xf32>
    %283 = arith.divf %281, %282 : vector<2x32xf32>
    %c336 = arith.constant 336 : index
    %c0_80 = arith.constant 0 : index
    %284 = vector.load %arg2[%c336, %c0_80] : memref<338x96xf32, #tpu.memory_space<vmem>>, vector<1x96xf32>
    %285 = vector.extract_strided_slice %284 {offsets = [0, 0], sizes = [1, 32], strides = [1, 1]} : vector<1x96xf32> to vector<1x32xf32>
    %c337 = arith.constant 337 : index
    %c0_81 = arith.constant 0 : index
    %286 = vector.load %arg2[%c337, %c0_81] : memref<338x96xf32, #tpu.memory_space<vmem>>, vector<1x96xf32>
    %287 = vector.extract_strided_slice %286 {offsets = [0, 0], sizes = [1, 1], strides = [1, 1]} : vector<1x96xf32> to vector<1x1xf32>
    %288 = vector.broadcast %285 : vector<1x32xf32> to vector<2x32xf32>
    %289 = arith.mulf %283, %288 : vector<2x32xf32>
    %cst_82 = arith.constant dense<0.000000e+00> : vector<2xf32>
    %290 = vector.multi_reduction <add>, %289, %cst_82 [1] : vector<2x32xf32> to vector<2xf32>
    %291 = vector.shape_cast %290 : vector<2xf32> to vector<2x1xf32>
    %292 = vector.broadcast %287 : vector<1x1xf32> to vector<2x1xf32>
    %293 = arith.addf %291, %292 : vector<2x1xf32>
    %cst_83 = arith.constant 0.000000e+00 : f32
    %294 = vector.broadcast %cst_83 : f32 to vector<2x1xf32>
    %295 = arith.subf %294, %293 : vector<2x1xf32>
    %296 = math.exp %295 : vector<2x1xf32>
    %cst_84 = arith.constant 1.000000e+00 : f32
    %297 = vector.broadcast %cst_84 : f32 to vector<2x1xf32>
    %298 = arith.addf %297, %296 : vector<2x1xf32>
    %cst_85 = arith.constant 1.000000e+00 : f32
    %299 = vector.broadcast %cst_85 : f32 to vector<2x1xf32>
    %300 = arith.divf %299, %298 : vector<2x1xf32>
    %c0_86 = arith.constant 0 : index
    %c0_87 = arith.constant 0 : index
    %301 = vector.load %arg3[%c0_86, %c0_87] : memref<2x1xf32, #tpu.memory_space<vmem>>, vector<2x1xf32>
    tpu.vector_store %arg3[%c0_86, %c0_87], %300 {strides = array<i32>} : memref<2x1xf32, #tpu.memory_space<vmem>>, vector<2x1xf32>,
    return
  }
}

</mosaic_0001>

<llo_original>
// kernel: sentiment_transformer.1
$region0: #{sentiment_transformer.1}
  #allocation0 [shape = 'u32[]', space=smem, size = 0x4, offset = 0x4, fixed_abs, tag = 'smem constant byte address 0x4 - core index']
  #allocation1 [shape = 'u32[144,128]{1,0:T(1,128)}', space=vmem, size = 0x12000, scoped, tag = 'internal scratch']
  %s0 = inlined_call_operand.vmem [shape: s32[16,1], index: 0, kind: input, shape index: {}]
  %s1 = inlined_call_operand.vmem [shape: f32[100,32], index: 1, kind: input, shape index: {}]
  %s2 = inlined_call_operand.vmem [shape: f32[338,96], index: 2, kind: input, shape index: {}]
  %s3 = inlined_call_operand.vmem [shape: f32[2,1], index: 3, kind: output, shape index: {}]
  %s4 = sld [smem:[#allocation0]]
  $region22: #{sentiment_transformer.1} parent=0
    _
  %s6 = ssub.s32 1, %s4
  %s7 = scalar_select 0, %s6, %s4
  // Predicated region
  $region2: #{sentiment_transformer.1} parent=0 // pred_check
    _
  $region3: #{sentiment_transformer.1} parent=0 // pred_check_branch
    %9 = sbr.rel (0) target = $region5
  $region4: #{sentiment_transformer.1} parent=0 // pred_region
    _
  $region5: #{sentiment_transformer.1} parent=0 // pred_fallthru
    _
  // Predicated region
  $region6: #{sentiment_transformer.1} parent=0 // pred_check
    _
  $region7: #{sentiment_transformer.1} parent=0 // pred_check_branch
    %11 = sbr.rel (0) target = $region9
  $region8: #{sentiment_transformer.1} parent=0 // pred_region
    _
  $region9: #{sentiment_transformer.1} parent=0 // pred_fallthru
    _
  // Predicated region
  $region10: #{sentiment_transformer.1} parent=0 // pred_check
    _
  $region11: #{sentiment_transformer.1} parent=0 // pred_check_branch
    %13 = sbr.rel (0) target = $region13
  $region12: #{sentiment_transformer.1} parent=0 // pred_region
    _
  $region13: #{sentiment_transformer.1} parent=0 // pred_fallthru
    _
  %v14 = vld [vmem:[%s0] sm:$0xff]
  %v15 = vld [vmem:[%s0 + $0x8] sm:$0xff]
  %v16 = vlaneseq
  %v17 = vand.u32 %v16, 127
  %18 = vset.pattern.permute.xlu0 0
  %19 = vperm.xlu0 %18, %v14
  %v20 = vpop.permute.xlu0 %19
  %21 = vset.pattern.permute.xlu0 0
  %22 = vperm.xlu0 %21, %v15
  %v23 = vpop.permute.xlu0 %22
  %vm24 = vcmp.eq.s32.totalorder %v20, %v17
  %vm25 = vcmp.eq.s32.totalorder %v23, %v17
  %v26 = vsel %vm24, 1, 0
  %v27 = vsel %vm25, 1, 0
  %v28 = vcvt.s32.f32 %v26
  %v29 = vcvt.s32.f32 %v27
  %v30 = vld [vmem:[%s1] sm:$0xff]
  %v31 = vld [vmem:[%s1 + $0x8] sm:$0xff]
  %v32 = vld [vmem:[%s1 + $0x10] sm:$0xff]
  %v33 = vld [vmem:[%s1 + $0x18] sm:$0xff]
  %v34 = vld [vmem:[%s1 + $0x20] sm:$0xff]
  %v35 = vld [vmem:[%s1 + $0x28] sm:$0xff]
  %v36 = vld [vmem:[%s1 + $0x30] sm:$0xff]
  %v37 = vld [vmem:[%s1 + $0x38] sm:$0xff]
  %v38 = vld [vmem:[%s1 + $0x40] sm:$0xff]
  %v39 = vld [vmem:[%s1 + $0x48] sm:$0xff]
  %v40 = vld [vmem:[%s1 + $0x50] sm:$0xff]
  %v41 = vld [vmem:[%s1 + $0x58] sm:$0xff]
  %v42 = vld [vmem:[%s1 + $0x60] sm:$0xf]
  %vm43 = vcmask 818176
  %v45 = vsel %vm43, %v28, 0
  %v48 = vsel %vm43, %v29, 0
  %vm50 = vcmask 1043456
  %v52 = vsel %vm50, %v42, 0
  %54 = vmatprep.subr.mxu0 0.0
  %55 = vmatpush1.msra.mxu0 0.0
  %56 = vmatprep.subr.mxu0 0.0
  %57 = vmatpush1.msra.mxu0 0.0
  %58 = vmatprep.subr.mxu0 0.0
  %59 = vmatpush1.msra.mxu0 0.0
  %60 = vmatprep.subr.mxu0 0.0
  %61 = vmatpush1.msra.mxu0 %v52
  %62 = vmatprep.subr.mxu0 0.0
  %63 = vmatpush1.msra.mxu0 %v41
  %64 = vmatprep.subr.mxu0 0.0
  %65 = vmatpush1.msra.mxu0 %v40
  %66 = vmatprep.subr.mxu0 0.0
  %67 = vmatpush1.msra.mxu0 %v39
  %68 = vmatprep.subr.mxu0 0.0
  %69 = vmatpush1.msra.mxu0 %v38
  %70 = vmatprep.subr.mxu0 0.0
  %71 = vmatpush1.msra.mxu0 %v37
  %72 = vmatprep.subr.mxu0 0.0
  %73 = vmatpush1.msra.mxu0 %v36
  %74 = vmatprep.subr.mxu0 0.0
  %75 = vmatpush1.msra.mxu0 %v35
  %76 = vmatprep.subr.mxu0 0.0
  %77 = vmatpush1.msra.mxu0 %v34
  %78 = vmatprep.subr.mxu0 0.0
  %79 = vmatpush1.msra.mxu0 %v33
  %80 = vmatprep.subr.mxu0 0.0
  %81 = vmatpush1.msra.mxu0 %v32
  %82 = vmatprep.subr.mxu0 0.0
  %83 = vmatpush1.msra.mxu0 %v31
  %84 = vmatprep.subr.mxu0 0.0
  %85 = vmatpush1.msra.mxu0 %v30
  %86 = vmatprep.subr.mxu0 0.0
  %87 = vmatpush2.msra.mxu0 0.0
  %88 = vmatprep.subr.mxu0 0.0
  %89 = vmatpush2.msra.mxu0 0.0
  %90 = vmatprep.subr.mxu0 0.0
  %91 = vmatpush2.msra.mxu0 0.0
  %92 = vmatprep.subr.mxu0 0.0
  %93 = vmatpush2.msra.mxu0 0.0
  %94 = vmatprep.subr.mxu0 0.0
  %95 = vmatpush2.msra.mxu0 0.0
  %96 = vmatprep.subr.mxu0 0.0
  %97 = vmatpush2.msra.mxu0 0.0
  %98 = vmatprep.subr.mxu0 0.0
  %99 = vmatpush2.msra.mxu0 0.0
  %100 = vmatprep.subr.mxu0 0.0
  %101 = vmatpush2.msra.mxu0 0.0
  %102 = vmatprep.subr.mxu0 0.0
  %103 = vmatpush2.msra.mxu0 0.0
  %104 = vmatprep.subr.mxu0 0.0
  %105 = vmatpush2.msra.mxu0 0.0
  %106 = vmatprep.subr.mxu0 0.0
  %107 = vmatpush2.msra.mxu0 0.0
  %108 = vmatprep.subr.mxu0 0.0
  %109 = vmatpush2.msra.mxu0 0.0
  %110 = vmatprep.subr.mxu0 0.0
  %111 = vmatpush2.msra.mxu0 0.0
  %112 = vmatprep.subr.mxu0 0.0
  %113 = vmatpush2.msra.mxu0 0.0
  %114 = vmatprep.subr.mxu0 0.0
  %115 = vmatpush2.msra.mxu0 0.0
  %116 = vmatprep.subr.mxu0 0.0
  %117 = vmatpush2.msra.mxu0 0.0
  %118 = vmatprep.mubr.f32.mxu0 0.0
  %119 = vmatmul.mubr.f32.gmra.mxu0 %v45
  %v120 = vpop.f32.mrf.mxu0
  %v121 = vadd.f32 0.0, %v120
  %v122 = vpop.f32.mrf.mxu0
  %123 = vmatprep.mubr.f32.mxu0 0.0
  %124 = vmatmul.mubr.f32.gmra.mxu0 %v48
  %v125 = vpop.f32.mrf.mxu0
  %v126 = vadd.f32 0.0, %v125
  %v127 = vpop.f32.mrf.mxu0
  %128 = vdwg.mxu0
  %v129 = vld [vmem:[%s2] sm:$0xff]
  %v130 = vld [vmem:[%s2 + $0x8] sm:$0xff]
  %v131 = vld [vmem:[%s2 + $0x10] sm:$0xff]
  %v132 = vld [vmem:[%s2 + $0x18] sm:$0xff]
  %v133 = vld [vmem:[%s2 + $0x20] sm:$0xff]
  %v134 = vld [vmem:[%s2 + $0x28] sm:$0xff]
  %v135 = vld [vmem:[%s2 + $0x30] sm:$0xff]
  %v136 = vld [vmem:[%s2 + $0x38] sm:$0xff]
  %v137 = vld [vmem:[%s2 + $0x40] sm:$0xff]
  %v138 = vld [vmem:[%s2 + $0x48] sm:$0xff]
  %v139 = vld [vmem:[%s2 + $0x50] sm:$0xff]
  %v140 = vld [vmem:[%s2 + $0x58] sm:$0xff]
  %v141 = vld [vmem:[%s2 + $0x60] sm:$0xff]
  %v142 = vld [vmem:[%s2 + $0x68] sm:$0xff]
  %v143 = vld [vmem:[%s2 + $0x70] sm:$0xff]
  %v144 = vld [vmem:[%s2 + $0x78] sm:$0xff]
  %v145 = vld [vmem:[%s2 + $0x80] sm:$0xff]
  %v146 = vld [vmem:[%s2 + $0x88] sm:$0xff]
  %v147 = vld [vmem:[%s2 + $0x90] sm:$0xff]
  %v148 = vld [vmem:[%s2 + $0x98] sm:$0xff]
  %v149 = vld [vmem:[%s2 + $0xa0] sm:$0xff]
  %v150 = vlaneseq
  %v151 = vshrl.u32 %v150, 7
  %v152 = vsub.s32 0, %v151
  %v153 = vrot.slane %v149, %v152
  %vm154 = vcmask 261120
  %v156 = vsel %vm154, %v121, 0
  %v159 = vsel %vm154, %v126, 0
  %161 = vmatprep.subr.mxu0 0.0
  %162 = vmatpush1.msra.mxu0 0.0
  %163 = vmatprep.subr.mxu0 0.0
  %164 = vmatpush1.msra.mxu0 0.0
  %165 = vmatprep.subr.mxu0 0.0
  %166 = vmatpush1.msra.mxu0 0.0
  %167 = vmatprep.subr.mxu0 0.0
  %168 = vmatpush1.msra.mxu0 0.0
  %169 = vmatprep.subr.mxu0 0.0
  %170 = vmatpush1.msra.mxu0 0.0
  %171 = vmatprep.subr.mxu0 0.0
  %172 = vmatpush1.msra.mxu0 0.0
  %173 = vmatprep.subr.mxu0 0.0
  %174 = vmatpush1.msra.mxu0 0.0
  %175 = vmatprep.subr.mxu0 0.0
  %176 = vmatpush1.msra.mxu0 0.0
  %177 = vmatprep.subr.mxu0 0.0
  %178 = vmatpush1.msra.mxu0 0.0
  %179 = vmatprep.subr.mxu0 0.0
  %180 = vmatpush1.msra.mxu0 0.0
  %181 = vmatprep.subr.mxu0 0.0
  %182 = vmatpush1.msra.mxu0 0.0
  %183 = vmatprep.subr.mxu0 0.0
  %184 = vmatpush1.msra.mxu0 0.0
  %185 = vmatprep.subr.mxu0 0.0
  %186 = vmatpush1.msra.mxu0 %v132
  %187 = vmatprep.subr.mxu0 0.0
  %188 = vmatpush1.msra.mxu0 %v131
  %189 = vmatprep.subr.mxu0 0.0
  %190 = vmatpush1.msra.mxu0 %v130
  %191 = vmatprep.subr.mxu0 0.0
  %192 = vmatpush1.msra.mxu0 %v129
  %193 = vmatprep.subr.mxu0 0.0
  %194 = vmatpush2.msra.mxu0 0.0
  %195 = vmatprep.subr.mxu0 0.0
  %196 = vmatpush2.msra.mxu0 0.0
  %197 = vmatprep.subr.mxu0 0.0
  %198 = vmatpush2.msra.mxu0 0.0
  %199 = vmatprep.subr.mxu0 0.0
  %200 = vmatpush2.msra.mxu0 0.0
  %201 = vmatprep.subr.mxu0 0.0
  %202 = vmatpush2.msra.mxu0 0.0
  %203 = vmatprep.subr.mxu0 0.0
  %204 = vmatpush2.msra.mxu0 0.0
  %205 = vmatprep.subr.mxu0 0.0
  %206 = vmatpush2.msra.mxu0 0.0
  %207 = vmatprep.subr.mxu0 0.0
  %208 = vmatpush2.msra.mxu0 0.0
  %209 = vmatprep.subr.mxu0 0.0
  %210 = vmatpush2.msra.mxu0 0.0
  %211 = vmatprep.subr.mxu0 0.0
  %212 = vmatpush2.msra.mxu0 0.0
  %213 = vmatprep.subr.mxu0 0.0
  %214 = vmatpush2.msra.mxu0 0.0
  %215 = vmatprep.subr.mxu0 0.0
  %216 = vmatpush2.msra.mxu0 0.0
  %217 = vmatprep.subr.mxu0 0.0
  %218 = vmatpush2.msra.mxu0 0.0
  %219 = vmatprep.subr.mxu0 0.0
  %220 = vmatpush2.msra.mxu0 0.0
  %221 = vmatprep.subr.mxu0 0.0
  %222 = vmatpush2.msra.mxu0 0.0
  %223 = vmatprep.subr.mxu0 0.0
  %224 = vmatpush2.msra.mxu0 0.0
  %225 = vmatprep.mubr.f32.mxu0 0.0
  %226 = vmatmul.mubr.f32.gmra.mxu0 %v156
  %v227 = vpop.f32.mrf.mxu0
  %v228 = vadd.f32 %v153, %v227
  %v229 = vpop.f32.mrf.mxu0
  %230 = vmatprep.mubr.f32.mxu0 0.0
  %231 = vmatmul.mubr.f32.gmra.mxu0 %v159
  %v232 = vpop.f32.mrf.mxu0
  %v233 = vadd.f32 %v153, %v232
  %v234 = vpop.f32.mrf.mxu0
  %235 = vdwg.mxu0
  %v236 = vmul.f32 %v228, 0.35355338
  %v237 = vmul.f32 %v233, 0.35355338
  %239 = vrot.lane.b32.xlu0 %v228, 96
  %v240 = vpop.permute.xlu0 %239
  %vm241 = vcmask 64512
  %v243 = vsel %vm241, %v236, 0
  %v245 = vsel %vm241, %v240, 0
  %247 = vmatprep.subr.mxu0 0.0
  %248 = vmatpush1.xpose.msra.mxu0 0.0
  %249 = vmatprep.subr.mxu0 0.0
  %250 = vmatpush1.xpose.msra.mxu0 0.0
  %251 = vmatprep.subr.mxu0 0.0
  %252 = vmatpush1.xpose.msra.mxu0 0.0
  %253 = vmatprep.subr.mxu0 0.0
  %254 = vmatpush1.xpose.msra.mxu0 0.0
  %255 = vmatprep.subr.mxu0 0.0
  %256 = vmatpush1.xpose.msra.mxu0 0.0
  %257 = vmatprep.subr.mxu0 0.0
  %258 = vmatpush1.xpose.msra.mxu0 0.0
  %259 = vmatprep.subr.mxu0 0.0
  %260 = vmatpush1.xpose.msra.mxu0 0.0
  %261 = vmatprep.subr.mxu0 0.0
  %262 = vmatpush1.xpose.msra.mxu0 0.0
  %263 = vmatprep.subr.mxu0 0.0
  %264 = vmatpush1.xpose.msra.mxu0 0.0
  %265 = vmatprep.subr.mxu0 0.0
  %266 = vmatpush1.xpose.msra.mxu0 0.0
  %267 = vmatprep.subr.mxu0 0.0
  %268 = vmatpush1.xpose.msra.mxu0 0.0
  %269 = vmatprep.subr.mxu0 0.0
  %270 = vmatpush1.xpose.msra.mxu0 0.0
  %271 = vmatprep.subr.mxu0 0.0
  %272 = vmatpush1.xpose.msra.mxu0 0.0
  %273 = vmatprep.subr.mxu0 0.0
  %274 = vmatpush1.xpose.msra.mxu0 0.0
  %275 = vmatprep.subr.mxu0 0.0
  %276 = vmatpush1.xpose.msra.mxu0 0.0
  %277 = vmatprep.subr.mxu0 0.0
  %278 = vmatpush1.xpose.msra.mxu0 %v245
  %279 = vmatprep.subr.mxu0 0.0
  %280 = vmatpush2.xpose.msra.mxu0 0.0
  %281 = vmatprep.subr.mxu0 0.0
  %282 = vmatpush2.xpose.msra.mxu0 0.0
  %283 = vmatprep.subr.mxu0 0.0
  %284 = vmatpush2.xpose.msra.mxu0 0.0
  %285 = vmatprep.subr.mxu0 0.0
  %286 = vmatpush2.xpose.msra.mxu0 0.0
  %287 = vmatprep.subr.mxu0 0.0
  %288 = vmatpush2.xpose.msra.mxu0 0.0
  %289 = vmatprep.subr.mxu0 0.0
  %290 = vmatpush2.xpose.msra.mxu0 0.0
  %291 = vmatprep.subr.mxu0 0.0
  %292 = vmatpush2.xpose.msra.mxu0 0.0
  %293 = vmatprep.subr.mxu0 0.0
  %294 = vmatpush2.xpose.msra.mxu0 0.0
  %295 = vmatprep.subr.mxu0 0.0
  %296 = vmatpush2.xpose.msra.mxu0 0.0
  %297 = vmatprep.subr.mxu0 0.0
  %298 = vmatpush2.xpose.msra.mxu0 0.0
  %299 = vmatprep.subr.mxu0 0.0
  %300 = vmatpush2.xpose.msra.mxu0 0.0
  %301 = vmatprep.subr.mxu0 0.0
  %302 = vmatpush2.xpose.msra.mxu0 0.0
  %303 = vmatprep.subr.mxu0 0.0
  %304 = vmatpush2.xpose.msra.mxu0 0.0
  %305 = vmatprep.subr.mxu0 0.0
  %306 = vmatpush2.xpose.msra.mxu0 0.0
  %307 = vmatprep.subr.mxu0 0.0
  %308 = vmatpush2.xpose.msra.mxu0 0.0
  %309 = vmatprep.subr.mxu0 0.0
  %310 = vmatpush2.xpose.msra.mxu0 0.0
  %311 = vmatprep.mubr.f32.mxu0 0.0
  %312 = vmatmul.mubr.f32.gmra.mxu0 %v243
  %v313 = vpop.f32.mrf.mxu0
  %v314 = vadd.f32 0.0, %v313
  %v315 = vpop.f32.mrf.mxu0
  %316 = vdwg.mxu0
  %318 = vrot.lane.b32.xlu0 %v233, 96
  %v319 = vpop.permute.xlu0 %318
  %v321 = vsel %vm241, %v237, 0
  %v323 = vsel %vm241, %v319, 0
  %325 = vmatprep.subr.mxu0 0.0
  %326 = vmatpush1.xpose.msra.mxu0 0.0
  %327 = vmatprep.subr.mxu0 0.0
  %328 = vmatpush1.xpose.msra.mxu0 0.0
  %329 = vmatprep.subr.mxu0 0.0
  %330 = vmatpush1.xpose.msra.mxu0 0.0
  %331 = vmatprep.subr.mxu0 0.0
  %332 = vmatpush1.xpose.msra.mxu0 0.0
  %333 = vmatprep.subr.mxu0 0.0
  %334 = vmatpush1.xpose.msra.mxu0 0.0
  %335 = vmatprep.subr.mxu0 0.0
  %336 = vmatpush1.xpose.msra.mxu0 0.0
  %337 = vmatprep.subr.mxu0 0.0
  %338 = vmatpush1.xpose.msra.mxu0 0.0
  %339 = vmatprep.subr.mxu0 0.0
  %340 = vmatpush1.xpose.msra.mxu0 0.0
  %341 = vmatprep.subr.mxu0 0.0
  %342 = vmatpush1.xpose.msra.mxu0 0.0
  %343 = vmatprep.subr.mxu0 0.0
  %344 = vmatpush1.xpose.msra.mxu0 0.0
  %345 = vmatprep.subr.mxu0 0.0
  %346 = vmatpush1.xpose.msra.mxu0 0.0
  %347 = vmatprep.subr.mxu0 0.0
  %348 = vmatpush1.xpose.msra.mxu0 0.0
  %349 = vmatprep.subr.mxu0 0.0
  %350 = vmatpush1.xpose.msra.mxu0 0.0
  %351 = vmatprep.subr.mxu0 0.0
  %352 = vmatpush1.xpose.msra.mxu0 0.0
  %353 = vmatprep.subr.mxu0 0.0
  %354 = vmatpush1.xpose.msra.mxu0 0.0
  %355 = vmatprep.subr.mxu0 0.0
  %356 = vmatpush1.xpose.msra.mxu0 %v323
  %357 = vmatprep.subr.mxu0 0.0
  %358 = vmatpush2.xpose.msra.mxu0 0.0
  %359 = vmatprep.subr.mxu0 0.0
  %360 = vmatpush2.xpose.msra.mxu0 0.0
  %361 = vmatprep.subr.mxu0 0.0
  %362 = vmatpush2.xpose.msra.mxu0 0.0
  %363 = vmatprep.subr.mxu0 0.0
  %364 = vmatpush2.xpose.msra.mxu0 0.0
  %365 = vmatprep.subr.mxu0 0.0
  %366 = vmatpush2.xpose.msra.mxu0 0.0
  %367 = vmatprep.subr.mxu0 0.0
  %368 = vmatpush2.xpose.msra.mxu0 0.0
  %369 = vmatprep.subr.mxu0 0.0
  %370 = vmatpush2.xpose.msra.mxu0 0.0
  %371 = vmatprep.subr.mxu0 0.0
  %372 = vmatpush2.xpose.msra.mxu0 0.0
  %373 = vmatprep.subr.mxu0 0.0
  %374 = vmatpush2.xpose.msra.mxu0 0.0
  %375 = vmatprep.subr.mxu0 0.0
  %376 = vmatpush2.xpose.msra.mxu0 0.0
  %377 = vmatprep.subr.mxu0 0.0
  %378 = vmatpush2.xpose.msra.mxu0 0.0
  %379 = vmatprep.subr.mxu0 0.0
  %380 = vmatpush2.xpose.msra.mxu0 0.0
  %381 = vmatprep.subr.mxu0 0.0
  %382 = vmatpush2.xpose.msra.mxu0 0.0
  %383 = vmatprep.subr.mxu0 0.0
  %384 = vmatpush2.xpose.msra.mxu0 0.0
  %385 = vmatprep.subr.mxu0 0.0
  %386 = vmatpush2.xpose.msra.mxu0 0.0
  %387 = vmatprep.subr.mxu0 0.0
  %388 = vmatpush2.xpose.msra.mxu0 0.0
  %389 = vmatprep.mubr.f32.mxu0 0.0
  %390 = vmatmul.mubr.f32.gmra.mxu0 %v321
  %v391 = vpop.f32.mrf.mxu0
  %v392 = vadd.f32 0.0, %v391
  %v393 = vpop.f32.mrf.mxu0
  %394 = vdwg.mxu0
  %v395 = vsel %vm241, %v314, -inf
  %396 = vmax.xlane.f32.xlu0 %v395
  %v397 = vpop.xlane.xlu0 %396
  %v398 = vsel %vm241, %v392, -inf
  %399 = vmax.xlane.f32.xlu0 %v398
  %v400 = vpop.xlane.xlu0 %399
  %v401 = vsub.f32 %v314, %v397
  %v402 = vsub.f32 %v392, %v400
  %v403 = vmul.f32 %v401, 1.442695
  %v404 = vpow.pop %v403
  %v405 = vmul.f32 %v402, 1.442695
  %v406 = vpow.pop %v405
  %v407 = vsel %vm241, %v404, 0.0
  %408 = vadd.xlane.f32.xlu0 %v407
  %v409 = vpop.xlane.xlu0 %408
  %v410 = vsel %vm241, %v406, 0.0
  %411 = vadd.xlane.f32.xlu0 %v410
  %v412 = vpop.xlane.xlu0 %411
  %v413 = vrcp.pop %v409
  %v414 = vmul.f32 %v404, %v413
  %v415 = vrcp.pop %v412
  %v416 = vmul.f32 %v406, %v415
  %417 = vrot.lane.b32.xlu0 %v228, 64
  %v418 = vpop.permute.xlu0 %417
  %v421 = vsel %vm241, %v414, 0
  %423 = vmatprep.subr.mxu0 0.0
  %424 = vmatpush1.msra.mxu0 0.0
  %425 = vmatprep.subr.mxu0 0.0
  %426 = vmatpush1.msra.mxu0 0.0
  %427 = vmatprep.subr.mxu0 0.0
  %428 = vmatpush1.msra.mxu0 0.0
  %429 = vmatprep.subr.mxu0 0.0
  %430 = vmatpush1.msra.mxu0 0.0
  %431 = vmatprep.subr.mxu0 0.0
  %432 = vmatpush1.msra.mxu0 0.0
  %433 = vmatprep.subr.mxu0 0.0
  %434 = vmatpush1.msra.mxu0 0.0
  %435 = vmatprep.subr.mxu0 0.0
  %436 = vmatpush1.msra.mxu0 0.0
  %437 = vmatprep.subr.mxu0 0.0
  %438 = vmatpush1.msra.mxu0 0.0
  %439 = vmatprep.subr.mxu0 0.0
  %440 = vmatpush1.msra.mxu0 0.0
  %441 = vmatprep.subr.mxu0 0.0
  %442 = vmatpush1.msra.mxu0 0.0
  %443 = vmatprep.subr.mxu0 0.0
  %444 = vmatpush1.msra.mxu0 0.0
  %445 = vmatprep.subr.mxu0 0.0
  %446 = vmatpush1.msra.mxu0 0.0
  %447 = vmatprep.subr.mxu0 0.0
  %448 = vmatpush1.msra.mxu0 0.0
  %449 = vmatprep.subr.mxu0 0.0
  %450 = vmatpush1.msra.mxu0 0.0
  %451 = vmatprep.subr.mxu0 0.0
  %452 = vmatpush1.msra.mxu0 0.0
  %453 = vmatprep.subr.mxu0 0.0
  %454 = vmatpush1.msra.mxu0 %v418
  %455 = vmatprep.subr.mxu0 0.0
  %456 = vmatpush2.msra.mxu0 0.0
  %457 = vmatprep.subr.mxu0 0.0
  %458 = vmatpush2.msra.mxu0 0.0
  %459 = vmatprep.subr.mxu0 0.0
  %460 = vmatpush2.msra.mxu0 0.0
  %461 = vmatprep.subr.mxu0 0.0
  %462 = vmatpush2.msra.mxu0 0.0
  %463 = vmatprep.subr.mxu0 0.0
  %464 = vmatpush2.msra.mxu0 0.0
  %465 = vmatprep.subr.mxu0 0.0
  %466 = vmatpush2.msra.mxu0 0.0
  %467 = vmatprep.subr.mxu0 0.0
  %468 = vmatpush2.msra.mxu0 0.0
  %469 = vmatprep.subr.mxu0 0.0
  %470 = vmatpush2.msra.mxu0 0.0
  %471 = vmatprep.subr.mxu0 0.0
  %472 = vmatpush2.msra.mxu0 0.0
  %473 = vmatprep.subr.mxu0 0.0
  %474 = vmatpush2.msra.mxu0 0.0
  %475 = vmatprep.subr.mxu0 0.0
  %476 = vmatpush2.msra.mxu0 0.0
  %477 = vmatprep.subr.mxu0 0.0
  %478 = vmatpush2.msra.mxu0 0.0
  %479 = vmatprep.subr.mxu0 0.0
  %480 = vmatpush2.msra.mxu0 0.0
  %481 = vmatprep.subr.mxu0 0.0
  %482 = vmatpush2.msra.mxu0 0.0
  %483 = vmatprep.subr.mxu0 0.0
  %484 = vmatpush2.msra.mxu0 0.0
  %485 = vmatprep.subr.mxu0 0.0
  %486 = vmatpush2.msra.mxu0 0.0
  %487 = vmatprep.mubr.f32.mxu0 0.0
  %488 = vmatmul.mubr.f32.gmra.mxu0 %v421
  %v489 = vpop.f32.mrf.mxu0
  %v490 = vadd.f32 0.0, %v489
  %v491 = vpop.f32.mrf.mxu0
  %492 = vdwg.mxu0
  %493 = vrot.lane.b32.xlu0 %v233, 64
  %v494 = vpop.permute.xlu0 %493
  %v497 = vsel %vm241, %v416, 0
  %499 = vmatprep.subr.mxu0 0.0
  %500 = vmatpush1.msra.mxu0 0.0
  %501 = vmatprep.subr.mxu0 0.0
  %502 = vmatpush1.msra.mxu0 0.0
  %503 = vmatprep.subr.mxu0 0.0
  %504 = vmatpush1.msra.mxu0 0.0
  %505 = vmatprep.subr.mxu0 0.0
  %506 = vmatpush1.msra.mxu0 0.0
  %507 = vmatprep.subr.mxu0 0.0
  %508 = vmatpush1.msra.mxu0 0.0
  %509 = vmatprep.subr.mxu0 0.0
  %510 = vmatpush1.msra.mxu0 0.0
  %511 = vmatprep.subr.mxu0 0.0
  %512 = vmatpush1.msra.mxu0 0.0
  %513 = vmatprep.subr.mxu0 0.0
  %514 = vmatpush1.msra.mxu0 0.0
  %515 = vmatprep.subr.mxu0 0.0
  %516 = vmatpush1.msra.mxu0 0.0
  %517 = vmatprep.subr.mxu0 0.0
  %518 = vmatpush1.msra.mxu0 0.0
  %519 = vmatprep.subr.mxu0 0.0
  %520 = vmatpush1.msra.mxu0 0.0
  %521 = vmatprep.subr.mxu0 0.0
  %522 = vmatpush1.msra.mxu0 0.0
  %523 = vmatprep.subr.mxu0 0.0
  %524 = vmatpush1.msra.mxu0 0.0
  %525 = vmatprep.subr.mxu0 0.0
  %526 = vmatpush1.msra.mxu0 0.0
  %527 = vmatprep.subr.mxu0 0.0
  %528 = vmatpush1.msra.mxu0 0.0
  %529 = vmatprep.subr.mxu0 0.0
  %530 = vmatpush1.msra.mxu0 %v494
  %531 = vmatprep.subr.mxu0 0.0
  %532 = vmatpush2.msra.mxu0 0.0
  %533 = vmatprep.subr.mxu0 0.0
  %534 = vmatpush2.msra.mxu0 0.0
  %535 = vmatprep.subr.mxu0 0.0
  %536 = vmatpush2.msra.mxu0 0.0
  %537 = vmatprep.subr.mxu0 0.0
  %538 = vmatpush2.msra.mxu0 0.0
  %539 = vmatprep.subr.mxu0 0.0
  %540 = vmatpush2.msra.mxu0 0.0
  %541 = vmatprep.subr.mxu0 0.0
  %542 = vmatpush2.msra.mxu0 0.0
  %543 = vmatprep.subr.mxu0 0.0
  %544 = vmatpush2.msra.mxu0 0.0
  %545 = vmatprep.subr.mxu0 0.0
  %546 = vmatpush2.msra.mxu0 0.0
  %547 = vmatprep.subr.mxu0 0.0
  %548 = vmatpush2.msra.mxu0 0.0
  %549 = vmatprep.subr.mxu0 0.0
  %550 = vmatpush2.msra.mxu0 0.0
  %551 = vmatprep.subr.mxu0 0.0
  %552 = vmatpush2.msra.mxu0 0.0
  %553 = vmatprep.subr.mxu0 0.0
  %554 = vmatpush2.msra.mxu0 0.0
  %555 = vmatprep.subr.mxu0 0.0
  %556 = vmatpush2.msra.mxu0 0.0
  %557 = vmatprep.subr.mxu0 0.0
  %558 = vmatpush2.msra.mxu0 0.0
  %559 = vmatprep.subr.mxu0 0.0
  %560 = vmatpush2.msra.mxu0 0.0
  %561 = vmatprep.subr.mxu0 0.0
  %562 = vmatpush2.msra.mxu0 0.0
  %563 = vmatprep.mubr.f32.mxu0 0.0
  %564 = vmatmul.mubr.f32.gmra.mxu0 %v497
  %v565 = vpop.f32.mrf.mxu0
  %v566 = vadd.f32 0.0, %v565
  %v567 = vpop.f32.mrf.mxu0
  %568 = vdwg.mxu0
  %569 = vrot.lane.b32.xlu0 %v236, 120
  %v570 = vpop.permute.xlu0 %569
  %571 = vrot.lane.b32.xlu0 %v228, 88
  %v572 = vpop.permute.xlu0 %571
  %v573 = vsel %vm241, %v570, 0
  %v575 = vsel %vm241, %v572, 0
  %577 = vmatprep.subr.mxu0 0.0
  %578 = vmatpush1.xpose.msra.mxu0 0.0
  %579 = vmatprep.subr.mxu0 0.0
  %580 = vmatpush1.xpose.msra.mxu0 0.0
  %581 = vmatprep.subr.mxu0 0.0
  %582 = vmatpush1.xpose.msra.mxu0 0.0
  %583 = vmatprep.subr.mxu0 0.0
  %584 = vmatpush1.xpose.msra.mxu0 0.0
  %585 = vmatprep.subr.mxu0 0.0
  %586 = vmatpush1.xpose.msra.mxu0 0.0
  %587 = vmatprep.subr.mxu0 0.0
  %588 = vmatpush1.xpose.msra.mxu0 0.0
  %589 = vmatprep.subr.mxu0 0.0
  %590 = vmatpush1.xpose.msra.mxu0 0.0
  %591 = vmatprep.subr.mxu0 0.0
  %592 = vmatpush1.xpose.msra.mxu0 0.0
  %593 = vmatprep.subr.mxu0 0.0
  %594 = vmatpush1.xpose.msra.mxu0 0.0
  %595 = vmatprep.subr.mxu0 0.0
  %596 = vmatpush1.xpose.msra.mxu0 0.0
  %597 = vmatprep.subr.mxu0 0.0
  %598 = vmatpush1.xpose.msra.mxu0 0.0
  %599 = vmatprep.subr.mxu0 0.0
  %600 = vmatpush1.xpose.msra.mxu0 0.0
  %601 = vmatprep.subr.mxu0 0.0
  %602 = vmatpush1.xpose.msra.mxu0 0.0
  %603 = vmatprep.subr.mxu0 0.0
  %604 = vmatpush1.xpose.msra.mxu0 0.0
  %605 = vmatprep.subr.mxu0 0.0
  %606 = vmatpush1.xpose.msra.mxu0 0.0
  %607 = vmatprep.subr.mxu0 0.0
  %608 = vmatpush1.xpose.msra.mxu0 %v575
  %609 = vmatprep.subr.mxu0 0.0
  %610 = vmatpush2.xpose.msra.mxu0 0.0
  %611 = vmatprep.subr.mxu0 0.0
  %612 = vmatpush2.xpose.msra.mxu0 0.0
  %613 = vmatprep.subr.mxu0 0.0
  %614 = vmatpush2.xpose.msra.mxu0 0.0
  %615 = vmatprep.subr.mxu0 0.0
  %616 = vmatpush2.xpose.msra.mxu0 0.0
  %617 = vmatprep.subr.mxu0 0.0
  %618 = vmatpush2.xpose.msra.mxu0 0.0
  %619 = vmatprep.subr.mxu0 0.0
  %620 = vmatpush2.xpose.msra.mxu0 0.0
  %621 = vmatprep.subr.mxu0 0.0
  %622 = vmatpush2.xpose.msra.mxu0 0.0
  %623 = vmatprep.subr.mxu0 0.0
  %624 = vmatpush2.xpose.msra.mxu0 0.0
  %625 = vmatprep.subr.mxu0 0.0
  %626 = vmatpush2.xpose.msra.mxu0 0.0
  %627 = vmatprep.subr.mxu0 0.0
  %628 = vmatpush2.xpose.msra.mxu0 0.0
  %629 = vmatprep.subr.mxu0 0.0
  %630 = vmatpush2.xpose.msra.mxu0 0.0
  %631 = vmatprep.subr.mxu0 0.0
  %632 = vmatpush2.xpose.msra.mxu0 0.0
  %633 = vmatprep.subr.mxu0 0.0
  %634 = vmatpush2.xpose.msra.mxu0 0.0
  %635 = vmatprep.subr.mxu0 0.0
  %636 = vmatpush2.xpose.msra.mxu0 0.0
  %637 = vmatprep.subr.mxu0 0.0
  %638 = vmatpush2.xpose.msra.mxu0 0.0
  %639 = vmatprep.subr.mxu0 0.0
  %640 = vmatpush2.xpose.msra.mxu0 0.0
  %641 = vmatprep.mubr.f32.mxu0 0.0
  %642 = vmatmul.mubr.f32.gmra.mxu0 %v573
  %v643 = vpop.f32.mrf.mxu0
  %v644 = vadd.f32 0.0, %v643
  %v645 = vpop.f32.mrf.mxu0
  %646 = vdwg.mxu0
  %647 = vrot.lane.b32.xlu0 %v237, 120
  %v648 = vpop.permute.xlu0 %647
  %649 = vrot.lane.b32.xlu0 %v233, 88
  %v650 = vpop.permute.xlu0 %649
  %v651 = vsel %vm241, %v648, 0
  %v653 = vsel %vm241, %v650, 0
  %655 = vmatprep.subr.mxu0 0.0
  %656 = vmatpush1.xpose.msra.mxu0 0.0
  %657 = vmatprep.subr.mxu0 0.0
  %658 = vmatpush1.xpose.msra.mxu0 0.0
  %659 = vmatprep.subr.mxu0 0.0
  %660 = vmatpush1.xpose.msra.mxu0 0.0
  %661 = vmatprep.subr.mxu0 0.0
  %662 = vmatpush1.xpose.msra.mxu0 0.0
  %663 = vmatprep.subr.mxu0 0.0
  %664 = vmatpush1.xpose.msra.mxu0 0.0
  %665 = vmatprep.subr.mxu0 0.0
  %666 = vmatpush1.xpose.msra.mxu0 0.0
  %667 = vmatprep.subr.mxu0 0.0
  %668 = vmatpush1.xpose.msra.mxu0 0.0
  %669 = vmatprep.subr.mxu0 0.0
  %670 = vmatpush1.xpose.msra.mxu0 0.0
  %671 = vmatprep.subr.mxu0 0.0
  %672 = vmatpush1.xpose.msra.mxu0 0.0
  %673 = vmatprep.subr.mxu0 0.0
  %674 = vmatpush1.xpose.msra.mxu0 0.0
  %675 = vmatprep.subr.mxu0 0.0
  %676 = vmatpush1.xpose.msra.mxu0 0.0
  %677 = vmatprep.subr.mxu0 0.0
  %678 = vmatpush1.xpose.msra.mxu0 0.0
  %679 = vmatprep.subr.mxu0 0.0
  %680 = vmatpush1.xpose.msra.mxu0 0.0
  %681 = vmatprep.subr.mxu0 0.0
  %682 = vmatpush1.xpose.msra.mxu0 0.0
  %683 = vmatprep.subr.mxu0 0.0
  %684 = vmatpush1.xpose.msra.mxu0 0.0
  %685 = vmatprep.subr.mxu0 0.0
  %686 = vmatpush1.xpose.msra.mxu0 %v653
  %687 = vmatprep.subr.mxu0 0.0
  %688 = vmatpush2.xpose.msra.mxu0 0.0
  %689 = vmatprep.subr.mxu0 0.0
  %690 = vmatpush2.xpose.msra.mxu0 0.0
  %691 = vmatprep.subr.mxu0 0.0
  %692 = vmatpush2.xpose.msra.mxu0 0.0
  %693 = vmatprep.subr.mxu0 0.0
  %694 = vmatpush2.xpose.msra.mxu0 0.0
  %695 = vmatprep.subr.mxu0 0.0
  %696 = vmatpush2.xpose.msra.mxu0 0.0
  %697 = vmatprep.subr.mxu0 0.0
  %698 = vmatpush2.xpose.msra.mxu0 0.0
  %699 = vmatprep.subr.mxu0 0.0
  %700 = vmatpush2.xpose.msra.mxu0 0.0
  %701 = vmatprep.subr.mxu0 0.0
  %702 = vmatpush2.xpose.msra.mxu0 0.0
  %703 = vmatprep.subr.mxu0 0.0
  %704 = vmatpush2.xpose.msra.mxu0 0.0
  %705 = vmatprep.subr.mxu0 0.0
  %706 = vmatpush2.xpose.msra.mxu0 0.0
  %707 = vmatprep.subr.mxu0 0.0
  %708 = vmatpush2.xpose.msra.mxu0 0.0
  %709 = vmatprep.subr.mxu0 0.0
  %710 = vmatpush2.xpose.msra.mxu0 0.0
  %711 = vmatprep.subr.mxu0 0.0
  %712 = vmatpush2.xpose.msra.mxu0 0.0
  %713 = vmatprep.subr.mxu0 0.0
  %714 = vmatpush2.xpose.msra.mxu0 0.0
  %715 = vmatprep.subr.mxu0 0.0
  %716 = vmatpush2.xpose.msra.mxu0 0.0
  %717 = vmatprep.subr.mxu0 0.0
  %718 = vmatpush2.xpose.msra.mxu0 0.0
  %719 = vmatprep.mubr.f32.mxu0 0.0
  %720 = vmatmul.mubr.f32.gmra.mxu0 %v651
  %v721 = vpop.f32.mrf.mxu0
  %v722 = vadd.f32 0.0, %v721
  %v723 = vpop.f32.mrf.mxu0
  %724 = vdwg.mxu0
  %v725 = vsel %vm241, %v644, -inf
  %726 = vmax.xlane.f32.xlu0 %v725
  %v727 = vpop.xlane.xlu0 %726
  %v728 = vsel %vm241, %v722, -inf
  %729 = vmax.xlane.f32.xlu0 %v728
  %v730 = vpop.xlane.xlu0 %729
  %v731 = vsub.f32 %v644, %v727
  %v732 = vsub.f32 %v722, %v730
  %v733 = vmul.f32 %v731, 1.442695
  %v734 = vpow.pop %v733
  %v735 = vmul.f32 %v732, 1.442695
  %v736 = vpow.pop %v735
  %v737 = vsel %vm241, %v734, 0.0
  %738 = vadd.xlane.f32.xlu0 %v737
  %v739 = vpop.xlane.xlu0 %738
  %v740 = vsel %vm241, %v736, 0.0
  %741 = vadd.xlane.f32.xlu0 %v740
  %v742 = vpop.xlane.xlu0 %741
  %v743 = vrcp.pop %v739
  %v744 = vmul.f32 %v734, %v743
  %v745 = vrcp.pop %v742
  %v746 = vmul.f32 %v736, %v745
  %747 = vrot.lane.b32.xlu0 %v228, 56
  %v748 = vpop.permute.xlu0 %747
  %v751 = vsel %vm241, %v744, 0
  %753 = vmatprep.subr.mxu0 0.0
  %754 = vmatpush1.msra.mxu0 0.0
  %755 = vmatprep.subr.mxu0 0.0
  %756 = vmatpush1.msra.mxu0 0.0
  %757 = vmatprep.subr.mxu0 0.0
  %758 = vmatpush1.msra.mxu0 0.0
  %759 = vmatprep.subr.mxu0 0.0
  %760 = vmatpush1.msra.mxu0 0.0
  %761 = vmatprep.subr.mxu0 0.0
  %762 = vmatpush1.msra.mxu0 0.0
  %763 = vmatprep.subr.mxu0 0.0
  %764 = vmatpush1.msra.mxu0 0.0
  %765 = vmatprep.subr.mxu0 0.0
  %766 = vmatpush1.msra.mxu0 0.0
  %767 = vmatprep.subr.mxu0 0.0
  %768 = vmatpush1.msra.mxu0 0.0
  %769 = vmatprep.subr.mxu0 0.0
  %770 = vmatpush1.msra.mxu0 0.0
  %771 = vmatprep.subr.mxu0 0.0
  %772 = vmatpush1.msra.mxu0 0.0
  %773 = vmatprep.subr.mxu0 0.0
  %774 = vmatpush1.msra.mxu0 0.0
  %775 = vmatprep.subr.mxu0 0.0
  %776 = vmatpush1.msra.mxu0 0.0
  %777 = vmatprep.subr.mxu0 0.0
  %778 = vmatpush1.msra.mxu0 0.0
  %779 = vmatprep.subr.mxu0 0.0
  %780 = vmatpush1.msra.mxu0 0.0
  %781 = vmatprep.subr.mxu0 0.0
  %782 = vmatpush1.msra.mxu0 0.0
  %783 = vmatprep.subr.mxu0 0.0
  %784 = vmatpush1.msra.mxu0 %v748
  %785 = vmatprep.subr.mxu0 0.0
  %786 = vmatpush2.msra.mxu0 0.0
  %787 = vmatprep.subr.mxu0 0.0
  %788 = vmatpush2.msra.mxu0 0.0
  %789 = vmatprep.subr.mxu0 0.0
  %790 = vmatpush2.msra.mxu0 0.0
  %791 = vmatprep.subr.mxu0 0.0
  %792 = vmatpush2.msra.mxu0 0.0
  %793 = vmatprep.subr.mxu0 0.0
  %794 = vmatpush2.msra.mxu0 0.0
  %795 = vmatprep.subr.mxu0 0.0
  %796 = vmatpush2.msra.mxu0 0.0
  %797 = vmatprep.subr.mxu0 0.0
  %798 = vmatpush2.msra.mxu0 0.0
  %799 = vmatprep.subr.mxu0 0.0
  %800 = vmatpush2.msra.mxu0 0.0
  %801 = vmatprep.subr.mxu0 0.0
  %802 = vmatpush2.msra.mxu0 0.0
  %803 = vmatprep.subr.mxu0 0.0
  %804 = vmatpush2.msra.mxu0 0.0
  %805 = vmatprep.subr.mxu0 0.0
  %806 = vmatpush2.msra.mxu0 0.0
  %807 = vmatprep.subr.mxu0 0.0
  %808 = vmatpush2.msra.mxu0 0.0
  %809 = vmatprep.subr.mxu0 0.0
  %810 = vmatpush2.msra.mxu0 0.0
  %811 = vmatprep.subr.mxu0 0.0
  %812 = vmatpush2.msra.mxu0 0.0
  %813 = vmatprep.subr.mxu0 0.0
  %814 = vmatpush2.msra.mxu0 0.0
  %815 = vmatprep.subr.mxu0 0.0
  %816 = vmatpush2.msra.mxu0 0.0
  %817 = vmatprep.mubr.f32.mxu0 0.0
  %818 = vmatmul.mubr.f32.gmra.mxu0 %v751
  %v819 = vpop.f32.mrf.mxu0
  %v820 = vadd.f32 0.0, %v819
  %v821 = vpop.f32.mrf.mxu0
  %822 = vdwg.mxu0
  %823 = vrot.lane.b32.xlu0 %v233, 56
  %v824 = vpop.permute.xlu0 %823
  %v827 = vsel %vm241, %v746, 0
  %829 = vmatprep.subr.mxu0 0.0
  %830 = vmatpush1.msra.mxu0 0.0
  %831 = vmatprep.subr.mxu0 0.0
  %832 = vmatpush1.msra.mxu0 0.0
  %833 = vmatprep.subr.mxu0 0.0
  %834 = vmatpush1.msra.mxu0 0.0
  %835 = vmatprep.subr.mxu0 0.0
  %836 = vmatpush1.msra.mxu0 0.0
  %837 = vmatprep.subr.mxu0 0.0
  %838 = vmatpush1.msra.mxu0 0.0
  %839 = vmatprep.subr.mxu0 0.0
  %840 = vmatpush1.msra.mxu0 0.0
  %841 = vmatprep.subr.mxu0 0.0
  %842 = vmatpush1.msra.mxu0 0.0
  %843 = vmatprep.subr.mxu0 0.0
  %844 = vmatpush1.msra.mxu0 0.0
  %845 = vmatprep.subr.mxu0 0.0
  %846 = vmatpush1.msra.mxu0 0.0
  %847 = vmatprep.subr.mxu0 0.0
  %848 = vmatpush1.msra.mxu0 0.0
  %849 = vmatprep.subr.mxu0 0.0
  %850 = vmatpush1.msra.mxu0 0.0
  %851 = vmatprep.subr.mxu0 0.0
  %852 = vmatpush1.msra.mxu0 0.0
  %853 = vmatprep.subr.mxu0 0.0
  %854 = vmatpush1.msra.mxu0 0.0
  %855 = vmatprep.subr.mxu0 0.0
  %856 = vmatpush1.msra.mxu0 0.0
  %857 = vmatprep.subr.mxu0 0.0
  %858 = vmatpush1.msra.mxu0 0.0
  %859 = vmatprep.subr.mxu0 0.0
  %860 = vmatpush1.msra.mxu0 %v824
  %861 = vmatprep.subr.mxu0 0.0
  %862 = vmatpush2.msra.mxu0 0.0
  %863 = vmatprep.subr.mxu0 0.0
  %864 = vmatpush2.msra.mxu0 0.0
  %865 = vmatprep.subr.mxu0 0.0
  %866 = vmatpush2.msra.mxu0 0.0
  %867 = vmatprep.subr.mxu0 0.0
  %868 = vmatpush2.msra.mxu0 0.0
  %869 = vmatprep.subr.mxu0 0.0
  %870 = vmatpush2.msra.mxu0 0.0
  %871 = vmatprep.subr.mxu0 0.0
  %872 = vmatpush2.msra.mxu0 0.0
  %873 = vmatprep.subr.mxu0 0.0
  %874 = vmatpush2.msra.mxu0 0.0
  %875 = vmatprep.subr.mxu0 0.0
  %876 = vmatpush2.msra.mxu0 0.0
  %877 = vmatprep.subr.mxu0 0.0
  %878 = vmatpush2.msra.mxu0 0.0
  %879 = vmatprep.subr.mxu0 0.0
  %880 = vmatpush2.msra.mxu0 0.0
  %881 = vmatprep.subr.mxu0 0.0
  %882 = vmatpush2.msra.mxu0 0.0
  %883 = vmatprep.subr.mxu0 0.0
  %884 = vmatpush2.msra.mxu0 0.0
  %885 = vmatprep.subr.mxu0 0.0
  %886 = vmatpush2.msra.mxu0 0.0
  %887 = vmatprep.subr.mxu0 0.0
  %888 = vmatpush2.msra.mxu0 0.0
  %889 = vmatprep.subr.mxu0 0.0
  %890 = vmatpush2.msra.mxu0 0.0
  %891 = vmatprep.subr.mxu0 0.0
  %892 = vmatpush2.msra.mxu0 0.0
  %893 = vmatprep.mubr.f32.mxu0 0.0
  %894 = vmatmul.mubr.f32.gmra.mxu0 %v827
  %v895 = vpop.f32.mrf.mxu0
  %v896 = vadd.f32 0.0, %v895
  %v897 = vpop.f32.mrf.mxu0
  %898 = vdwg.mxu0
  %899 = vrot.lane.b32.xlu0 %v236, 112
  %v900 = vpop.permute.xlu0 %899
  %901 = vrot.lane.b32.xlu0 %v228, 80
  %v902 = vpop.permute.xlu0 %901
  %v903 = vsel %vm241, %v900, 0
  %v905 = vsel %vm241, %v902, 0
  %907 = vmatprep.subr.mxu0 0.0
  %908 = vmatpush1.xpose.msra.mxu0 0.0
  %909 = vmatprep.subr.mxu0 0.0
  %910 = vmatpush1.xpose.msra.mxu0 0.0
  %911 = vmatprep.subr.mxu0 0.0
  %912 = vmatpush1.xpose.msra.mxu0 0.0
  %913 = vmatprep.subr.mxu0 0.0
  %914 = vmatpush1.xpose.msra.mxu0 0.0
  %915 = vmatprep.subr.mxu0 0.0
  %916 = vmatpush1.xpose.msra.mxu0 0.0
  %917 = vmatprep.subr.mxu0 0.0
  %918 = vmatpush1.xpose.msra.mxu0 0.0
  %919 = vmatprep.subr.mxu0 0.0
  %920 = vmatpush1.xpose.msra.mxu0 0.0
  %921 = vmatprep.subr.mxu0 0.0
  %922 = vmatpush1.xpose.msra.mxu0 0.0
  %923 = vmatprep.subr.mxu0 0.0
  %924 = vmatpush1.xpose.msra.mxu0 0.0
  %925 = vmatprep.subr.mxu0 0.0
  %926 = vmatpush1.xpose.msra.mxu0 0.0
  %927 = vmatprep.subr.mxu0 0.0
  %928 = vmatpush1.xpose.msra.mxu0 0.0
  %929 = vmatprep.subr.mxu0 0.0
  %930 = vmatpush1.xpose.msra.mxu0 0.0
  %931 = vmatprep.subr.mxu0 0.0
  %932 = vmatpush1.xpose.msra.mxu0 0.0
  %933 = vmatprep.subr.mxu0 0.0
  %934 = vmatpush1.xpose.msra.mxu0 0.0
  %935 = vmatprep.subr.mxu0 0.0
  %936 = vmatpush1.xpose.msra.mxu0 0.0
  %937 = vmatprep.subr.mxu0 0.0
  %938 = vmatpush1.xpose.msra.mxu0 %v905
  %939 = vmatprep.subr.mxu0 0.0
  %940 = vmatpush2.xpose.msra.mxu0 0.0
  %941 = vmatprep.subr.mxu0 0.0
  %942 = vmatpush2.xpose.msra.mxu0 0.0
  %943 = vmatprep.subr.mxu0 0.0
  %944 = vmatpush2.xpose.msra.mxu0 0.0
  %945 = vmatprep.subr.mxu0 0.0
  %946 = vmatpush2.xpose.msra.mxu0 0.0
  %947 = vmatprep.subr.mxu0 0.0
  %948 = vmatpush2.xpose.msra.mxu0 0.0
  %949 = vmatprep.subr.mxu0 0.0
  %950 = vmatpush2.xpose.msra.mxu0 0.0
  %951 = vmatprep.subr.mxu0 0.0
  %952 = vmatpush2.xpose.msra.mxu0 0.0
  %953 = vmatprep.subr.mxu0 0.0
  %954 = vmatpush2.xpose.msra.mxu0 0.0
  %955 = vmatprep.subr.mxu0 0.0
  %956 = vmatpush2.xpose.msra.mxu0 0.0
  %957 = vmatprep.subr.mxu0 0.0
  %958 = vmatpush2.xpose.msra.mxu0 0.0
  %959 = vmatprep.subr.mxu0 0.0
  %960 = vmatpush2.xpose.msra.mxu0 0.0
  %961 = vmatprep.subr.mxu0 0.0
  %962 = vmatpush2.xpose.msra.mxu0 0.0
  %963 = vmatprep.subr.mxu0 0.0
  %964 = vmatpush2.xpose.msra.mxu0 0.0
  %965 = vmatprep.subr.mxu0 0.0
  %966 = vmatpush2.xpose.msra.mxu0 0.0
  %967 = vmatprep.subr.mxu0 0.0
  %968 = vmatpush2.xpose.msra.mxu0 0.0
  %969 = vmatprep.subr.mxu0 0.0
  %970 = vmatpush2.xpose.msra.mxu0 0.0
  %971 = vmatprep.mubr.f32.mxu0 0.0
  %972 = vmatmul.mubr.f32.gmra.mxu0 %v903
  %v973 = vpop.f32.mrf.mxu0
  %v974 = vadd.f32 0.0, %v973
  %v975 = vpop.f32.mrf.mxu0
  %976 = vdwg.mxu0
  %977 = vrot.lane.b32.xlu0 %v237, 112
  %v978 = vpop.permute.xlu0 %977
  %979 = vrot.lane.b32.xlu0 %v233, 80
  %v980 = vpop.permute.xlu0 %979
  %v981 = vsel %vm241, %v978, 0
  %v983 = vsel %vm241, %v980, 0
  %985 = vmatprep.subr.mxu0 0.0
  %986 = vmatpush1.xpose.msra.mxu0 0.0
  %987 = vmatprep.subr.mxu0 0.0
  %988 = vmatpush1.xpose.msra.mxu0 0.0
  %989 = vmatprep.subr.mxu0 0.0
  %990 = vmatpush1.xpose.msra.mxu0 0.0
  %991 = vmatprep.subr.mxu0 0.0
  %992 = vmatpush1.xpose.msra.mxu0 0.0
  %993 = vmatprep.subr.mxu0 0.0
  %994 = vmatpush1.xpose.msra.mxu0 0.0
  %995 = vmatprep.subr.mxu0 0.0
  %996 = vmatpush1.xpose.msra.mxu0 0.0
  %997 = vmatprep.subr.mxu0 0.0
  %998 = vmatpush1.xpose.msra.mxu0 0.0
  %999 = vmatprep.subr.mxu0 0.0
  %1000 = vmatpush1.xpose.msra.mxu0 0.0
  %1001 = vmatprep.subr.mxu0 0.0
  %1002 = vmatpush1.xpose.msra.mxu0 0.0
  %1003 = vmatprep.subr.mxu0 0.0
  %1004 = vmatpush1.xpose.msra.mxu0 0.0
  %1005 = vmatprep.subr.mxu0 0.0
  %1006 = vmatpush1.xpose.msra.mxu0 0.0
  %1007 = vmatprep.subr.mxu0 0.0
  %1008 = vmatpush1.xpose.msra.mxu0 0.0
  %1009 = vmatprep.subr.mxu0 0.0
  %1010 = vmatpush1.xpose.msra.mxu0 0.0
  %1011 = vmatprep.subr.mxu0 0.0
  %1012 = vmatpush1.xpose.msra.mxu0 0.0
  %1013 = vmatprep.subr.mxu0 0.0
  %1014 = vmatpush1.xpose.msra.mxu0 0.0
  %1015 = vmatprep.subr.mxu0 0.0
  %1016 = vmatpush1.xpose.msra.mxu0 %v983
  %1017 = vmatprep.subr.mxu0 0.0
  %1018 = vmatpush2.xpose.msra.mxu0 0.0
  %1019 = vmatprep.subr.mxu0 0.0
  %1020 = vmatpush2.xpose.msra.mxu0 0.0
  %1021 = vmatprep.subr.mxu0 0.0
  %1022 = vmatpush2.xpose.msra.mxu0 0.0
  %1023 = vmatprep.subr.mxu0 0.0
  %1024 = vmatpush2.xpose.msra.mxu0 0.0
  %1025 = vmatprep.subr.mxu0 0.0
  %1026 = vmatpush2.xpose.msra.mxu0 0.0
  %1027 = vmatprep.subr.mxu0 0.0
  %1028 = vmatpush2.xpose.msra.mxu0 0.0
  %1029 = vmatprep.subr.mxu0 0.0
  %1030 = vmatpush2.xpose.msra.mxu0 0.0
  %1031 = vmatprep.subr.mxu0 0.0
  %1032 = vmatpush2.xpose.msra.mxu0 0.0
  %1033 = vmatprep.subr.mxu0 0.0
  %1034 = vmatpush2.xpose.msra.mxu0 0.0
  %1035 = vmatprep.subr.mxu0 0.0
  %1036 = vmatpush2.xpose.msra.mxu0 0.0
  %1037 = vmatprep.subr.mxu0 0.0
  %1038 = vmatpush2.xpose.msra.mxu0 0.0
  %1039 = vmatprep.subr.mxu0 0.0
  %1040 = vmatpush2.xpose.msra.mxu0 0.0
  %1041 = vmatprep.subr.mxu0 0.0
  %1042 = vmatpush2.xpose.msra.mxu0 0.0
  %1043 = vmatprep.subr.mxu0 0.0
  %1044 = vmatpush2.xpose.msra.mxu0 0.0
  %1045 = vmatprep.subr.mxu0 0.0
  %1046 = vmatpush2.xpose.msra.mxu0 0.0
  %1047 = vmatprep.subr.mxu0 0.0
  %1048 = vmatpush2.xpose.msra.mxu0 0.0
  %1049 = vmatprep.mubr.f32.mxu0 0.0
  %1050 = vmatmul.mubr.f32.gmra.mxu0 %v981
  %v1051 = vpop.f32.mrf.mxu0
  %v1052 = vadd.f32 0.0, %v1051
  %v1053 = vpop.f32.mrf.mxu0
  %1054 = vdwg.mxu0
  %v1055 = vsel %vm241, %v974, -inf
  %1056 = vmax.xlane.f32.xlu0 %v1055
  %v1057 = vpop.xlane.xlu0 %1056
  %v1058 = vsel %vm241, %v1052, -inf
  %1059 = vmax.xlane.f32.xlu0 %v1058
  %v1060 = vpop.xlane.xlu0 %1059
  %v1061 = vsub.f32 %v974, %v1057
  %v1062 = vsub.f32 %v1052, %v1060
  %v1063 = vmul.f32 %v1061, 1.442695
  %v1064 = vpow.pop %v1063
  %v1065 = vmul.f32 %v1062, 1.442695
  %v1066 = vpow.pop %v1065
  %v1067 = vsel %vm241, %v1064, 0.0
  %1068 = vadd.xlane.f32.xlu0 %v1067
  %v1069 = vpop.xlane.xlu0 %1068
  %v1070 = vsel %vm241, %v1066, 0.0
  %1071 = vadd.xlane.f32.xlu0 %v1070
  %v1072 = vpop.xlane.xlu0 %1071
  %v1073 = vrcp.pop %v1069
  %v1074 = vmul.f32 %v1064, %v1073
  %v1075 = vrcp.pop %v1072
  %v1076 = vmul.f32 %v1066, %v1075
  %1077 = vrot.lane.b32.xlu0 %v228, 48
  %v1078 = vpop.permute.xlu0 %1077
  %v1081 = vsel %vm241, %v1074, 0
  %1083 = vmatprep.subr.mxu0 0.0
  %1084 = vmatpush1.msra.mxu0 0.0
  %1085 = vmatprep.subr.mxu0 0.0
  %1086 = vmatpush1.msra.mxu0 0.0
  %1087 = vmatprep.subr.mxu0 0.0
  %1088 = vmatpush1.msra.mxu0 0.0
  %1089 = vmatprep.subr.mxu0 0.0
  %1090 = vmatpush1.msra.mxu0 0.0
  %1091 = vmatprep.subr.mxu0 0.0
  %1092 = vmatpush1.msra.mxu0 0.0
  %1093 = vmatprep.subr.mxu0 0.0
  %1094 = vmatpush1.msra.mxu0 0.0
  %1095 = vmatprep.subr.mxu0 0.0
  %1096 = vmatpush1.msra.mxu0 0.0
  %1097 = vmatprep.subr.mxu0 0.0
  %1098 = vmatpush1.msra.mxu0 0.0
  %1099 = vmatprep.subr.mxu0 0.0
  %1100 = vmatpush1.msra.mxu0 0.0
  %1101 = vmatprep.subr.mxu0 0.0
  %1102 = vmatpush1.msra.mxu0 0.0
  %1103 = vmatprep.subr.mxu0 0.0
  %1104 = vmatpush1.msra.mxu0 0.0
  %1105 = vmatprep.subr.mxu0 0.0
  %1106 = vmatpush1.msra.mxu0 0.0
  %1107 = vmatprep.subr.mxu0 0.0
  %1108 = vmatpush1.msra.mxu0 0.0
  %1109 = vmatprep.subr.mxu0 0.0
  %1110 = vmatpush1.msra.mxu0 0.0
  %1111 = vmatprep.subr.mxu0 0.0
  %1112 = vmatpush1.msra.mxu0 0.0
  %1113 = vmatprep.subr.mxu0 0.0
  %1114 = vmatpush1.msra.mxu0 %v1078
  %1115 = vmatprep.subr.mxu0 0.0
  %1116 = vmatpush2.msra.mxu0 0.0
  %1117 = vmatprep.subr.mxu0 0.0
  %1118 = vmatpush2.msra.mxu0 0.0
  %1119 = vmatprep.subr.mxu0 0.0
  %1120 = vmatpush2.msra.mxu0 0.0
  %1121 = vmatprep.subr.mxu0 0.0
  %1122 = vmatpush2.msra.mxu0 0.0
  %1123 = vmatprep.subr.mxu0 0.0
  %1124 = vmatpush2.msra.mxu0 0.0
  %1125 = vmatprep.subr.mxu0 0.0
  %1126 = vmatpush2.msra.mxu0 0.0
  %1127 = vmatprep.subr.mxu0 0.0
  %1128 = vmatpush2.msra.mxu0 0.0
  %1129 = vmatprep.subr.mxu0 0.0
  %1130 = vmatpush2.msra.mxu0 0.0
  %1131 = vmatprep.subr.mxu0 0.0
  %1132 = vmatpush2.msra.mxu0 0.0
  %1133 = vmatprep.subr.mxu0 0.0
  %1134 = vmatpush2.msra.mxu0 0.0
  %1135 = vmatprep.subr.mxu0 0.0
  %1136 = vmatpush2.msra.mxu0 0.0
  %1137 = vmatprep.subr.mxu0 0.0
  %1138 = vmatpush2.msra.mxu0 0.0
  %1139 = vmatprep.subr.mxu0 0.0
  %1140 = vmatpush2.msra.mxu0 0.0
  %1141 = vmatprep.subr.mxu0 0.0
  %1142 = vmatpush2.msra.mxu0 0.0
  %1143 = vmatprep.subr.mxu0 0.0
  %1144 = vmatpush2.msra.mxu0 0.0
  %1145 = vmatprep.subr.mxu0 0.0
  %1146 = vmatpush2.msra.mxu0 0.0
  %1147 = vmatprep.mubr.f32.mxu0 0.0
  %1148 = vmatmul.mubr.f32.gmra.mxu0 %v1081
  %v1149 = vpop.f32.mrf.mxu0
  %v1150 = vadd.f32 0.0, %v1149
  %v1151 = vpop.f32.mrf.mxu0
  %1152 = vdwg.mxu0
  %1153 = vrot.lane.b32.xlu0 %v233, 48
  %v1154 = vpop.permute.xlu0 %1153
  %v1157 = vsel %vm241, %v1076, 0
  %1159 = vmatprep.subr.mxu0 0.0
  %1160 = vmatpush1.msra.mxu0 0.0
  %1161 = vmatprep.subr.mxu0 0.0
  %1162 = vmatpush1.msra.mxu0 0.0
  %1163 = vmatprep.subr.mxu0 0.0
  %1164 = vmatpush1.msra.mxu0 0.0
  %1165 = vmatprep.subr.mxu0 0.0
  %1166 = vmatpush1.msra.mxu0 0.0
  %1167 = vmatprep.subr.mxu0 0.0
  %1168 = vmatpush1.msra.mxu0 0.0
  %1169 = vmatprep.subr.mxu0 0.0
  %1170 = vmatpush1.msra.mxu0 0.0
  %1171 = vmatprep.subr.mxu0 0.0
  %1172 = vmatpush1.msra.mxu0 0.0
  %1173 = vmatprep.subr.mxu0 0.0
  %1174 = vmatpush1.msra.mxu0 0.0
  %1175 = vmatprep.subr.mxu0 0.0
  %1176 = vmatpush1.msra.mxu0 0.0
  %1177 = vmatprep.subr.mxu0 0.0
  %1178 = vmatpush1.msra.mxu0 0.0
  %1179 = vmatprep.subr.mxu0 0.0
  %1180 = vmatpush1.msra.mxu0 0.0
  %1181 = vmatprep.subr.mxu0 0.0
  %1182 = vmatpush1.msra.mxu0 0.0
  %1183 = vmatprep.subr.mxu0 0.0
  %1184 = vmatpush1.msra.mxu0 0.0
  %1185 = vmatprep.subr.mxu0 0.0
  %1186 = vmatpush1.msra.mxu0 0.0
  %1187 = vmatprep.subr.mxu0 0.0
  %1188 = vmatpush1.msra.mxu0 0.0
  %1189 = vmatprep.subr.mxu0 0.0
  %1190 = vmatpush1.msra.mxu0 %v1154
  %1191 = vmatprep.subr.mxu0 0.0
  %1192 = vmatpush2.msra.mxu0 0.0
  %1193 = vmatprep.subr.mxu0 0.0
  %1194 = vmatpush2.msra.mxu0 0.0
  %1195 = vmatprep.subr.mxu0 0.0
  %1196 = vmatpush2.msra.mxu0 0.0
  %1197 = vmatprep.subr.mxu0 0.0
  %1198 = vmatpush2.msra.mxu0 0.0
  %1199 = vmatprep.subr.mxu0 0.0
  %1200 = vmatpush2.msra.mxu0 0.0
  %1201 = vmatprep.subr.mxu0 0.0
  %1202 = vmatpush2.msra.mxu0 0.0
  %1203 = vmatprep.subr.mxu0 0.0
  %1204 = vmatpush2.msra.mxu0 0.0
  %1205 = vmatprep.subr.mxu0 0.0
  %1206 = vmatpush2.msra.mxu0 0.0
  %1207 = vmatprep.subr.mxu0 0.0
  %1208 = vmatpush2.msra.mxu0 0.0
  %1209 = vmatprep.subr.mxu0 0.0
  %1210 = vmatpush2.msra.mxu0 0.0
  %1211 = vmatprep.subr.mxu0 0.0
  %1212 = vmatpush2.msra.mxu0 0.0
  %1213 = vmatprep.subr.mxu0 0.0
  %1214 = vmatpush2.msra.mxu0 0.0
  %1215 = vmatprep.subr.mxu0 0.0
  %1216 = vmatpush2.msra.mxu0 0.0
  %1217 = vmatprep.subr.mxu0 0.0
  %1218 = vmatpush2.msra.mxu0 0.0
  %1219 = vmatprep.subr.mxu0 0.0
  %1220 = vmatpush2.msra.mxu0 0.0
  %1221 = vmatprep.subr.mxu0 0.0
  %1222 = vmatpush2.msra.mxu0 0.0
  %1223 = vmatprep.mubr.f32.mxu0 0.0
  %1224 = vmatmul.mubr.f32.gmra.mxu0 %v1157
  %v1225 = vpop.f32.mrf.mxu0
  %v1226 = vadd.f32 0.0, %v1225
  %v1227 = vpop.f32.mrf.mxu0
  %1228 = vdwg.mxu0
  %1229 = vrot.lane.b32.xlu0 %v236, 104
  %v1230 = vpop.permute.xlu0 %1229
  %1231 = vrot.lane.b32.xlu0 %v228, 72
  %v1232 = vpop.permute.xlu0 %1231
  %v1233 = vsel %vm241, %v1230, 0
  %v1235 = vsel %vm241, %v1232, 0
  %1237 = vmatprep.subr.mxu0 0.0
  %1238 = vmatpush1.xpose.msra.mxu0 0.0
  %1239 = vmatprep.subr.mxu0 0.0
  %1240 = vmatpush1.xpose.msra.mxu0 0.0
  %1241 = vmatprep.subr.mxu0 0.0
  %1242 = vmatpush1.xpose.msra.mxu0 0.0
  %1243 = vmatprep.subr.mxu0 0.0
  %1244 = vmatpush1.xpose.msra.mxu0 0.0
  %1245 = vmatprep.subr.mxu0 0.0
  %1246 = vmatpush1.xpose.msra.mxu0 0.0
  %1247 = vmatprep.subr.mxu0 0.0
  %1248 = vmatpush1.xpose.msra.mxu0 0.0
  %1249 = vmatprep.subr.mxu0 0.0
  %1250 = vmatpush1.xpose.msra.mxu0 0.0
  %1251 = vmatprep.subr.mxu0 0.0
  %1252 = vmatpush1.xpose.msra.mxu0 0.0
  %1253 = vmatprep.subr.mxu0 0.0
  %1254 = vmatpush1.xpose.msra.mxu0 0.0
  %1255 = vmatprep.subr.mxu0 0.0
  %1256 = vmatpush1.xpose.msra.mxu0 0.0
  %1257 = vmatprep.subr.mxu0 0.0
  %1258 = vmatpush1.xpose.msra.mxu0 0.0
  %1259 = vmatprep.subr.mxu0 0.0
  %1260 = vmatpush1.xpose.msra.mxu0 0.0
  %1261 = vmatprep.subr.mxu0 0.0
  %1262 = vmatpush1.xpose.msra.mxu0 0.0
  %1263 = vmatprep.subr.mxu0 0.0
  %1264 = vmatpush1.xpose.msra.mxu0 0.0
  %1265 = vmatprep.subr.mxu0 0.0
  %1266 = vmatpush1.xpose.msra.mxu0 0.0
  %1267 = vmatprep.subr.mxu0 0.0
  %1268 = vmatpush1.xpose.msra.mxu0 %v1235
  %1269 = vmatprep.subr.mxu0 0.0
  %1270 = vmatpush2.xpose.msra.mxu0 0.0
  %1271 = vmatprep.subr.mxu0 0.0
  %1272 = vmatpush2.xpose.msra.mxu0 0.0
  %1273 = vmatprep.subr.mxu0 0.0
  %1274 = vmatpush2.xpose.msra.mxu0 0.0
  %1275 = vmatprep.subr.mxu0 0.0
  %1276 = vmatpush2.xpose.msra.mxu0 0.0
  %1277 = vmatprep.subr.mxu0 0.0
  %1278 = vmatpush2.xpose.msra.mxu0 0.0
  %1279 = vmatprep.subr.mxu0 0.0
  %1280 = vmatpush2.xpose.msra.mxu0 0.0
  %1281 = vmatprep.subr.mxu0 0.0
  %1282 = vmatpush2.xpose.msra.mxu0 0.0
  %1283 = vmatprep.subr.mxu0 0.0
  %1284 = vmatpush2.xpose.msra.mxu0 0.0
  %1285 = vmatprep.subr.mxu0 0.0
  %1286 = vmatpush2.xpose.msra.mxu0 0.0
  %1287 = vmatprep.subr.mxu0 0.0
  %1288 = vmatpush2.xpose.msra.mxu0 0.0
  %1289 = vmatprep.subr.mxu0 0.0
  %1290 = vmatpush2.xpose.msra.mxu0 0.0
  %1291 = vmatprep.subr.mxu0 0.0
  %1292 = vmatpush2.xpose.msra.mxu0 0.0
  %1293 = vmatprep.subr.mxu0 0.0
  %1294 = vmatpush2.xpose.msra.mxu0 0.0
  %1295 = vmatprep.subr.mxu0 0.0
  %1296 = vmatpush2.xpose.msra.mxu0 0.0
  %1297 = vmatprep.subr.mxu0 0.0
  %1298 = vmatpush2.xpose.msra.mxu0 0.0
  %1299 = vmatprep.subr.mxu0 0.0
  %1300 = vmatpush2.xpose.msra.mxu0 0.0
  %1301 = vmatprep.mubr.f32.mxu0 0.0
  %1302 = vmatmul.mubr.f32.gmra.mxu0 %v1233
  %v1303 = vpop.f32.mrf.mxu0
  %v1304 = vadd.f32 0.0, %v1303
  %v1305 = vpop.f32.mrf.mxu0
  %1306 = vdwg.mxu0
  %1307 = vrot.lane.b32.xlu0 %v237, 104
  %v1308 = vpop.permute.xlu0 %1307
  %1309 = vrot.lane.b32.xlu0 %v233, 72
  %v1310 = vpop.permute.xlu0 %1309
  %v1311 = vsel %vm241, %v1308, 0
  %v1313 = vsel %vm241, %v1310, 0
  %1315 = vmatprep.subr.mxu0 0.0
  %1316 = vmatpush1.xpose.msra.mxu0 0.0
  %1317 = vmatprep.subr.mxu0 0.0
  %1318 = vmatpush1.xpose.msra.mxu0 0.0
  %1319 = vmatprep.subr.mxu0 0.0
  %1320 = vmatpush1.xpose.msra.mxu0 0.0
  %1321 = vmatprep.subr.mxu0 0.0
  %1322 = vmatpush1.xpose.msra.mxu0 0.0
  %1323 = vmatprep.subr.mxu0 0.0
  %1324 = vmatpush1.xpose.msra.mxu0 0.0
  %1325 = vmatprep.subr.mxu0 0.0
  %1326 = vmatpush1.xpose.msra.mxu0 0.0
  %1327 = vmatprep.subr.mxu0 0.0
  %1328 = vmatpush1.xpose.msra.mxu0 0.0
  %1329 = vmatprep.subr.mxu0 0.0
  %1330 = vmatpush1.xpose.msra.mxu0 0.0
  %1331 = vmatprep.subr.mxu0 0.0
  %1332 = vmatpush1.xpose.msra.mxu0 0.0
  %1333 = vmatprep.subr.mxu0 0.0
  %1334 = vmatpush1.xpose.msra.mxu0 0.0
  %1335 = vmatprep.subr.mxu0 0.0
  %1336 = vmatpush1.xpose.msra.mxu0 0.0
  %1337 = vmatprep.subr.mxu0 0.0
  %1338 = vmatpush1.xpose.msra.mxu0 0.0
  %1339 = vmatprep.subr.mxu0 0.0
  %1340 = vmatpush1.xpose.msra.mxu0 0.0
  %1341 = vmatprep.subr.mxu0 0.0
  %1342 = vmatpush1.xpose.msra.mxu0 0.0
  %1343 = vmatprep.subr.mxu0 0.0
  %1344 = vmatpush1.xpose.msra.mxu0 0.0
  %1345 = vmatprep.subr.mxu0 0.0
  %1346 = vmatpush1.xpose.msra.mxu0 %v1313
  %1347 = vmatprep.subr.mxu0 0.0
  %1348 = vmatpush2.xpose.msra.mxu0 0.0
  %1349 = vmatprep.subr.mxu0 0.0
  %1350 = vmatpush2.xpose.msra.mxu0 0.0
  %1351 = vmatprep.subr.mxu0 0.0
  %1352 = vmatpush2.xpose.msra.mxu0 0.0
  %1353 = vmatprep.subr.mxu0 0.0
  %1354 = vmatpush2.xpose.msra.mxu0 0.0
  %1355 = vmatprep.subr.mxu0 0.0
  %1356 = vmatpush2.xpose.msra.mxu0 0.0
  %1357 = vmatprep.subr.mxu0 0.0
  %1358 = vmatpush2.xpose.msra.mxu0 0.0
  %1359 = vmatprep.subr.mxu0 0.0
  %1360 = vmatpush2.xpose.msra.mxu0 0.0
  %1361 = vmatprep.subr.mxu0 0.0
  %1362 = vmatpush2.xpose.msra.mxu0 0.0
  %1363 = vmatprep.subr.mxu0 0.0
  %1364 = vmatpush2.xpose.msra.mxu0 0.0
  %1365 = vmatprep.subr.mxu0 0.0
  %1366 = vmatpush2.xpose.msra.mxu0 0.0
  %1367 = vmatprep.subr.mxu0 0.0
  %1368 = vmatpush2.xpose.msra.mxu0 0.0
  %1369 = vmatprep.subr.mxu0 0.0
  %1370 = vmatpush2.xpose.msra.mxu0 0.0
  %1371 = vmatprep.subr.mxu0 0.0
  %1372 = vmatpush2.xpose.msra.mxu0 0.0
  %1373 = vmatprep.subr.mxu0 0.0
  %1374 = vmatpush2.xpose.msra.mxu0 0.0
  %1375 = vmatprep.subr.mxu0 0.0
  %1376 = vmatpush2.xpose.msra.mxu0 0.0
  %1377 = vmatprep.subr.mxu0 0.0
  %1378 = vmatpush2.xpose.msra.mxu0 0.0
  %1379 = vmatprep.mubr.f32.mxu0 0.0
  %1380 = vmatmul.mubr.f32.gmra.mxu0 %v1311
  %v1381 = vpop.f32.mrf.mxu0
  %v1382 = vadd.f32 0.0, %v1381
  %v1383 = vpop.f32.mrf.mxu0
  %1384 = vdwg.mxu0
  %v1385 = vsel %vm241, %v1304, -inf
  %1386 = vmax.xlane.f32.xlu0 %v1385
  %v1387 = vpop.xlane.xlu0 %1386
  %v1388 = vsel %vm241, %v1382, -inf
  %1389 = vmax.xlane.f32.xlu0 %v1388
  %v1390 = vpop.xlane.xlu0 %1389
  %v1391 = vsub.f32 %v1304, %v1387
  %v1392 = vsub.f32 %v1382, %v1390
  %v1393 = vmul.f32 %v1391, 1.442695
  %v1394 = vpow.pop %v1393
  %v1395 = vmul.f32 %v1392, 1.442695
  %v1396 = vpow.pop %v1395
  %v1397 = vsel %vm241, %v1394, 0.0
  %1398 = vadd.xlane.f32.xlu0 %v1397
  %v1399 = vpop.xlane.xlu0 %1398
  %v1400 = vsel %vm241, %v1396, 0.0
  %1401 = vadd.xlane.f32.xlu0 %v1400
  %v1402 = vpop.xlane.xlu0 %1401
  %v1403 = vrcp.pop %v1399
  %v1404 = vmul.f32 %v1394, %v1403
  %v1405 = vrcp.pop %v1402
  %v1406 = vmul.f32 %v1396, %v1405
  %1407 = vrot.lane.b32.xlu0 %v228, 40
  %v1408 = vpop.permute.xlu0 %1407
  %v1411 = vsel %vm241, %v1404, 0
  %1413 = vmatprep.subr.mxu0 0.0
  %1414 = vmatpush1.msra.mxu0 0.0
  %1415 = vmatprep.subr.mxu0 0.0
  %1416 = vmatpush1.msra.mxu0 0.0
  %1417 = vmatprep.subr.mxu0 0.0
  %1418 = vmatpush1.msra.mxu0 0.0
  %1419 = vmatprep.subr.mxu0 0.0
  %1420 = vmatpush1.msra.mxu0 0.0
  %1421 = vmatprep.subr.mxu0 0.0
  %1422 = vmatpush1.msra.mxu0 0.0
  %1423 = vmatprep.subr.mxu0 0.0
  %1424 = vmatpush1.msra.mxu0 0.0
  %1425 = vmatprep.subr.mxu0 0.0
  %1426 = vmatpush1.msra.mxu0 0.0
  %1427 = vmatprep.subr.mxu0 0.0
  %1428 = vmatpush1.msra.mxu0 0.0
  %1429 = vmatprep.subr.mxu0 0.0
  %1430 = vmatpush1.msra.mxu0 0.0
  %1431 = vmatprep.subr.mxu0 0.0
  %1432 = vmatpush1.msra.mxu0 0.0
  %1433 = vmatprep.subr.mxu0 0.0
  %1434 = vmatpush1.msra.mxu0 0.0
  %1435 = vmatprep.subr.mxu0 0.0
  %1436 = vmatpush1.msra.mxu0 0.0
  %1437 = vmatprep.subr.mxu0 0.0
  %1438 = vmatpush1.msra.mxu0 0.0
  %1439 = vmatprep.subr.mxu0 0.0
  %1440 = vmatpush1.msra.mxu0 0.0
  %1441 = vmatprep.subr.mxu0 0.0
  %1442 = vmatpush1.msra.mxu0 0.0
  %1443 = vmatprep.subr.mxu0 0.0
  %1444 = vmatpush1.msra.mxu0 %v1408
  %1445 = vmatprep.subr.mxu0 0.0
  %1446 = vmatpush2.msra.mxu0 0.0
  %1447 = vmatprep.subr.mxu0 0.0
  %1448 = vmatpush2.msra.mxu0 0.0
  %1449 = vmatprep.subr.mxu0 0.0
  %1450 = vmatpush2.msra.mxu0 0.0
  %1451 = vmatprep.subr.mxu0 0.0
  %1452 = vmatpush2.msra.mxu0 0.0
  %1453 = vmatprep.subr.mxu0 0.0
  %1454 = vmatpush2.msra.mxu0 0.0
  %1455 = vmatprep.subr.mxu0 0.0
  %1456 = vmatpush2.msra.mxu0 0.0
  %1457 = vmatprep.subr.mxu0 0.0
  %1458 = vmatpush2.msra.mxu0 0.0
  %1459 = vmatprep.subr.mxu0 0.0
  %1460 = vmatpush2.msra.mxu0 0.0
  %1461 = vmatprep.subr.mxu0 0.0
  %1462 = vmatpush2.msra.mxu0 0.0
  %1463 = vmatprep.subr.mxu0 0.0
  %1464 = vmatpush2.msra.mxu0 0.0
  %1465 = vmatprep.subr.mxu0 0.0
  %1466 = vmatpush2.msra.mxu0 0.0
  %1467 = vmatprep.subr.mxu0 0.0
  %1468 = vmatpush2.msra.mxu0 0.0
  %1469 = vmatprep.subr.mxu0 0.0
  %1470 = vmatpush2.msra.mxu0 0.0
  %1471 = vmatprep.subr.mxu0 0.0
  %1472 = vmatpush2.msra.mxu0 0.0
  %1473 = vmatprep.subr.mxu0 0.0
  %1474 = vmatpush2.msra.mxu0 0.0
  %1475 = vmatprep.subr.mxu0 0.0
  %1476 = vmatpush2.msra.mxu0 0.0
  %1477 = vmatprep.mubr.f32.mxu0 0.0
  %1478 = vmatmul.mubr.f32.gmra.mxu0 %v1411
  %v1479 = vpop.f32.mrf.mxu0
  %v1480 = vadd.f32 0.0, %v1479
  %v1481 = vpop.f32.mrf.mxu0
  %1482 = vdwg.mxu0
  %1483 = vrot.lane.b32.xlu0 %v233, 40
  %v1484 = vpop.permute.xlu0 %1483
  %v1487 = vsel %vm241, %v1406, 0
  %1489 = vmatprep.subr.mxu0 0.0
  %1490 = vmatpush1.msra.mxu0 0.0
  %1491 = vmatprep.subr.mxu0 0.0
  %1492 = vmatpush1.msra.mxu0 0.0
  %1493 = vmatprep.subr.mxu0 0.0
  %1494 = vmatpush1.msra.mxu0 0.0
  %1495 = vmatprep.subr.mxu0 0.0
  %1496 = vmatpush1.msra.mxu0 0.0
  %1497 = vmatprep.subr.mxu0 0.0
  %1498 = vmatpush1.msra.mxu0 0.0
  %1499 = vmatprep.subr.mxu0 0.0
  %1500 = vmatpush1.msra.mxu0 0.0
  %1501 = vmatprep.subr.mxu0 0.0
  %1502 = vmatpush1.msra.mxu0 0.0
  %1503 = vmatprep.subr.mxu0 0.0
  %1504 = vmatpush1.msra.mxu0 0.0
  %1505 = vmatprep.subr.mxu0 0.0
  %1506 = vmatpush1.msra.mxu0 0.0
  %1507 = vmatprep.subr.mxu0 0.0
  %1508 = vmatpush1.msra.mxu0 0.0
  %1509 = vmatprep.subr.mxu0 0.0
  %1510 = vmatpush1.msra.mxu0 0.0
  %1511 = vmatprep.subr.mxu0 0.0
  %1512 = vmatpush1.msra.mxu0 0.0
  %1513 = vmatprep.subr.mxu0 0.0
  %1514 = vmatpush1.msra.mxu0 0.0
  %1515 = vmatprep.subr.mxu0 0.0
  %1516 = vmatpush1.msra.mxu0 0.0
  %1517 = vmatprep.subr.mxu0 0.0
  %1518 = vmatpush1.msra.mxu0 0.0
  %1519 = vmatprep.subr.mxu0 0.0
  %1520 = vmatpush1.msra.mxu0 %v1484
  %1521 = vmatprep.subr.mxu0 0.0
  %1522 = vmatpush2.msra.mxu0 0.0
  %1523 = vmatprep.subr.mxu0 0.0
  %1524 = vmatpush2.msra.mxu0 0.0
  %1525 = vmatprep.subr.mxu0 0.0
  %1526 = vmatpush2.msra.mxu0 0.0
  %1527 = vmatprep.subr.mxu0 0.0
  %1528 = vmatpush2.msra.mxu0 0.0
  %1529 = vmatprep.subr.mxu0 0.0
  %1530 = vmatpush2.msra.mxu0 0.0
  %1531 = vmatprep.subr.mxu0 0.0
  %1532 = vmatpush2.msra.mxu0 0.0
  %1533 = vmatprep.subr.mxu0 0.0
  %1534 = vmatpush2.msra.mxu0 0.0
  %1535 = vmatprep.subr.mxu0 0.0
  %1536 = vmatpush2.msra.mxu0 0.0
  %1537 = vmatprep.subr.mxu0 0.0
  %1538 = vmatpush2.msra.mxu0 0.0
  %1539 = vmatprep.subr.mxu0 0.0
  %1540 = vmatpush2.msra.mxu0 0.0
  %1541 = vmatprep.subr.mxu0 0.0
  %1542 = vmatpush2.msra.mxu0 0.0
  %1543 = vmatprep.subr.mxu0 0.0
  %1544 = vmatpush2.msra.mxu0 0.0
  %1545 = vmatprep.subr.mxu0 0.0
  %1546 = vmatpush2.msra.mxu0 0.0
  %1547 = vmatprep.subr.mxu0 0.0
  %1548 = vmatpush2.msra.mxu0 0.0
  %1549 = vmatprep.subr.mxu0 0.0
  %1550 = vmatpush2.msra.mxu0 0.0
  %1551 = vmatprep.subr.mxu0 0.0
  %1552 = vmatpush2.msra.mxu0 0.0
  %1553 = vmatprep.mubr.f32.mxu0 0.0
  %1554 = vmatmul.mubr.f32.gmra.mxu0 %v1487
  %v1555 = vpop.f32.mrf.mxu0
  %v1556 = vadd.f32 0.0, %v1555
  %v1557 = vpop.f32.mrf.mxu0
  %1558 = vdwg.mxu0
  %1561 = vrot.lane.b32.xlu0 %v820, 8
  %v1562 = vpop.permute.xlu0 %1561
  %1563 = vrot.lane.b32.xlu0 %v896, 8
  %v1564 = vpop.permute.xlu0 %1563
  %1569 = vrot.lane.b32.xlu0 %v1150, 16
  %v1570 = vpop.permute.xlu0 %1569
  %1571 = vrot.lane.b32.xlu0 %v1226, 16
  %v1572 = vpop.permute.xlu0 %1571
  %1577 = vrot.lane.b32.xlu0 %v1480, 24
  %v1578 = vpop.permute.xlu0 %1577
  %1579 = vrot.lane.b32.xlu0 %v1556, 24
  %v1580 = vpop.permute.xlu0 %1579
  %v1583 = vsel %vm241, %v490, %v1562
  %v1584 = vsel %vm241, %v566, %v1564
  %vm1585 = vcmask 130048
  %v1586 = vsel %vm1585, %v1583, %v1570
  %v1587 = vsel %vm1585, %v1584, %v1572
  %vm1588 = vcmask 195584
  %v1589 = vsel %vm1588, %v1586, %v1578
  %v1590 = vsel %vm1588, %v1587, %v1580
  %v1591 = vlaneseq
  %v1592 = vshrl.u32 %v1591, 7
  %v1593 = vsub.s32 1, %v1592
  %v1594 = vrot.slane %v149, %v1593
  %v1596 = vsel %vm154, %v1589, 0
  %v1599 = vsel %vm154, %v1590, 0
  %1601 = vmatprep.subr.mxu0 0.0
  %1602 = vmatpush1.msra.mxu0 0.0
  %1603 = vmatprep.subr.mxu0 0.0
  %1604 = vmatpush1.msra.mxu0 0.0
  %1605 = vmatprep.subr.mxu0 0.0
  %1606 = vmatpush1.msra.mxu0 0.0
  %1607 = vmatprep.subr.mxu0 0.0
  %1608 = vmatpush1.msra.mxu0 0.0
  %1609 = vmatprep.subr.mxu0 0.0
  %1610 = vmatpush1.msra.mxu0 0.0
  %1611 = vmatprep.subr.mxu0 0.0
  %1612 = vmatpush1.msra.mxu0 0.0
  %1613 = vmatprep.subr.mxu0 0.0
  %1614 = vmatpush1.msra.mxu0 0.0
  %1615 = vmatprep.subr.mxu0 0.0
  %1616 = vmatpush1.msra.mxu0 0.0
  %1617 = vmatprep.subr.mxu0 0.0
  %1618 = vmatpush1.msra.mxu0 0.0
  %1619 = vmatprep.subr.mxu0 0.0
  %1620 = vmatpush1.msra.mxu0 0.0
  %1621 = vmatprep.subr.mxu0 0.0
  %1622 = vmatpush1.msra.mxu0 0.0
  %1623 = vmatprep.subr.mxu0 0.0
  %1624 = vmatpush1.msra.mxu0 0.0
  %1625 = vmatprep.subr.mxu0 0.0
  %1626 = vmatpush1.msra.mxu0 %v136
  %1627 = vmatprep.subr.mxu0 0.0
  %1628 = vmatpush1.msra.mxu0 %v135
  %1629 = vmatprep.subr.mxu0 0.0
  %1630 = vmatpush1.msra.mxu0 %v134
  %1631 = vmatprep.subr.mxu0 0.0
  %1632 = vmatpush1.msra.mxu0 %v133
  %1633 = vmatprep.subr.mxu0 0.0
  %1634 = vmatpush2.msra.mxu0 0.0
  %1635 = vmatprep.subr.mxu0 0.0
  %1636 = vmatpush2.msra.mxu0 0.0
  %1637 = vmatprep.subr.mxu0 0.0
  %1638 = vmatpush2.msra.mxu0 0.0
  %1639 = vmatprep.subr.mxu0 0.0
  %1640 = vmatpush2.msra.mxu0 0.0
  %1641 = vmatprep.subr.mxu0 0.0
  %1642 = vmatpush2.msra.mxu0 0.0
  %1643 = vmatprep.subr.mxu0 0.0
  %1644 = vmatpush2.msra.mxu0 0.0
  %1645 = vmatprep.subr.mxu0 0.0
  %1646 = vmatpush2.msra.mxu0 0.0
  %1647 = vmatprep.subr.mxu0 0.0
  %1648 = vmatpush2.msra.mxu0 0.0
  %1649 = vmatprep.subr.mxu0 0.0
  %1650 = vmatpush2.msra.mxu0 0.0
  %1651 = vmatprep.subr.mxu0 0.0
  %1652 = vmatpush2.msra.mxu0 0.0
  %1653 = vmatprep.subr.mxu0 0.0
  %1654 = vmatpush2.msra.mxu0 0.0
  %1655 = vmatprep.subr.mxu0 0.0
  %1656 = vmatpush2.msra.mxu0 0.0
  %1657 = vmatprep.subr.mxu0 0.0
  %1658 = vmatpush2.msra.mxu0 0.0
  %1659 = vmatprep.subr.mxu0 0.0
  %1660 = vmatpush2.msra.mxu0 0.0
  %1661 = vmatprep.subr.mxu0 0.0
  %1662 = vmatpush2.msra.mxu0 0.0
  %1663 = vmatprep.subr.mxu0 0.0
  %1664 = vmatpush2.msra.mxu0 0.0
  %1665 = vmatprep.mubr.f32.mxu0 0.0
  %1666 = vmatmul.mubr.f32.gmra.mxu0 %v1596
  %v1667 = vpop.f32.mrf.mxu0
  %v1668 = vadd.f32 %v1594, %v1667
  %v1669 = vpop.f32.mrf.mxu0
  %1670 = vmatprep.mubr.f32.mxu0 0.0
  %1671 = vmatmul.mubr.f32.gmra.mxu0 %v1599
  %v1672 = vpop.f32.mrf.mxu0
  %v1673 = vadd.f32 %v1594, %v1672
  %v1674 = vpop.f32.mrf.mxu0
  %1675 = vdwg.mxu0
  %v1676 = vadd.f32 %v121, %v1668
  %v1677 = vadd.f32 %v126, %v1673
  %v1678 = vsel %vm154, %v1676, 0.0
  %1679 = vadd.xlane.f32.xlu0 %v1678
  %v1680 = vpop.xlane.xlu0 %1679
  %v1681 = vsel %vm154, %v1677, 0.0
  %1682 = vadd.xlane.f32.xlu0 %v1681
  %v1683 = vpop.xlane.xlu0 %1682
  %v1684 = vrcp.pop 32.0
  %v1685 = vmul.f32 %v1680, %v1684
  %v1686 = vmul.f32 %v1683, %v1684
  %v1687 = vsub.f32 %v1676, %v1685
  %v1688 = vsub.f32 %v1677, %v1686
  %v1689 = vmul.f32 %v1687, %v1687
  %v1690 = vmul.f32 %v1688, %v1688
  %v1691 = vsel %vm154, %v1689, 0.0
  %1692 = vadd.xlane.f32.xlu0 %v1691
  %v1693 = vpop.xlane.xlu0 %1692
  %v1694 = vsel %vm154, %v1690, 0.0
  %1695 = vadd.xlane.f32.xlu0 %v1694
  %v1696 = vpop.xlane.xlu0 %1695
  %v1697 = vmul.f32 %v1693, %v1684
  %v1698 = vmul.f32 %v1696, %v1684
  %v1699 = vadd.f32 %v1697, 1e-05
  %v1700 = vadd.f32 %v1698, 1e-05
  %v1701 = vrsqrt.pop %v1699
  %v1702 = vrsqrt.pop %v1700
  %v1703 = vmul.f32 %v1687, %v1701
  %v1704 = vmul.f32 %v1688, %v1702
  %v1705 = vlaneseq
  %v1706 = vshrl.u32 %v1705, 7
  %v1707 = vsub.s32 4, %v1706
  %v1708 = vrot.slane %v149, %v1707
  %v1709 = vmul.f32 %v1703, %v1708
  %v1710 = vmul.f32 %v1704, %v1708
  %v1711 = vlaneseq
  %v1712 = vshrl.u32 %v1711, 7
  %v1713 = vsub.s32 5, %v1712
  %v1714 = vrot.slane %v149, %v1713
  %v1715 = vadd.f32 %v1709, %v1714
  %v1716 = vadd.f32 %v1710, %v1714
  %v1717 = vlaneseq
  %v1718 = vshrl.u32 %v1717, 7
  %v1719 = vsub.s32 2, %v1718
  %v1720 = vrot.slane %v149, %v1719
  %v1722 = vsel %vm154, %v1715, 0
  %v1725 = vsel %vm154, %v1716, 0
  %1727 = vmatprep.subr.mxu0 0.0
  %1728 = vmatpush1.msra.mxu0 0.0
  %1729 = vmatprep.subr.mxu0 0.0
  %1730 = vmatpush1.msra.mxu0 0.0
  %1731 = vmatprep.subr.mxu0 0.0
  %1732 = vmatpush1.msra.mxu0 0.0
  %1733 = vmatprep.subr.mxu0 0.0
  %1734 = vmatpush1.msra.mxu0 0.0
  %1735 = vmatprep.subr.mxu0 0.0
  %1736 = vmatpush1.msra.mxu0 0.0
  %1737 = vmatprep.subr.mxu0 0.0
  %1738 = vmatpush1.msra.mxu0 0.0
  %1739 = vmatprep.subr.mxu0 0.0
  %1740 = vmatpush1.msra.mxu0 0.0
  %1741 = vmatprep.subr.mxu0 0.0
  %1742 = vmatpush1.msra.mxu0 0.0
  %1743 = vmatprep.subr.mxu0 0.0
  %1744 = vmatpush1.msra.mxu0 0.0
  %1745 = vmatprep.subr.mxu0 0.0
  %1746 = vmatpush1.msra.mxu0 0.0
  %1747 = vmatprep.subr.mxu0 0.0
  %1748 = vmatpush1.msra.mxu0 0.0
  %1749 = vmatprep.subr.mxu0 0.0
  %1750 = vmatpush1.msra.mxu0 0.0
  %1751 = vmatprep.subr.mxu0 0.0
  %1752 = vmatpush1.msra.mxu0 %v140
  %1753 = vmatprep.subr.mxu0 0.0
  %1754 = vmatpush1.msra.mxu0 %v139
  %1755 = vmatprep.subr.mxu0 0.0
  %1756 = vmatpush1.msra.mxu0 %v138
  %1757 = vmatprep.subr.mxu0 0.0
  %1758 = vmatpush1.msra.mxu0 %v137
  %1759 = vmatprep.subr.mxu0 0.0
  %1760 = vmatpush2.msra.mxu0 0.0
  %1761 = vmatprep.subr.mxu0 0.0
  %1762 = vmatpush2.msra.mxu0 0.0
  %1763 = vmatprep.subr.mxu0 0.0
  %1764 = vmatpush2.msra.mxu0 0.0
  %1765 = vmatprep.subr.mxu0 0.0
  %1766 = vmatpush2.msra.mxu0 0.0
  %1767 = vmatprep.subr.mxu0 0.0
  %1768 = vmatpush2.msra.mxu0 0.0
  %1769 = vmatprep.subr.mxu0 0.0
  %1770 = vmatpush2.msra.mxu0 0.0
  %1771 = vmatprep.subr.mxu0 0.0
  %1772 = vmatpush2.msra.mxu0 0.0
  %1773 = vmatprep.subr.mxu0 0.0
  %1774 = vmatpush2.msra.mxu0 0.0
  %1775 = vmatprep.subr.mxu0 0.0
  %1776 = vmatpush2.msra.mxu0 0.0
  %1777 = vmatprep.subr.mxu0 0.0
  %1778 = vmatpush2.msra.mxu0 0.0
  %1779 = vmatprep.subr.mxu0 0.0
  %1780 = vmatpush2.msra.mxu0 0.0
  %1781 = vmatprep.subr.mxu0 0.0
  %1782 = vmatpush2.msra.mxu0 0.0
  %1783 = vmatprep.subr.mxu0 0.0
  %1784 = vmatpush2.msra.mxu0 0.0
  %1785 = vmatprep.subr.mxu0 0.0
  %1786 = vmatpush2.msra.mxu0 0.0
  %1787 = vmatprep.subr.mxu0 0.0
  %1788 = vmatpush2.msra.mxu0 0.0
  %1789 = vmatprep.subr.mxu0 0.0
  %1790 = vmatpush2.msra.mxu0 0.0
  %1791 = vmatprep.mubr.f32.mxu0 0.0
  %1792 = vmatmul.mubr.f32.gmra.mxu0 %v1722
  %v1793 = vpop.f32.mrf.mxu0
  %v1794 = vadd.f32 %v1720, %v1793
  %v1795 = vpop.f32.mrf.mxu0
  %1796 = vmatprep.mubr.f32.mxu0 0.0
  %1797 = vmatmul.mubr.f32.gmra.mxu0 %v1725
  %v1798 = vpop.f32.mrf.mxu0
  %v1799 = vadd.f32 %v1720, %v1798
  %v1800 = vpop.f32.mrf.mxu0
  %1801 = vdwg.mxu0
  %v1802 = vmax.f32 %v1794, 0.0
  %v1803 = vmax.f32 %v1799, 0.0
  %v1804 = vlaneseq
  %v1805 = vshrl.u32 %v1804, 7
  %v1806 = vsub.s32 3, %v1805
  %v1807 = vrot.slane %v149, %v1806
  %vm1808 = vcmask 523264
  %v1810 = vsel %vm1808, %v1802, 0
  %v1813 = vsel %vm1808, %v1803, 0
  %1815 = vmatprep.subr.mxu0 0.0
  %1816 = vmatpush1.msra.mxu0 0.0
  %1817 = vmatprep.subr.mxu0 0.0
  %1818 = vmatpush1.msra.mxu0 0.0
  %1819 = vmatprep.subr.mxu0 0.0
  %1820 = vmatpush1.msra.mxu0 0.0
  %1821 = vmatprep.subr.mxu0 0.0
  %1822 = vmatpush1.msra.mxu0 0.0
  %1823 = vmatprep.subr.mxu0 0.0
  %1824 = vmatpush1.msra.mxu0 0.0
  %1825 = vmatprep.subr.mxu0 0.0
  %1826 = vmatpush1.msra.mxu0 0.0
  %1827 = vmatprep.subr.mxu0 0.0
  %1828 = vmatpush1.msra.mxu0 0.0
  %1829 = vmatprep.subr.mxu0 0.0
  %1830 = vmatpush1.msra.mxu0 0.0
  %1831 = vmatprep.subr.mxu0 0.0
  %1832 = vmatpush1.msra.mxu0 %v148
  %1833 = vmatprep.subr.mxu0 0.0
  %1834 = vmatpush1.msra.mxu0 %v147
  %1835 = vmatprep.subr.mxu0 0.0
  %1836 = vmatpush1.msra.mxu0 %v146
  %1837 = vmatprep.subr.mxu0 0.0
  %1838 = vmatpush1.msra.mxu0 %v145
  %1839 = vmatprep.subr.mxu0 0.0
  %1840 = vmatpush1.msra.mxu0 %v144
  %1841 = vmatprep.subr.mxu0 0.0
  %1842 = vmatpush1.msra.mxu0 %v143
  %1843 = vmatprep.subr.mxu0 0.0
  %1844 = vmatpush1.msra.mxu0 %v142
  %1845 = vmatprep.subr.mxu0 0.0
  %1846 = vmatpush1.msra.mxu0 %v141
  %1847 = vmatprep.subr.mxu0 0.0
  %1848 = vmatpush2.msra.mxu0 0.0
  %1849 = vmatprep.subr.mxu0 0.0
  %1850 = vmatpush2.msra.mxu0 0.0
  %1851 = vmatprep.subr.mxu0 0.0
  %1852 = vmatpush2.msra.mxu0 0.0
  %1853 = vmatprep.subr.mxu0 0.0
  %1854 = vmatpush2.msra.mxu0 0.0
  %1855 = vmatprep.subr.mxu0 0.0
  %1856 = vmatpush2.msra.mxu0 0.0
  %1857 = vmatprep.subr.mxu0 0.0
  %1858 = vmatpush2.msra.mxu0 0.0
  %1859 = vmatprep.subr.mxu0 0.0
  %1860 = vmatpush2.msra.mxu0 0.0
  %1861 = vmatprep.subr.mxu0 0.0
  %1862 = vmatpush2.msra.mxu0 0.0
  %1863 = vmatprep.subr.mxu0 0.0
  %1864 = vmatpush2.msra.mxu0 0.0
  %1865 = vmatprep.subr.mxu0 0.0
  %1866 = vmatpush2.msra.mxu0 0.0
  %1867 = vmatprep.subr.mxu0 0.0
  %1868 = vmatpush2.msra.mxu0 0.0
  %1869 = vmatprep.subr.mxu0 0.0
  %1870 = vmatpush2.msra.mxu0 0.0
  %1871 = vmatprep.subr.mxu0 0.0
  %1872 = vmatpush2.msra.mxu0 0.0
  %1873 = vmatprep.subr.mxu0 0.0
  %1874 = vmatpush2.msra.mxu0 0.0
  %1875 = vmatprep.subr.mxu0 0.0
  %1876 = vmatpush2.msra.mxu0 0.0
  %1877 = vmatprep.subr.mxu0 0.0
  %1878 = vmatpush2.msra.mxu0 0.0
  %1879 = vmatprep.mubr.f32.mxu0 0.0
  %1880 = vmatmul.mubr.f32.gmra.mxu0 %v1810
  %v1881 = vpop.f32.mrf.mxu0
  %v1882 = vadd.f32 %v1807, %v1881
  %v1883 = vpop.f32.mrf.mxu0
  %1884 = vmatprep.mubr.f32.mxu0 0.0
  %1885 = vmatmul.mubr.f32.gmra.mxu0 %v1813
  %v1886 = vpop.f32.mrf.mxu0
  %v1887 = vadd.f32 %v1807, %v1886
  %v1888 = vpop.f32.mrf.mxu0
  %1889 = vdwg.mxu0
  %v1890 = vadd.f32 %v1715, %v1882
  %v1891 = vadd.f32 %v1716, %v1887
  %v1892 = vsel %vm154, %v1890, 0.0
  %1893 = vadd.xlane.f32.xlu0 %v1892
  %v1894 = vpop.xlane.xlu0 %1893
  %v1895 = vsel %vm154, %v1891, 0.0
  %1896 = vadd.xlane.f32.xlu0 %v1895
  %v1897 = vpop.xlane.xlu0 %1896
  %v1898 = vmul.f32 %v1894, %v1684
  %v1899 = vmul.f32 %v1897, %v1684
  %v1900 = vsub.f32 %v1890, %v1898
  %v1901 = vsub.f32 %v1891, %v1899
  %v1902 = vmul.f32 %v1900, %v1900
  %v1903 = vmul.f32 %v1901, %v1901
  %v1904 = vsel %vm154, %v1902, 0.0
  %1905 = vadd.xlane.f32.xlu0 %v1904
  %v1906 = vpop.xlane.xlu0 %1905
  %v1907 = vsel %vm154, %v1903, 0.0
  %1908 = vadd.xlane.f32.xlu0 %v1907
  %v1909 = vpop.xlane.xlu0 %1908
  %v1910 = vmul.f32 %v1906, %v1684
  %v1911 = vmul.f32 %v1909, %v1684
  %v1912 = vadd.f32 %v1910, 1e-05
  %v1913 = vadd.f32 %v1911, 1e-05
  %v1914 = vrsqrt.pop %v1912
  %v1915 = vrsqrt.pop %v1913
  %v1916 = vmul.f32 %v1900, %v1914
  %v1917 = vmul.f32 %v1901, %v1915
  %v1918 = vlaneseq
  %v1919 = vshrl.u32 %v1918, 7
  %v1920 = vsub.s32 6, %v1919
  %v1921 = vrot.slane %v149, %v1920
  %v1922 = vmul.f32 %v1916, %v1921
  %v1923 = vmul.f32 %v1917, %v1921
  %v1924 = vlaneseq
  %v1925 = vshrl.u32 %v1924, 7
  %v1926 = vsub.s32 7, %v1925
  %v1927 = vrot.slane %v149, %v1926
  %v1928 = vadd.f32 %v1922, %v1927
  %v1929 = vadd.f32 %v1923, %v1927
  %v1930 = vld [vmem:[%s2 + $0xa8] sm:$0xff]
  %v1931 = vld [vmem:[%s2 + $0xb0] sm:$0xff]
  %v1932 = vld [vmem:[%s2 + $0xb8] sm:$0xff]
  %v1933 = vld [vmem:[%s2 + $0xc0] sm:$0xff]
  %v1934 = vld [vmem:[%s2 + $0xc8] sm:$0xff]
  %v1935 = vld [vmem:[%s2 + $0xd0] sm:$0xff]
  %v1936 = vld [vmem:[%s2 + $0xd8] sm:$0xff]
  %v1937 = vld [vmem:[%s2 + $0xe0] sm:$0xff]
  %v1938 = vld [vmem:[%s2 + $0xe8] sm:$0xff]
  %v1939 = vld [vmem:[%s2 + $0xf0] sm:$0xff]
  %v1940 = vld [vmem:[%s2 + $0xf8] sm:$0xff]
  %v1941 = vld [vmem:[%s2 + $0x100] sm:$0xff]
  %v1942 = vld [vmem:[%s2 + $0x108] sm:$0xff]
  %v1943 = vld [vmem:[%s2 + $0x110] sm:$0xff]
  %v1944 = vld [vmem:[%s2 + $0x118] sm:$0xff]
  %v1945 = vld [vmem:[%s2 + $0x120] sm:$0xff]
  %v1946 = vld [vmem:[%s2 + $0x128] sm:$0xff]
  %v1947 = vld [vmem:[%s2 + $0x130] sm:$0xff]
  %v1948 = vld [vmem:[%s2 + $0x138] sm:$0xff]
  %v1949 = vld [vmem:[%s2 + $0x140] sm:$0xff]
  %v1950 = vld [vmem:[%s2 + $0x148] sm:$0xff]
  %v1951 = vlaneseq
  %v1952 = vshrl.u32 %v1951, 7
  %v1953 = vsub.s32 0, %v1952
  %v1954 = vrot.slane %v1950, %v1953
  %v1956 = vsel %vm154, %v1928, 0
  %v1959 = vsel %vm154, %v1929, 0
  %1961 = vmatprep.subr.mxu0 0.0
  %1962 = vmatpush1.msra.mxu0 0.0
  %1963 = vmatprep.subr.mxu0 0.0
  %1964 = vmatpush1.msra.mxu0 0.0
  %1965 = vmatprep.subr.mxu0 0.0
  %1966 = vmatpush1.msra.mxu0 0.0
  %1967 = vmatprep.subr.mxu0 0.0
  %1968 = vmatpush1.msra.mxu0 0.0
  %1969 = vmatprep.subr.mxu0 0.0
  %1970 = vmatpush1.msra.mxu0 0.0
  %1971 = vmatprep.subr.mxu0 0.0
  %1972 = vmatpush1.msra.mxu0 0.0
  %1973 = vmatprep.subr.mxu0 0.0
  %1974 = vmatpush1.msra.mxu0 0.0
  %1975 = vmatprep.subr.mxu0 0.0
  %1976 = vmatpush1.msra.mxu0 0.0
  %1977 = vmatprep.subr.mxu0 0.0
  %1978 = vmatpush1.msra.mxu0 0.0
  %1979 = vmatprep.subr.mxu0 0.0
  %1980 = vmatpush1.msra.mxu0 0.0
  %1981 = vmatprep.subr.mxu0 0.0
  %1982 = vmatpush1.msra.mxu0 0.0
  %1983 = vmatprep.subr.mxu0 0.0
  %1984 = vmatpush1.msra.mxu0 0.0
  %1985 = vmatprep.subr.mxu0 0.0
  %1986 = vmatpush1.msra.mxu0 %v1933
  %1987 = vmatprep.subr.mxu0 0.0
  %1988 = vmatpush1.msra.mxu0 %v1932
  %1989 = vmatprep.subr.mxu0 0.0
  %1990 = vmatpush1.msra.mxu0 %v1931
  %1991 = vmatprep.subr.mxu0 0.0
  %1992 = vmatpush1.msra.mxu0 %v1930
  %1993 = vmatprep.subr.mxu0 0.0
  %1994 = vmatpush2.msra.mxu0 0.0
  %1995 = vmatprep.subr.mxu0 0.0
  %1996 = vmatpush2.msra.mxu0 0.0
  %1997 = vmatprep.subr.mxu0 0.0
  %1998 = vmatpush2.msra.mxu0 0.0
  %1999 = vmatprep.subr.mxu0 0.0
  %2000 = vmatpush2.msra.mxu0 0.0
  %2001 = vmatprep.subr.mxu0 0.0
  %2002 = vmatpush2.msra.mxu0 0.0
  %2003 = vmatprep.subr.mxu0 0.0
  %2004 = vmatpush2.msra.mxu0 0.0
  %2005 = vmatprep.subr.mxu0 0.0
  %2006 = vmatpush2.msra.mxu0 0.0
  %2007 = vmatprep.subr.mxu0 0.0
  %2008 = vmatpush2.msra.mxu0 0.0
  %2009 = vmatprep.subr.mxu0 0.0
  %2010 = vmatpush2.msra.mxu0 0.0
  %2011 = vmatprep.subr.mxu0 0.0
  %2012 = vmatpush2.msra.mxu0 0.0
  %2013 = vmatprep.subr.mxu0 0.0
  %2014 = vmatpush2.msra.mxu0 0.0
  %2015 = vmatprep.subr.mxu0 0.0
  %2016 = vmatpush2.msra.mxu0 0.0
  %2017 = vmatprep.subr.mxu0 0.0
  %2018 = vmatpush2.msra.mxu0 0.0
  %2019 = vmatprep.subr.mxu0 0.0
  %2020 = vmatpush2.msra.mxu0 0.0
  %2021 = vmatprep.subr.mxu0 0.0
  %2022 = vmatpush2.msra.mxu0 0.0
  %2023 = vmatprep.subr.mxu0 0.0
  %2024 = vmatpush2.msra.mxu0 0.0
  %2025 = vmatprep.mubr.f32.mxu0 0.0
  %2026 = vmatmul.mubr.f32.gmra.mxu0 %v1956
  %v2027 = vpop.f32.mrf.mxu0
  %v2028 = vadd.f32 %v1954, %v2027
  %v2029 = vpop.f32.mrf.mxu0
  %2030 = vmatprep.mubr.f32.mxu0 0.0
  %2031 = vmatmul.mubr.f32.gmra.mxu0 %v1959
  %v2032 = vpop.f32.mrf.mxu0
  %v2033 = vadd.f32 %v1954, %v2032
  %v2034 = vpop.f32.mrf.mxu0
  %2035 = vdwg.mxu0
  %v2036 = vmul.f32 %v2028, 0.35355338
  %v2037 = vmul.f32 %v2033, 0.35355338
  %2039 = vrot.lane.b32.xlu0 %v2028, 96
  %v2040 = vpop.permute.xlu0 %2039
  %v2042 = vsel %vm241, %v2036, 0
  %v2044 = vsel %vm241, %v2040, 0
  %2046 = vmatprep.subr.mxu0 0.0
  %2047 = vmatpush1.xpose.msra.mxu0 0.0
  %2048 = vmatprep.subr.mxu0 0.0
  %2049 = vmatpush1.xpose.msra.mxu0 0.0
  %2050 = vmatprep.subr.mxu0 0.0
  %2051 = vmatpush1.xpose.msra.mxu0 0.0
  %2052 = vmatprep.subr.mxu0 0.0
  %2053 = vmatpush1.xpose.msra.mxu0 0.0
  %2054 = vmatprep.subr.mxu0 0.0
  %2055 = vmatpush1.xpose.msra.mxu0 0.0
  %2056 = vmatprep.subr.mxu0 0.0
  %2057 = vmatpush1.xpose.msra.mxu0 0.0
  %2058 = vmatprep.subr.mxu0 0.0
  %2059 = vmatpush1.xpose.msra.mxu0 0.0
  %2060 = vmatprep.subr.mxu0 0.0
  %2061 = vmatpush1.xpose.msra.mxu0 0.0
  %2062 = vmatprep.subr.mxu0 0.0
  %2063 = vmatpush1.xpose.msra.mxu0 0.0
  %2064 = vmatprep.subr.mxu0 0.0
  %2065 = vmatpush1.xpose.msra.mxu0 0.0
  %2066 = vmatprep.subr.mxu0 0.0
  %2067 = vmatpush1.xpose.msra.mxu0 0.0
  %2068 = vmatprep.subr.mxu0 0.0
  %2069 = vmatpush1.xpose.msra.mxu0 0.0
  %2070 = vmatprep.subr.mxu0 0.0
  %2071 = vmatpush1.xpose.msra.mxu0 0.0
  %2072 = vmatprep.subr.mxu0 0.0
  %2073 = vmatpush1.xpose.msra.mxu0 0.0
  %2074 = vmatprep.subr.mxu0 0.0
  %2075 = vmatpush1.xpose.msra.mxu0 0.0
  %2076 = vmatprep.subr.mxu0 0.0
  %2077 = vmatpush1.xpose.msra.mxu0 %v2044
  %2078 = vmatprep.subr.mxu0 0.0
  %2079 = vmatpush2.xpose.msra.mxu0 0.0
  %2080 = vmatprep.subr.mxu0 0.0
  %2081 = vmatpush2.xpose.msra.mxu0 0.0
  %2082 = vmatprep.subr.mxu0 0.0
  %2083 = vmatpush2.xpose.msra.mxu0 0.0
  %2084 = vmatprep.subr.mxu0 0.0
  %2085 = vmatpush2.xpose.msra.mxu0 0.0
  %2086 = vmatprep.subr.mxu0 0.0
  %2087 = vmatpush2.xpose.msra.mxu0 0.0
  %2088 = vmatprep.subr.mxu0 0.0
  %2089 = vmatpush2.xpose.msra.mxu0 0.0
  %2090 = vmatprep.subr.mxu0 0.0
  %2091 = vmatpush2.xpose.msra.mxu0 0.0
  %2092 = vmatprep.subr.mxu0 0.0
  %2093 = vmatpush2.xpose.msra.mxu0 0.0
  %2094 = vmatprep.subr.mxu0 0.0
  %2095 = vmatpush2.xpose.msra.mxu0 0.0
  %2096 = vmatprep.subr.mxu0 0.0
  %2097 = vmatpush2.xpose.msra.mxu0 0.0
  %2098 = vmatprep.subr.mxu0 0.0
  %2099 = vmatpush2.xpose.msra.mxu0 0.0
  %2100 = vmatprep.subr.mxu0 0.0
  %2101 = vmatpush2.xpose.msra.mxu0 0.0
  %2102 = vmatprep.subr.mxu0 0.0
  %2103 = vmatpush2.xpose.msra.mxu0 0.0
  %2104 = vmatprep.subr.mxu0 0.0
  %2105 = vmatpush2.xpose.msra.mxu0 0.0
  %2106 = vmatprep.subr.mxu0 0.0
  %2107 = vmatpush2.xpose.msra.mxu0 0.0
  %2108 = vmatprep.subr.mxu0 0.0
  %2109 = vmatpush2.xpose.msra.mxu0 0.0
  %2110 = vmatprep.mubr.f32.mxu0 0.0
  %2111 = vmatmul.mubr.f32.gmra.mxu0 %v2042
  %v2112 = vpop.f32.mrf.mxu0
  %v2113 = vadd.f32 0.0, %v2112
  %v2114 = vpop.f32.mrf.mxu0
  %2115 = vdwg.mxu0
  %2117 = vrot.lane.b32.xlu0 %v2033, 96
  %v2118 = vpop.permute.xlu0 %2117
  %v2120 = vsel %vm241, %v2037, 0
  %v2122 = vsel %vm241, %v2118, 0
  %2124 = vmatprep.subr.mxu0 0.0
  %2125 = vmatpush1.xpose.msra.mxu0 0.0
  %2126 = vmatprep.subr.mxu0 0.0
  %2127 = vmatpush1.xpose.msra.mxu0 0.0
  %2128 = vmatprep.subr.mxu0 0.0
  %2129 = vmatpush1.xpose.msra.mxu0 0.0
  %2130 = vmatprep.subr.mxu0 0.0
  %2131 = vmatpush1.xpose.msra.mxu0 0.0
  %2132 = vmatprep.subr.mxu0 0.0
  %2133 = vmatpush1.xpose.msra.mxu0 0.0
  %2134 = vmatprep.subr.mxu0 0.0
  %2135 = vmatpush1.xpose.msra.mxu0 0.0
  %2136 = vmatprep.subr.mxu0 0.0
  %2137 = vmatpush1.xpose.msra.mxu0 0.0
  %2138 = vmatprep.subr.mxu0 0.0
  %2139 = vmatpush1.xpose.msra.mxu0 0.0
  %2140 = vmatprep.subr.mxu0 0.0
  %2141 = vmatpush1.xpose.msra.mxu0 0.0
  %2142 = vmatprep.subr.mxu0 0.0
  %2143 = vmatpush1.xpose.msra.mxu0 0.0
  %2144 = vmatprep.subr.mxu0 0.0
  %2145 = vmatpush1.xpose.msra.mxu0 0.0
  %2146 = vmatprep.subr.mxu0 0.0
  %2147 = vmatpush1.xpose.msra.mxu0 0.0
  %2148 = vmatprep.subr.mxu0 0.0
  %2149 = vmatpush1.xpose.msra.mxu0 0.0
  %2150 = vmatprep.subr.mxu0 0.0
  %2151 = vmatpush1.xpose.msra.mxu0 0.0
  %2152 = vmatprep.subr.mxu0 0.0
  %2153 = vmatpush1.xpose.msra.mxu0 0.0
  %2154 = vmatprep.subr.mxu0 0.0
  %2155 = vmatpush1.xpose.msra.mxu0 %v2122
  %2156 = vmatprep.subr.mxu0 0.0
  %2157 = vmatpush2.xpose.msra.mxu0 0.0
  %2158 = vmatprep.subr.mxu0 0.0
  %2159 = vmatpush2.xpose.msra.mxu0 0.0
  %2160 = vmatprep.subr.mxu0 0.0
  %2161 = vmatpush2.xpose.msra.mxu0 0.0
  %2162 = vmatprep.subr.mxu0 0.0
  %2163 = vmatpush2.xpose.msra.mxu0 0.0
  %2164 = vmatprep.subr.mxu0 0.0
  %2165 = vmatpush2.xpose.msra.mxu0 0.0
  %2166 = vmatprep.subr.mxu0 0.0
  %2167 = vmatpush2.xpose.msra.mxu0 0.0
  %2168 = vmatprep.subr.mxu0 0.0
  %2169 = vmatpush2.xpose.msra.mxu0 0.0
  %2170 = vmatprep.subr.mxu0 0.0
  %2171 = vmatpush2.xpose.msra.mxu0 0.0
  %2172 = vmatprep.subr.mxu0 0.0
  %2173 = vmatpush2.xpose.msra.mxu0 0.0
  %2174 = vmatprep.subr.mxu0 0.0
  %2175 = vmatpush2.xpose.msra.mxu0 0.0
  %2176 = vmatprep.subr.mxu0 0.0
  %2177 = vmatpush2.xpose.msra.mxu0 0.0
  %2178 = vmatprep.subr.mxu0 0.0
  %2179 = vmatpush2.xpose.msra.mxu0 0.0
  %2180 = vmatprep.subr.mxu0 0.0
  %2181 = vmatpush2.xpose.msra.mxu0 0.0
  %2182 = vmatprep.subr.mxu0 0.0
  %2183 = vmatpush2.xpose.msra.mxu0 0.0
  %2184 = vmatprep.subr.mxu0 0.0
  %2185 = vmatpush2.xpose.msra.mxu0 0.0
  %2186 = vmatprep.subr.mxu0 0.0
  %2187 = vmatpush2.xpose.msra.mxu0 0.0
  %2188 = vmatprep.mubr.f32.mxu0 0.0
  %2189 = vmatmul.mubr.f32.gmra.mxu0 %v2120
  %v2190 = vpop.f32.mrf.mxu0
  %v2191 = vadd.f32 0.0, %v2190
  %v2192 = vpop.f32.mrf.mxu0
  %2193 = vdwg.mxu0
  %v2194 = vsel %vm241, %v2113, -inf
  %2195 = vmax.xlane.f32.xlu0 %v2194
  %v2196 = vpop.xlane.xlu0 %2195
  %v2197 = vsel %vm241, %v2191, -inf
  %2198 = vmax.xlane.f32.xlu0 %v2197
  %v2199 = vpop.xlane.xlu0 %2198
  %v2200 = vsub.f32 %v2113, %v2196
  %v2201 = vsub.f32 %v2191, %v2199
  %v2202 = vmul.f32 %v2200, 1.442695
  %v2203 = vpow.pop %v2202
  %v2204 = vmul.f32 %v2201, 1.442695
  %v2205 = vpow.pop %v2204
  %v2206 = vsel %vm241, %v2203, 0.0
  %2207 = vadd.xlane.f32.xlu0 %v2206
  %v2208 = vpop.xlane.xlu0 %2207
  %v2209 = vsel %vm241, %v2205, 0.0
  %2210 = vadd.xlane.f32.xlu0 %v2209
  %v2211 = vpop.xlane.xlu0 %2210
  %v2212 = vrcp.pop %v2208
  %v2213 = vmul.f32 %v2203, %v2212
  %v2214 = vrcp.pop %v2211
  %v2215 = vmul.f32 %v2205, %v2214
  %2216 = vrot.lane.b32.xlu0 %v2028, 64
  %v2217 = vpop.permute.xlu0 %2216
  %v2220 = vsel %vm241, %v2213, 0
  %2222 = vmatprep.subr.mxu0 0.0
  %2223 = vmatpush1.msra.mxu0 0.0
  %2224 = vmatprep.subr.mxu0 0.0
  %2225 = vmatpush1.msra.mxu0 0.0
  %2226 = vmatprep.subr.mxu0 0.0
  %2227 = vmatpush1.msra.mxu0 0.0
  %2228 = vmatprep.subr.mxu0 0.0
  %2229 = vmatpush1.msra.mxu0 0.0
  %2230 = vmatprep.subr.mxu0 0.0
  %2231 = vmatpush1.msra.mxu0 0.0
  %2232 = vmatprep.subr.mxu0 0.0
  %2233 = vmatpush1.msra.mxu0 0.0
  %2234 = vmatprep.subr.mxu0 0.0
  %2235 = vmatpush1.msra.mxu0 0.0
  %2236 = vmatprep.subr.mxu0 0.0
  %2237 = vmatpush1.msra.mxu0 0.0
  %2238 = vmatprep.subr.mxu0 0.0
  %2239 = vmatpush1.msra.mxu0 0.0
  %2240 = vmatprep.subr.mxu0 0.0
  %2241 = vmatpush1.msra.mxu0 0.0
  %2242 = vmatprep.subr.mxu0 0.0
  %2243 = vmatpush1.msra.mxu0 0.0
  %2244 = vmatprep.subr.mxu0 0.0
  %2245 = vmatpush1.msra.mxu0 0.0
  %2246 = vmatprep.subr.mxu0 0.0
  %2247 = vmatpush1.msra.mxu0 0.0
  %2248 = vmatprep.subr.mxu0 0.0
  %2249 = vmatpush1.msra.mxu0 0.0
  %2250 = vmatprep.subr.mxu0 0.0
  %2251 = vmatpush1.msra.mxu0 0.0
  %2252 = vmatprep.subr.mxu0 0.0
  %2253 = vmatpush1.msra.mxu0 %v2217
  %2254 = vmatprep.subr.mxu0 0.0
  %2255 = vmatpush2.msra.mxu0 0.0
  %2256 = vmatprep.subr.mxu0 0.0
  %2257 = vmatpush2.msra.mxu0 0.0
  %2258 = vmatprep.subr.mxu0 0.0
  %2259 = vmatpush2.msra.mxu0 0.0
  %2260 = vmatprep.subr.mxu0 0.0
  %2261 = vmatpush2.msra.mxu0 0.0
  %2262 = vmatprep.subr.mxu0 0.0
  %2263 = vmatpush2.msra.mxu0 0.0
  %2264 = vmatprep.subr.mxu0 0.0
  %2265 = vmatpush2.msra.mxu0 0.0
  %2266 = vmatprep.subr.mxu0 0.0
  %2267 = vmatpush2.msra.mxu0 0.0
  %2268 = vmatprep.subr.mxu0 0.0
  %2269 = vmatpush2.msra.mxu0 0.0
  %2270 = vmatprep.subr.mxu0 0.0
  %2271 = vmatpush2.msra.mxu0 0.0
  %2272 = vmatprep.subr.mxu0 0.0
  %2273 = vmatpush2.msra.mxu0 0.0
  %2274 = vmatprep.subr.mxu0 0.0
  %2275 = vmatpush2.msra.mxu0 0.0
  %2276 = vmatprep.subr.mxu0 0.0
  %2277 = vmatpush2.msra.mxu0 0.0
  %2278 = vmatprep.subr.mxu0 0.0
  %2279 = vmatpush2.msra.mxu0 0.0
  %2280 = vmatprep.subr.mxu0 0.0
  %2281 = vmatpush2.msra.mxu0 0.0
  %2282 = vmatprep.subr.mxu0 0.0
  %2283 = vmatpush2.msra.mxu0 0.0
  %2284 = vmatprep.subr.mxu0 0.0
  %2285 = vmatpush2.msra.mxu0 0.0
  %2286 = vmatprep.mubr.f32.mxu0 0.0
  %2287 = vmatmul.mubr.f32.gmra.mxu0 %v2220
  %v2288 = vpop.f32.mrf.mxu0
  %v2289 = vadd.f32 0.0, %v2288
  %v2290 = vpop.f32.mrf.mxu0
  %2291 = vdwg.mxu0
  %2292 = vrot.lane.b32.xlu0 %v2033, 64
  %v2293 = vpop.permute.xlu0 %2292
  %v2296 = vsel %vm241, %v2215, 0
  %2298 = vmatprep.subr.mxu0 0.0
  %2299 = vmatpush1.msra.mxu0 0.0
  %2300 = vmatprep.subr.mxu0 0.0
  %2301 = vmatpush1.msra.mxu0 0.0
  %2302 = vmatprep.subr.mxu0 0.0
  %2303 = vmatpush1.msra.mxu0 0.0
  %2304 = vmatprep.subr.mxu0 0.0
  %2305 = vmatpush1.msra.mxu0 0.0
  %2306 = vmatprep.subr.mxu0 0.0
  %2307 = vmatpush1.msra.mxu0 0.0
  %2308 = vmatprep.subr.mxu0 0.0
  %2309 = vmatpush1.msra.mxu0 0.0
  %2310 = vmatprep.subr.mxu0 0.0
  %2311 = vmatpush1.msra.mxu0 0.0
  %2312 = vmatprep.subr.mxu0 0.0
  %2313 = vmatpush1.msra.mxu0 0.0
  %2314 = vmatprep.subr.mxu0 0.0
  %2315 = vmatpush1.msra.mxu0 0.0
  %2316 = vmatprep.subr.mxu0 0.0
  %2317 = vmatpush1.msra.mxu0 0.0
  %2318 = vmatprep.subr.mxu0 0.0
  %2319 = vmatpush1.msra.mxu0 0.0
  %2320 = vmatprep.subr.mxu0 0.0
  %2321 = vmatpush1.msra.mxu0 0.0
  %2322 = vmatprep.subr.mxu0 0.0
  %2323 = vmatpush1.msra.mxu0 0.0
  %2324 = vmatprep.subr.mxu0 0.0
  %2325 = vmatpush1.msra.mxu0 0.0
  %2326 = vmatprep.subr.mxu0 0.0
  %2327 = vmatpush1.msra.mxu0 0.0
  %2328 = vmatprep.subr.mxu0 0.0
  %2329 = vmatpush1.msra.mxu0 %v2293
  %2330 = vmatprep.subr.mxu0 0.0
  %2331 = vmatpush2.msra.mxu0 0.0
  %2332 = vmatprep.subr.mxu0 0.0
  %2333 = vmatpush2.msra.mxu0 0.0
  %2334 = vmatprep.subr.mxu0 0.0
  %2335 = vmatpush2.msra.mxu0 0.0
  %2336 = vmatprep.subr.mxu0 0.0
  %2337 = vmatpush2.msra.mxu0 0.0
  %2338 = vmatprep.subr.mxu0 0.0
  %2339 = vmatpush2.msra.mxu0 0.0
  %2340 = vmatprep.subr.mxu0 0.0
  %2341 = vmatpush2.msra.mxu0 0.0
  %2342 = vmatprep.subr.mxu0 0.0
  %2343 = vmatpush2.msra.mxu0 0.0
  %2344 = vmatprep.subr.mxu0 0.0
  %2345 = vmatpush2.msra.mxu0 0.0
  %2346 = vmatprep.subr.mxu0 0.0
  %2347 = vmatpush2.msra.mxu0 0.0
  %2348 = vmatprep.subr.mxu0 0.0
  %2349 = vmatpush2.msra.mxu0 0.0
  %2350 = vmatprep.subr.mxu0 0.0
  %2351 = vmatpush2.msra.mxu0 0.0
  %2352 = vmatprep.subr.mxu0 0.0
  %2353 = vmatpush2.msra.mxu0 0.0
  %2354 = vmatprep.subr.mxu0 0.0
  %2355 = vmatpush2.msra.mxu0 0.0
  %2356 = vmatprep.subr.mxu0 0.0
  %2357 = vmatpush2.msra.mxu0 0.0
  %2358 = vmatprep.subr.mxu0 0.0
  %2359 = vmatpush2.msra.mxu0 0.0
  %2360 = vmatprep.subr.mxu0 0.0
  %2361 = vmatpush2.msra.mxu0 0.0
  %2362 = vmatprep.mubr.f32.mxu0 0.0
  %2363 = vmatmul.mubr.f32.gmra.mxu0 %v2296
  %v2364 = vpop.f32.mrf.mxu0
  %v2365 = vadd.f32 0.0, %v2364
  %v2366 = vpop.f32.mrf.mxu0
  %2367 = vdwg.mxu0
  %2368 = vrot.lane.b32.xlu0 %v2036, 120
  %v2369 = vpop.permute.xlu0 %2368
  %2370 = vrot.lane.b32.xlu0 %v2028, 88
  %v2371 = vpop.permute.xlu0 %2370
  %v2372 = vsel %vm241, %v2369, 0
  %v2374 = vsel %vm241, %v2371, 0
  %2376 = vmatprep.subr.mxu0 0.0
  %2377 = vmatpush1.xpose.msra.mxu0 0.0
  %2378 = vmatprep.subr.mxu0 0.0
  %2379 = vmatpush1.xpose.msra.mxu0 0.0
  %2380 = vmatprep.subr.mxu0 0.0
  %2381 = vmatpush1.xpose.msra.mxu0 0.0
  %2382 = vmatprep.subr.mxu0 0.0
  %2383 = vmatpush1.xpose.msra.mxu0 0.0
  %2384 = vmatprep.subr.mxu0 0.0
  %2385 = vmatpush1.xpose.msra.mxu0 0.0
  %2386 = vmatprep.subr.mxu0 0.0
  %2387 = vmatpush1.xpose.msra.mxu0 0.0
  %2388 = vmatprep.subr.mxu0 0.0
  %2389 = vmatpush1.xpose.msra.mxu0 0.0
  %2390 = vmatprep.subr.mxu0 0.0
  %2391 = vmatpush1.xpose.msra.mxu0 0.0
  %2392 = vmatprep.subr.mxu0 0.0
  %2393 = vmatpush1.xpose.msra.mxu0 0.0
  %2394 = vmatprep.subr.mxu0 0.0
  %2395 = vmatpush1.xpose.msra.mxu0 0.0
  %2396 = vmatprep.subr.mxu0 0.0
  %2397 = vmatpush1.xpose.msra.mxu0 0.0
  %2398 = vmatprep.subr.mxu0 0.0
  %2399 = vmatpush1.xpose.msra.mxu0 0.0
  %2400 = vmatprep.subr.mxu0 0.0
  %2401 = vmatpush1.xpose.msra.mxu0 0.0
  %2402 = vmatprep.subr.mxu0 0.0
  %2403 = vmatpush1.xpose.msra.mxu0 0.0
  %2404 = vmatprep.subr.mxu0 0.0
  %2405 = vmatpush1.xpose.msra.mxu0 0.0
  %2406 = vmatprep.subr.mxu0 0.0
  %2407 = vmatpush1.xpose.msra.mxu0 %v2374
  %2408 = vmatprep.subr.mxu0 0.0
  %2409 = vmatpush2.xpose.msra.mxu0 0.0
  %2410 = vmatprep.subr.mxu0 0.0
  %2411 = vmatpush2.xpose.msra.mxu0 0.0
  %2412 = vmatprep.subr.mxu0 0.0
  %2413 = vmatpush2.xpose.msra.mxu0 0.0
  %2414 = vmatprep.subr.mxu0 0.0
  %2415 = vmatpush2.xpose.msra.mxu0 0.0
  %2416 = vmatprep.subr.mxu0 0.0
  %2417 = vmatpush2.xpose.msra.mxu0 0.0
  %2418 = vmatprep.subr.mxu0 0.0
  %2419 = vmatpush2.xpose.msra.mxu0 0.0
  %2420 = vmatprep.subr.mxu0 0.0
  %2421 = vmatpush2.xpose.msra.mxu0 0.0
  %2422 = vmatprep.subr.mxu0 0.0
  %2423 = vmatpush2.xpose.msra.mxu0 0.0
  %2424 = vmatprep.subr.mxu0 0.0
  %2425 = vmatpush2.xpose.msra.mxu0 0.0
  %2426 = vmatprep.subr.mxu0 0.0
  %2427 = vmatpush2.xpose.msra.mxu0 0.0
  %2428 = vmatprep.subr.mxu0 0.0
  %2429 = vmatpush2.xpose.msra.mxu0 0.0
  %2430 = vmatprep.subr.mxu0 0.0
  %2431 = vmatpush2.xpose.msra.mxu0 0.0
  %2432 = vmatprep.subr.mxu0 0.0
  %2433 = vmatpush2.xpose.msra.mxu0 0.0
  %2434 = vmatprep.subr.mxu0 0.0
  %2435 = vmatpush2.xpose.msra.mxu0 0.0
  %2436 = vmatprep.subr.mxu0 0.0
  %2437 = vmatpush2.xpose.msra.mxu0 0.0
  %2438 = vmatprep.subr.mxu0 0.0
  %2439 = vmatpush2.xpose.msra.mxu0 0.0
  %2440 = vmatprep.mubr.f32.mxu0 0.0
  %2441 = vmatmul.mubr.f32.gmra.mxu0 %v2372
  %v2442 = vpop.f32.mrf.mxu0
  %v2443 = vadd.f32 0.0, %v2442
  %v2444 = vpop.f32.mrf.mxu0
  %2445 = vdwg.mxu0
  %2446 = vrot.lane.b32.xlu0 %v2037, 120
  %v2447 = vpop.permute.xlu0 %2446
  %2448 = vrot.lane.b32.xlu0 %v2033, 88
  %v2449 = vpop.permute.xlu0 %2448
  %v2450 = vsel %vm241, %v2447, 0
  %v2452 = vsel %vm241, %v2449, 0
  %2454 = vmatprep.subr.mxu0 0.0
  %2455 = vmatpush1.xpose.msra.mxu0 0.0
  %2456 = vmatprep.subr.mxu0 0.0
  %2457 = vmatpush1.xpose.msra.mxu0 0.0
  %2458 = vmatprep.subr.mxu0 0.0
  %2459 = vmatpush1.xpose.msra.mxu0 0.0
  %2460 = vmatprep.subr.mxu0 0.0
  %2461 = vmatpush1.xpose.msra.mxu0 0.0
  %2462 = vmatprep.subr.mxu0 0.0
  %2463 = vmatpush1.xpose.msra.mxu0 0.0
  %2464 = vmatprep.subr.mxu0 0.0
  %2465 = vmatpush1.xpose.msra.mxu0 0.0
  %2466 = vmatprep.subr.mxu0 0.0
  %2467 = vmatpush1.xpose.msra.mxu0 0.0
  %2468 = vmatprep.subr.mxu0 0.0
  %2469 = vmatpush1.xpose.msra.mxu0 0.0
  %2470 = vmatprep.subr.mxu0 0.0
  %2471 = vmatpush1.xpose.msra.mxu0 0.0
  %2472 = vmatprep.subr.mxu0 0.0
  %2473 = vmatpush1.xpose.msra.mxu0 0.0
  %2474 = vmatprep.subr.mxu0 0.0
  %2475 = vmatpush1.xpose.msra.mxu0 0.0
  %2476 = vmatprep.subr.mxu0 0.0
  %2477 = vmatpush1.xpose.msra.mxu0 0.0
  %2478 = vmatprep.subr.mxu0 0.0
  %2479 = vmatpush1.xpose.msra.mxu0 0.0
  %2480 = vmatprep.subr.mxu0 0.0
  %2481 = vmatpush1.xpose.msra.mxu0 0.0
  %2482 = vmatprep.subr.mxu0 0.0
  %2483 = vmatpush1.xpose.msra.mxu0 0.0
  %2484 = vmatprep.subr.mxu0 0.0
  %2485 = vmatpush1.xpose.msra.mxu0 %v2452
  %2486 = vmatprep.subr.mxu0 0.0
  %2487 = vmatpush2.xpose.msra.mxu0 0.0
  %2488 = vmatprep.subr.mxu0 0.0
  %2489 = vmatpush2.xpose.msra.mxu0 0.0
  %2490 = vmatprep.subr.mxu0 0.0
  %2491 = vmatpush2.xpose.msra.mxu0 0.0
  %2492 = vmatprep.subr.mxu0 0.0
  %2493 = vmatpush2.xpose.msra.mxu0 0.0
  %2494 = vmatprep.subr.mxu0 0.0
  %2495 = vmatpush2.xpose.msra.mxu0 0.0
  %2496 = vmatprep.subr.mxu0 0.0
  %2497 = vmatpush2.xpose.msra.mxu0 0.0
  %2498 = vmatprep.subr.mxu0 0.0
  %2499 = vmatpush2.xpose.msra.mxu0 0.0
  %2500 = vmatprep.subr.mxu0 0.0
  %2501 = vmatpush2.xpose.msra.mxu0 0.0
  %2502 = vmatprep.subr.mxu0 0.0
  %2503 = vmatpush2.xpose.msra.mxu0 0.0
  %2504 = vmatprep.subr.mxu0 0.0
  %2505 = vmatpush2.xpose.msra.mxu0 0.0
  %2506 = vmatprep.subr.mxu0 0.0
  %2507 = vmatpush2.xpose.msra.mxu0 0.0
  %2508 = vmatprep.subr.mxu0 0.0
  %2509 = vmatpush2.xpose.msra.mxu0 0.0
  %2510 = vmatprep.subr.mxu0 0.0
  %2511 = vmatpush2.xpose.msra.mxu0 0.0
  %2512 = vmatprep.subr.mxu0 0.0
  %2513 = vmatpush2.xpose.msra.mxu0 0.0
  %2514 = vmatprep.subr.mxu0 0.0
  %2515 = vmatpush2.xpose.msra.mxu0 0.0
  %2516 = vmatprep.subr.mxu0 0.0
  %2517 = vmatpush2.xpose.msra.mxu0 0.0
  %2518 = vmatprep.mubr.f32.mxu0 0.0
  %2519 = vmatmul.mubr.f32.gmra.mxu0 %v2450
  %v2520 = vpop.f32.mrf.mxu0
  %v2521 = vadd.f32 0.0, %v2520
  %v2522 = vpop.f32.mrf.mxu0
  %2523 = vdwg.mxu0
  %v2524 = vsel %vm241, %v2443, -inf
  %2525 = vmax.xlane.f32.xlu0 %v2524
  %v2526 = vpop.xlane.xlu0 %2525
  %v2527 = vsel %vm241, %v2521, -inf
  %2528 = vmax.xlane.f32.xlu0 %v2527
  %v2529 = vpop.xlane.xlu0 %2528
  %v2530 = vsub.f32 %v2443, %v2526
  %v2531 = vsub.f32 %v2521, %v2529
  %v2532 = vmul.f32 %v2530, 1.442695
  %v2533 = vpow.pop %v2532
  %v2534 = vmul.f32 %v2531, 1.442695
  %v2535 = vpow.pop %v2534
  %v2536 = vsel %vm241, %v2533, 0.0
  %2537 = vadd.xlane.f32.xlu0 %v2536
  %v2538 = vpop.xlane.xlu0 %2537
  %v2539 = vsel %vm241, %v2535, 0.0
  %2540 = vadd.xlane.f32.xlu0 %v2539
  %v2541 = vpop.xlane.xlu0 %2540
  %v2542 = vrcp.pop %v2538
  %v2543 = vmul.f32 %v2533, %v2542
  %v2544 = vrcp.pop %v2541
  %v2545 = vmul.f32 %v2535, %v2544
  %2546 = vrot.lane.b32.xlu0 %v2028, 56
  %v2547 = vpop.permute.xlu0 %2546
  %v2550 = vsel %vm241, %v2543, 0
  %2552 = vmatprep.subr.mxu0 0.0
  %2553 = vmatpush1.msra.mxu0 0.0
  %2554 = vmatprep.subr.mxu0 0.0
  %2555 = vmatpush1.msra.mxu0 0.0
  %2556 = vmatprep.subr.mxu0 0.0
  %2557 = vmatpush1.msra.mxu0 0.0
  %2558 = vmatprep.subr.mxu0 0.0
  %2559 = vmatpush1.msra.mxu0 0.0
  %2560 = vmatprep.subr.mxu0 0.0
  %2561 = vmatpush1.msra.mxu0 0.0
  %2562 = vmatprep.subr.mxu0 0.0
  %2563 = vmatpush1.msra.mxu0 0.0
  %2564 = vmatprep.subr.mxu0 0.0
  %2565 = vmatpush1.msra.mxu0 0.0
  %2566 = vmatprep.subr.mxu0 0.0
  %2567 = vmatpush1.msra.mxu0 0.0
  %2568 = vmatprep.subr.mxu0 0.0
  %2569 = vmatpush1.msra.mxu0 0.0
  %2570 = vmatprep.subr.mxu0 0.0
  %2571 = vmatpush1.msra.mxu0 0.0
  %2572 = vmatprep.subr.mxu0 0.0
  %2573 = vmatpush1.msra.mxu0 0.0
  %2574 = vmatprep.subr.mxu0 0.0
  %2575 = vmatpush1.msra.mxu0 0.0
  %2576 = vmatprep.subr.mxu0 0.0
  %2577 = vmatpush1.msra.mxu0 0.0
  %2578 = vmatprep.subr.mxu0 0.0
  %2579 = vmatpush1.msra.mxu0 0.0
  %2580 = vmatprep.subr.mxu0 0.0
  %2581 = vmatpush1.msra.mxu0 0.0
  %2582 = vmatprep.subr.mxu0 0.0
  %2583 = vmatpush1.msra.mxu0 %v2547
  %2584 = vmatprep.subr.mxu0 0.0
  %2585 = vmatpush2.msra.mxu0 0.0
  %2586 = vmatprep.subr.mxu0 0.0
  %2587 = vmatpush2.msra.mxu0 0.0
  %2588 = vmatprep.subr.mxu0 0.0
  %2589 = vmatpush2.msra.mxu0 0.0
  %2590 = vmatprep.subr.mxu0 0.0
  %2591 = vmatpush2.msra.mxu0 0.0
  %2592 = vmatprep.subr.mxu0 0.0
  %2593 = vmatpush2.msra.mxu0 0.0
  %2594 = vmatprep.subr.mxu0 0.0
  %2595 = vmatpush2.msra.mxu0 0.0
  %2596 = vmatprep.subr.mxu0 0.0
  %2597 = vmatpush2.msra.mxu0 0.0
  %2598 = vmatprep.subr.mxu0 0.0
  %2599 = vmatpush2.msra.mxu0 0.0
  %2600 = vmatprep.subr.mxu0 0.0
  %2601 = vmatpush2.msra.mxu0 0.0
  %2602 = vmatprep.subr.mxu0 0.0
  %2603 = vmatpush2.msra.mxu0 0.0
  %2604 = vmatprep.subr.mxu0 0.0
  %2605 = vmatpush2.msra.mxu0 0.0
  %2606 = vmatprep.subr.mxu0 0.0
  %2607 = vmatpush2.msra.mxu0 0.0
  %2608 = vmatprep.subr.mxu0 0.0
  %2609 = vmatpush2.msra.mxu0 0.0
  %2610 = vmatprep.subr.mxu0 0.0
  %2611 = vmatpush2.msra.mxu0 0.0
  %2612 = vmatprep.subr.mxu0 0.0
  %2613 = vmatpush2.msra.mxu0 0.0
  %2614 = vmatprep.subr.mxu0 0.0
  %2615 = vmatpush2.msra.mxu0 0.0
  %2616 = vmatprep.mubr.f32.mxu0 0.0
  %2617 = vmatmul.mubr.f32.gmra.mxu0 %v2550
  %v2618 = vpop.f32.mrf.mxu0
  %v2619 = vadd.f32 0.0, %v2618
  %v2620 = vpop.f32.mrf.mxu0
  %2621 = vdwg.mxu0
  %2622 = vrot.lane.b32.xlu0 %v2033, 56
  %v2623 = vpop.permute.xlu0 %2622
  %v2626 = vsel %vm241, %v2545, 0
  %2628 = vmatprep.subr.mxu0 0.0
  %2629 = vmatpush1.msra.mxu0 0.0
  %2630 = vmatprep.subr.mxu0 0.0
  %2631 = vmatpush1.msra.mxu0 0.0
  %2632 = vmatprep.subr.mxu0 0.0
  %2633 = vmatpush1.msra.mxu0 0.0
  %2634 = vmatprep.subr.mxu0 0.0
  %2635 = vmatpush1.msra.mxu0 0.0
  %2636 = vmatprep.subr.mxu0 0.0
  %2637 = vmatpush1.msra.mxu0 0.0
  %2638 = vmatprep.subr.mxu0 0.0
  %2639 = vmatpush1.msra.mxu0 0.0
  %2640 = vmatprep.subr.mxu0 0.0
  %2641 = vmatpush1.msra.mxu0 0.0
  %2642 = vmatprep.subr.mxu0 0.0
  %2643 = vmatpush1.msra.mxu0 0.0
  %2644 = vmatprep.subr.mxu0 0.0
  %2645 = vmatpush1.msra.mxu0 0.0
  %2646 = vmatprep.subr.mxu0 0.0
  %2647 = vmatpush1.msra.mxu0 0.0
  %2648 = vmatprep.subr.mxu0 0.0
  %2649 = vmatpush1.msra.mxu0 0.0
  %2650 = vmatprep.subr.mxu0 0.0
  %2651 = vmatpush1.msra.mxu0 0.0
  %2652 = vmatprep.subr.mxu0 0.0
  %2653 = vmatpush1.msra.mxu0 0.0
  %2654 = vmatprep.subr.mxu0 0.0
  %2655 = vmatpush1.msra.mxu0 0.0
  %2656 = vmatprep.subr.mxu0 0.0
  %2657 = vmatpush1.msra.mxu0 0.0
  %2658 = vmatprep.subr.mxu0 0.0
  %2659 = vmatpush1.msra.mxu0 %v2623
  %2660 = vmatprep.subr.mxu0 0.0
  %2661 = vmatpush2.msra.mxu0 0.0
  %2662 = vmatprep.subr.mxu0 0.0
  %2663 = vmatpush2.msra.mxu0 0.0
  %2664 = vmatprep.subr.mxu0 0.0
  %2665 = vmatpush2.msra.mxu0 0.0
  %2666 = vmatprep.subr.mxu0 0.0
  %2667 = vmatpush2.msra.mxu0 0.0
  %2668 = vmatprep.subr.mxu0 0.0
  %2669 = vmatpush2.msra.mxu0 0.0
  %2670 = vmatprep.subr.mxu0 0.0
  %2671 = vmatpush2.msra.mxu0 0.0
  %2672 = vmatprep.subr.mxu0 0.0
  %2673 = vmatpush2.msra.mxu0 0.0
  %2674 = vmatprep.subr.mxu0 0.0
  %2675 = vmatpush2.msra.mxu0 0.0
  %2676 = vmatprep.subr.mxu0 0.0
  %2677 = vmatpush2.msra.mxu0 0.0
  %2678 = vmatprep.subr.mxu0 0.0
  %2679 = vmatpush2.msra.mxu0 0.0
  %2680 = vmatprep.subr.mxu0 0.0
  %2681 = vmatpush2.msra.mxu0 0.0
  %2682 = vmatprep.subr.mxu0 0.0
  %2683 = vmatpush2.msra.mxu0 0.0
  %2684 = vmatprep.subr.mxu0 0.0
  %2685 = vmatpush2.msra.mxu0 0.0
  %2686 = vmatprep.subr.mxu0 0.0
  %2687 = vmatpush2.msra.mxu0 0.0
  %2688 = vmatprep.subr.mxu0 0.0
  %2689 = vmatpush2.msra.mxu0 0.0
  %2690 = vmatprep.subr.mxu0 0.0
  %2691 = vmatpush2.msra.mxu0 0.0
  %2692 = vmatprep.mubr.f32.mxu0 0.0
  %2693 = vmatmul.mubr.f32.gmra.mxu0 %v2626
  %v2694 = vpop.f32.mrf.mxu0
  %v2695 = vadd.f32 0.0, %v2694
  %v2696 = vpop.f32.mrf.mxu0
  %2697 = vdwg.mxu0
  %2698 = vrot.lane.b32.xlu0 %v2036, 112
  %v2699 = vpop.permute.xlu0 %2698
  %2700 = vrot.lane.b32.xlu0 %v2028, 80
  %v2701 = vpop.permute.xlu0 %2700
  %v2702 = vsel %vm241, %v2699, 0
  %v2704 = vsel %vm241, %v2701, 0
  %2706 = vmatprep.subr.mxu0 0.0
  %2707 = vmatpush1.xpose.msra.mxu0 0.0
  %2708 = vmatprep.subr.mxu0 0.0
  %2709 = vmatpush1.xpose.msra.mxu0 0.0
  %2710 = vmatprep.subr.mxu0 0.0
  %2711 = vmatpush1.xpose.msra.mxu0 0.0
  %2712 = vmatprep.subr.mxu0 0.0
  %2713 = vmatpush1.xpose.msra.mxu0 0.0
  %2714 = vmatprep.subr.mxu0 0.0
  %2715 = vmatpush1.xpose.msra.mxu0 0.0
  %2716 = vmatprep.subr.mxu0 0.0
  %2717 = vmatpush1.xpose.msra.mxu0 0.0
  %2718 = vmatprep.subr.mxu0 0.0
  %2719 = vmatpush1.xpose.msra.mxu0 0.0
  %2720 = vmatprep.subr.mxu0 0.0
  %2721 = vmatpush1.xpose.msra.mxu0 0.0
  %2722 = vmatprep.subr.mxu0 0.0
  %2723 = vmatpush1.xpose.msra.mxu0 0.0
  %2724 = vmatprep.subr.mxu0 0.0
  %2725 = vmatpush1.xpose.msra.mxu0 0.0
  %2726 = vmatprep.subr.mxu0 0.0
  %2727 = vmatpush1.xpose.msra.mxu0 0.0
  %2728 = vmatprep.subr.mxu0 0.0
  %2729 = vmatpush1.xpose.msra.mxu0 0.0
  %2730 = vmatprep.subr.mxu0 0.0
  %2731 = vmatpush1.xpose.msra.mxu0 0.0
  %2732 = vmatprep.subr.mxu0 0.0
  %2733 = vmatpush1.xpose.msra.mxu0 0.0
  %2734 = vmatprep.subr.mxu0 0.0
  %2735 = vmatpush1.xpose.msra.mxu0 0.0
  %2736 = vmatprep.subr.mxu0 0.0
  %2737 = vmatpush1.xpose.msra.mxu0 %v2704
  %2738 = vmatprep.subr.mxu0 0.0
  %2739 = vmatpush2.xpose.msra.mxu0 0.0
  %2740 = vmatprep.subr.mxu0 0.0
  %2741 = vmatpush2.xpose.msra.mxu0 0.0
  %2742 = vmatprep.subr.mxu0 0.0
  %2743 = vmatpush2.xpose.msra.mxu0 0.0
  %2744 = vmatprep.subr.mxu0 0.0
  %2745 = vmatpush2.xpose.msra.mxu0 0.0
  %2746 = vmatprep.subr.mxu0 0.0
  %2747 = vmatpush2.xpose.msra.mxu0 0.0
  %2748 = vmatprep.subr.mxu0 0.0
  %2749 = vmatpush2.xpose.msra.mxu0 0.0
  %2750 = vmatprep.subr.mxu0 0.0
  %2751 = vmatpush2.xpose.msra.mxu0 0.0
  %2752 = vmatprep.subr.mxu0 0.0
  %2753 = vmatpush2.xpose.msra.mxu0 0.0
  %2754 = vmatprep.subr.mxu0 0.0
  %2755 = vmatpush2.xpose.msra.mxu0 0.0
  %2756 = vmatprep.subr.mxu0 0.0
  %2757 = vmatpush2.xpose.msra.mxu0 0.0
  %2758 = vmatprep.subr.mxu0 0.0
  %2759 = vmatpush2.xpose.msra.mxu0 0.0
  %2760 = vmatprep.subr.mxu0 0.0
  %2761 = vmatpush2.xpose.msra.mxu0 0.0
  %2762 = vmatprep.subr.mxu0 0.0
  %2763 = vmatpush2.xpose.msra.mxu0 0.0
  %2764 = vmatprep.subr.mxu0 0.0
  %2765 = vmatpush2.xpose.msra.mxu0 0.0
  %2766 = vmatprep.subr.mxu0 0.0
  %2767 = vmatpush2.xpose.msra.mxu0 0.0
  %2768 = vmatprep.subr.mxu0 0.0
  %2769 = vmatpush2.xpose.msra.mxu0 0.0
  %2770 = vmatprep.mubr.f32.mxu0 0.0
  %2771 = vmatmul.mubr.f32.gmra.mxu0 %v2702
  %v2772 = vpop.f32.mrf.mxu0
  %v2773 = vadd.f32 0.0, %v2772
  %v2774 = vpop.f32.mrf.mxu0
  %2775 = vdwg.mxu0
  %2776 = vrot.lane.b32.xlu0 %v2037, 112
  %v2777 = vpop.permute.xlu0 %2776
  %2778 = vrot.lane.b32.xlu0 %v2033, 80
  %v2779 = vpop.permute.xlu0 %2778
  %v2780 = vsel %vm241, %v2777, 0
  %v2782 = vsel %vm241, %v2779, 0
  %2784 = vmatprep.subr.mxu0 0.0
  %2785 = vmatpush1.xpose.msra.mxu0 0.0
  %2786 = vmatprep.subr.mxu0 0.0
  %2787 = vmatpush1.xpose.msra.mxu0 0.0
  %2788 = vmatprep.subr.mxu0 0.0
  %2789 = vmatpush1.xpose.msra.mxu0 0.0
  %2790 = vmatprep.subr.mxu0 0.0
  %2791 = vmatpush1.xpose.msra.mxu0 0.0
  %2792 = vmatprep.subr.mxu0 0.0
  %2793 = vmatpush1.xpose.msra.mxu0 0.0
  %2794 = vmatprep.subr.mxu0 0.0
  %2795 = vmatpush1.xpose.msra.mxu0 0.0
  %2796 = vmatprep.subr.mxu0 0.0
  %2797 = vmatpush1.xpose.msra.mxu0 0.0
  %2798 = vmatprep.subr.mxu0 0.0
  %2799 = vmatpush1.xpose.msra.mxu0 0.0
  %2800 = vmatprep.subr.mxu0 0.0
  %2801 = vmatpush1.xpose.msra.mxu0 0.0
  %2802 = vmatprep.subr.mxu0 0.0
  %2803 = vmatpush1.xpose.msra.mxu0 0.0
  %2804 = vmatprep.subr.mxu0 0.0
  %2805 = vmatpush1.xpose.msra.mxu0 0.0
  %2806 = vmatprep.subr.mxu0 0.0
  %2807 = vmatpush1.xpose.msra.mxu0 0.0
  %2808 = vmatprep.subr.mxu0 0.0
  %2809 = vmatpush1.xpose.msra.mxu0 0.0
  %2810 = vmatprep.subr.mxu0 0.0
  %2811 = vmatpush1.xpose.msra.mxu0 0.0
  %2812 = vmatprep.subr.mxu0 0.0
  %2813 = vmatpush1.xpose.msra.mxu0 0.0
  %2814 = vmatprep.subr.mxu0 0.0
  %2815 = vmatpush1.xpose.msra.mxu0 %v2782
  %2816 = vmatprep.subr.mxu0 0.0
  %2817 = vmatpush2.xpose.msra.mxu0 0.0
  %2818 = vmatprep.subr.mxu0 0.0
  %2819 = vmatpush2.xpose.msra.mxu0 0.0
  %2820 = vmatprep.subr.mxu0 0.0
  %2821 = vmatpush2.xpose.msra.mxu0 0.0
  %2822 = vmatprep.subr.mxu0 0.0
  %2823 = vmatpush2.xpose.msra.mxu0 0.0
  %2824 = vmatprep.subr.mxu0 0.0
  %2825 = vmatpush2.xpose.msra.mxu0 0.0
  %2826 = vmatprep.subr.mxu0 0.0
  %2827 = vmatpush2.xpose.msra.mxu0 0.0
  %2828 = vmatprep.subr.mxu0 0.0
  %2829 = vmatpush2.xpose.msra.mxu0 0.0
  %2830 = vmatprep.subr.mxu0 0.0
  %2831 = vmatpush2.xpose.msra.mxu0 0.0
  %2832 = vmatprep.subr.mxu0 0.0
  %2833 = vmatpush2.xpose.msra.mxu0 0.0
  %2834 = vmatprep.subr.mxu0 0.0
  %2835 = vmatpush2.xpose.msra.mxu0 0.0
  %2836 = vmatprep.subr.mxu0 0.0
  %2837 = vmatpush2.xpose.msra.mxu0 0.0
  %2838 = vmatprep.subr.mxu0 0.0
  %2839 = vmatpush2.xpose.msra.mxu0 0.0
  %2840 = vmatprep.subr.mxu0 0.0
  %2841 = vmatpush2.xpose.msra.mxu0 0.0
  %2842 = vmatprep.subr.mxu0 0.0
  %2843 = vmatpush2.xpose.msra.mxu0 0.0
  %2844 = vmatprep.subr.mxu0 0.0
  %2845 = vmatpush2.xpose.msra.mxu0 0.0
  %2846 = vmatprep.subr.mxu0 0.0
  %2847 = vmatpush2.xpose.msra.mxu0 0.0
  %2848 = vmatprep.mubr.f32.mxu0 0.0
  %2849 = vmatmul.mubr.f32.gmra.mxu0 %v2780
  %v2850 = vpop.f32.mrf.mxu0
  %v2851 = vadd.f32 0.0, %v2850
  %v2852 = vpop.f32.mrf.mxu0
  %2853 = vdwg.mxu0
  %v2854 = vsel %vm241, %v2773, -inf
  %2855 = vmax.xlane.f32.xlu0 %v2854
  %v2856 = vpop.xlane.xlu0 %2855
  %v2857 = vsel %vm241, %v2851, -inf
  %2858 = vmax.xlane.f32.xlu0 %v2857
  %v2859 = vpop.xlane.xlu0 %2858
  %v2860 = vsub.f32 %v2773, %v2856
  %v2861 = vsub.f32 %v2851, %v2859
  %v2862 = vmul.f32 %v2860, 1.442695
  %v2863 = vpow.pop %v2862
  %v2864 = vmul.f32 %v2861, 1.442695
  %v2865 = vpow.pop %v2864
  %v2866 = vsel %vm241, %v2863, 0.0
  %2867 = vadd.xlane.f32.xlu0 %v2866
  %v2868 = vpop.xlane.xlu0 %2867
  %v2869 = vsel %vm241, %v2865, 0.0
  %2870 = vadd.xlane.f32.xlu0 %v2869
  %v2871 = vpop.xlane.xlu0 %2870
  %v2872 = vrcp.pop %v2868
  %v2873 = vmul.f32 %v2863, %v2872
  %v2874 = vrcp.pop %v2871
  %v2875 = vmul.f32 %v2865, %v2874
  %2876 = vrot.lane.b32.xlu0 %v2028, 48
  %v2877 = vpop.permute.xlu0 %2876
  %v2880 = vsel %vm241, %v2873, 0
  %2882 = vmatprep.subr.mxu0 0.0
  %2883 = vmatpush1.msra.mxu0 0.0
  %2884 = vmatprep.subr.mxu0 0.0
  %2885 = vmatpush1.msra.mxu0 0.0
  %2886 = vmatprep.subr.mxu0 0.0
  %2887 = vmatpush1.msra.mxu0 0.0
  %2888 = vmatprep.subr.mxu0 0.0
  %2889 = vmatpush1.msra.mxu0 0.0
  %2890 = vmatprep.subr.mxu0 0.0
  %2891 = vmatpush1.msra.mxu0 0.0
  %2892 = vmatprep.subr.mxu0 0.0
  %2893 = vmatpush1.msra.mxu0 0.0
  %2894 = vmatprep.subr.mxu0 0.0
  %2895 = vmatpush1.msra.mxu0 0.0
  %2896 = vmatprep.subr.mxu0 0.0
  %2897 = vmatpush1.msra.mxu0 0.0
  %2898 = vmatprep.subr.mxu0 0.0
  %2899 = vmatpush1.msra.mxu0 0.0
  %2900 = vmatprep.subr.mxu0 0.0
  %2901 = vmatpush1.msra.mxu0 0.0
  %2902 = vmatprep.subr.mxu0 0.0
  %2903 = vmatpush1.msra.mxu0 0.0
  %2904 = vmatprep.subr.mxu0 0.0
  %2905 = vmatpush1.msra.mxu0 0.0
  %2906 = vmatprep.subr.mxu0 0.0
  %2907 = vmatpush1.msra.mxu0 0.0
  %2908 = vmatprep.subr.mxu0 0.0
  %2909 = vmatpush1.msra.mxu0 0.0
  %2910 = vmatprep.subr.mxu0 0.0
  %2911 = vmatpush1.msra.mxu0 0.0
  %2912 = vmatprep.subr.mxu0 0.0
  %2913 = vmatpush1.msra.mxu0 %v2877
  %2914 = vmatprep.subr.mxu0 0.0
  %2915 = vmatpush2.msra.mxu0 0.0
  %2916 = vmatprep.subr.mxu0 0.0
  %2917 = vmatpush2.msra.mxu0 0.0
  %2918 = vmatprep.subr.mxu0 0.0
  %2919 = vmatpush2.msra.mxu0 0.0
  %2920 = vmatprep.subr.mxu0 0.0
  %2921 = vmatpush2.msra.mxu0 0.0
  %2922 = vmatprep.subr.mxu0 0.0
  %2923 = vmatpush2.msra.mxu0 0.0
  %2924 = vmatprep.subr.mxu0 0.0
  %2925 = vmatpush2.msra.mxu0 0.0
  %2926 = vmatprep.subr.mxu0 0.0
  %2927 = vmatpush2.msra.mxu0 0.0
  %2928 = vmatprep.subr.mxu0 0.0
  %2929 = vmatpush2.msra.mxu0 0.0
  %2930 = vmatprep.subr.mxu0 0.0
  %2931 = vmatpush2.msra.mxu0 0.0
  %2932 = vmatprep.subr.mxu0 0.0
  %2933 = vmatpush2.msra.mxu0 0.0
  %2934 = vmatprep.subr.mxu0 0.0
  %2935 = vmatpush2.msra.mxu0 0.0
  %2936 = vmatprep.subr.mxu0 0.0
  %2937 = vmatpush2.msra.mxu0 0.0
  %2938 = vmatprep.subr.mxu0 0.0
  %2939 = vmatpush2.msra.mxu0 0.0
  %2940 = vmatprep.subr.mxu0 0.0
  %2941 = vmatpush2.msra.mxu0 0.0
  %2942 = vmatprep.subr.mxu0 0.0
  %2943 = vmatpush2.msra.mxu0 0.0
  %2944 = vmatprep.subr.mxu0 0.0
  %2945 = vmatpush2.msra.mxu0 0.0
  %2946 = vmatprep.mubr.f32.mxu0 0.0
  %2947 = vmatmul.mubr.f32.gmra.mxu0 %v2880
  %v2948 = vpop.f32.mrf.mxu0
  %v2949 = vadd.f32 0.0, %v2948
  %v2950 = vpop.f32.mrf.mxu0
  %2951 = vdwg.mxu0
  %2952 = vrot.lane.b32.xlu0 %v2033, 48
  %v2953 = vpop.permute.xlu0 %2952
  %v2956 = vsel %vm241, %v2875, 0
  %2958 = vmatprep.subr.mxu0 0.0
  %2959 = vmatpush1.msra.mxu0 0.0
  %2960 = vmatprep.subr.mxu0 0.0
  %2961 = vmatpush1.msra.mxu0 0.0
  %2962 = vmatprep.subr.mxu0 0.0
  %2963 = vmatpush1.msra.mxu0 0.0
  %2964 = vmatprep.subr.mxu0 0.0
  %2965 = vmatpush1.msra.mxu0 0.0
  %2966 = vmatprep.subr.mxu0 0.0
  %2967 = vmatpush1.msra.mxu0 0.0
  %2968 = vmatprep.subr.mxu0 0.0
  %2969 = vmatpush1.msra.mxu0 0.0
  %2970 = vmatprep.subr.mxu0 0.0
  %2971 = vmatpush1.msra.mxu0 0.0
  %2972 = vmatprep.subr.mxu0 0.0
  %2973 = vmatpush1.msra.mxu0 0.0
  %2974 = vmatprep.subr.mxu0 0.0
  %2975 = vmatpush1.msra.mxu0 0.0
  %2976 = vmatprep.subr.mxu0 0.0
  %2977 = vmatpush1.msra.mxu0 0.0
  %2978 = vmatprep.subr.mxu0 0.0
  %2979 = vmatpush1.msra.mxu0 0.0
  %2980 = vmatprep.subr.mxu0 0.0
  %2981 = vmatpush1.msra.mxu0 0.0
  %2982 = vmatprep.subr.mxu0 0.0
  %2983 = vmatpush1.msra.mxu0 0.0
  %2984 = vmatprep.subr.mxu0 0.0
  %2985 = vmatpush1.msra.mxu0 0.0
  %2986 = vmatprep.subr.mxu0 0.0
  %2987 = vmatpush1.msra.mxu0 0.0
  %2988 = vmatprep.subr.mxu0 0.0
  %2989 = vmatpush1.msra.mxu0 %v2953
  %2990 = vmatprep.subr.mxu0 0.0
  %2991 = vmatpush2.msra.mxu0 0.0
  %2992 = vmatprep.subr.mxu0 0.0
  %2993 = vmatpush2.msra.mxu0 0.0
  %2994 = vmatprep.subr.mxu0 0.0
  %2995 = vmatpush2.msra.mxu0 0.0
  %2996 = vmatprep.subr.mxu0 0.0
  %2997 = vmatpush2.msra.mxu0 0.0
  %2998 = vmatprep.subr.mxu0 0.0
  %2999 = vmatpush2.msra.mxu0 0.0
  %3000 = vmatprep.subr.mxu0 0.0
  %3001 = vmatpush2.msra.mxu0 0.0
  %3002 = vmatprep.subr.mxu0 0.0
  %3003 = vmatpush2.msra.mxu0 0.0
  %3004 = vmatprep.subr.mxu0 0.0
  %3005 = vmatpush2.msra.mxu0 0.0
  %3006 = vmatprep.subr.mxu0 0.0
  %3007 = vmatpush2.msra.mxu0 0.0
  %3008 = vmatprep.subr.mxu0 0.0
  %3009 = vmatpush2.msra.mxu0 0.0
  %3010 = vmatprep.subr.mxu0 0.0
  %3011 = vmatpush2.msra.mxu0 0.0
  %3012 = vmatprep.subr.mxu0 0.0
  %3013 = vmatpush2.msra.mxu0 0.0
  %3014 = vmatprep.subr.mxu0 0.0
  %3015 = vmatpush2.msra.mxu0 0.0
  %3016 = vmatprep.subr.mxu0 0.0
  %3017 = vmatpush2.msra.mxu0 0.0
  %3018 = vmatprep.subr.mxu0 0.0
  %3019 = vmatpush2.msra.mxu0 0.0
  %3020 = vmatprep.subr.mxu0 0.0
  %3021 = vmatpush2.msra.mxu0 0.0
  %3022 = vmatprep.mubr.f32.mxu0 0.0
  %3023 = vmatmul.mubr.f32.gmra.mxu0 %v2956
  %v3024 = vpop.f32.mrf.mxu0
  %v3025 = vadd.f32 0.0, %v3024
  %v3026 = vpop.f32.mrf.mxu0
  %3027 = vdwg.mxu0
  %3028 = vrot.lane.b32.xlu0 %v2036, 104
  %v3029 = vpop.permute.xlu0 %3028
  %3030 = vrot.lane.b32.xlu0 %v2028, 72
  %v3031 = vpop.permute.xlu0 %3030
  %v3032 = vsel %vm241, %v3029, 0
  %v3034 = vsel %vm241, %v3031, 0
  %3036 = vmatprep.subr.mxu0 0.0
  %3037 = vmatpush1.xpose.msra.mxu0 0.0
  %3038 = vmatprep.subr.mxu0 0.0
  %3039 = vmatpush1.xpose.msra.mxu0 0.0
  %3040 = vmatprep.subr.mxu0 0.0
  %3041 = vmatpush1.xpose.msra.mxu0 0.0
  %3042 = vmatprep.subr.mxu0 0.0
  %3043 = vmatpush1.xpose.msra.mxu0 0.0
  %3044 = vmatprep.subr.mxu0 0.0
  %3045 = vmatpush1.xpose.msra.mxu0 0.0
  %3046 = vmatprep.subr.mxu0 0.0
  %3047 = vmatpush1.xpose.msra.mxu0 0.0
  %3048 = vmatprep.subr.mxu0 0.0
  %3049 = vmatpush1.xpose.msra.mxu0 0.0
  %3050 = vmatprep.subr.mxu0 0.0
  %3051 = vmatpush1.xpose.msra.mxu0 0.0
  %3052 = vmatprep.subr.mxu0 0.0
  %3053 = vmatpush1.xpose.msra.mxu0 0.0
  %3054 = vmatprep.subr.mxu0 0.0
  %3055 = vmatpush1.xpose.msra.mxu0 0.0
  %3056 = vmatprep.subr.mxu0 0.0
  %3057 = vmatpush1.xpose.msra.mxu0 0.0
  %3058 = vmatprep.subr.mxu0 0.0
  %3059 = vmatpush1.xpose.msra.mxu0 0.0
  %3060 = vmatprep.subr.mxu0 0.0
  %3061 = vmatpush1.xpose.msra.mxu0 0.0
  %3062 = vmatprep.subr.mxu0 0.0
  %3063 = vmatpush1.xpose.msra.mxu0 0.0
  %3064 = vmatprep.subr.mxu0 0.0
  %3065 = vmatpush1.xpose.msra.mxu0 0.0
  %3066 = vmatprep.subr.mxu0 0.0
  %3067 = vmatpush1.xpose.msra.mxu0 %v3034
  %3068 = vmatprep.subr.mxu0 0.0
  %3069 = vmatpush2.xpose.msra.mxu0 0.0
  %3070 = vmatprep.subr.mxu0 0.0
  %3071 = vmatpush2.xpose.msra.mxu0 0.0
  %3072 = vmatprep.subr.mxu0 0.0
  %3073 = vmatpush2.xpose.msra.mxu0 0.0
  %3074 = vmatprep.subr.mxu0 0.0
  %3075 = vmatpush2.xpose.msra.mxu0 0.0
  %3076 = vmatprep.subr.mxu0 0.0
  %3077 = vmatpush2.xpose.msra.mxu0 0.0
  %3078 = vmatprep.subr.mxu0 0.0
  %3079 = vmatpush2.xpose.msra.mxu0 0.0
  %3080 = vmatprep.subr.mxu0 0.0
  %3081 = vmatpush2.xpose.msra.mxu0 0.0
  %3082 = vmatprep.subr.mxu0 0.0
  %3083 = vmatpush2.xpose.msra.mxu0 0.0
  %3084 = vmatprep.subr.mxu0 0.0
  %3085 = vmatpush2.xpose.msra.mxu0 0.0
  %3086 = vmatprep.subr.mxu0 0.0
  %3087 = vmatpush2.xpose.msra.mxu0 0.0
  %3088 = vmatprep.subr.mxu0 0.0
  %3089 = vmatpush2.xpose.msra.mxu0 0.0
  %3090 = vmatprep.subr.mxu0 0.0
  %3091 = vmatpush2.xpose.msra.mxu0 0.0
  %3092 = vmatprep.subr.mxu0 0.0
  %3093 = vmatpush2.xpose.msra.mxu0 0.0
  %3094 = vmatprep.subr.mxu0 0.0
  %3095 = vmatpush2.xpose.msra.mxu0 0.0
  %3096 = vmatprep.subr.mxu0 0.0
  %3097 = vmatpush2.xpose.msra.mxu0 0.0
  %3098 = vmatprep.subr.mxu0 0.0
  %3099 = vmatpush2.xpose.msra.mxu0 0.0
  %3100 = vmatprep.mubr.f32.mxu0 0.0
  %3101 = vmatmul.mubr.f32.gmra.mxu0 %v3032
  %v3102 = vpop.f32.mrf.mxu0
  %v3103 = vadd.f32 0.0, %v3102
  %v3104 = vpop.f32.mrf.mxu0
  %3105 = vdwg.mxu0
  %3106 = vrot.lane.b32.xlu0 %v2037, 104
  %v3107 = vpop.permute.xlu0 %3106
  %3108 = vrot.lane.b32.xlu0 %v2033, 72
  %v3109 = vpop.permute.xlu0 %3108
  %v3110 = vsel %vm241, %v3107, 0
  %v3112 = vsel %vm241, %v3109, 0
  %3114 = vmatprep.subr.mxu0 0.0
  %3115 = vmatpush1.xpose.msra.mxu0 0.0
  %3116 = vmatprep.subr.mxu0 0.0
  %3117 = vmatpush1.xpose.msra.mxu0 0.0
  %3118 = vmatprep.subr.mxu0 0.0
  %3119 = vmatpush1.xpose.msra.mxu0 0.0
  %3120 = vmatprep.subr.mxu0 0.0
  %3121 = vmatpush1.xpose.msra.mxu0 0.0
  %3122 = vmatprep.subr.mxu0 0.0
  %3123 = vmatpush1.xpose.msra.mxu0 0.0
  %3124 = vmatprep.subr.mxu0 0.0
  %3125 = vmatpush1.xpose.msra.mxu0 0.0
  %3126 = vmatprep.subr.mxu0 0.0
  %3127 = vmatpush1.xpose.msra.mxu0 0.0
  %3128 = vmatprep.subr.mxu0 0.0
  %3129 = vmatpush1.xpose.msra.mxu0 0.0
  %3130 = vmatprep.subr.mxu0 0.0
  %3131 = vmatpush1.xpose.msra.mxu0 0.0
  %3132 = vmatprep.subr.mxu0 0.0
  %3133 = vmatpush1.xpose.msra.mxu0 0.0
  %3134 = vmatprep.subr.mxu0 0.0
  %3135 = vmatpush1.xpose.msra.mxu0 0.0
  %3136 = vmatprep.subr.mxu0 0.0
  %3137 = vmatpush1.xpose.msra.mxu0 0.0
  %3138 = vmatprep.subr.mxu0 0.0
  %3139 = vmatpush1.xpose.msra.mxu0 0.0
  %3140 = vmatprep.subr.mxu0 0.0
  %3141 = vmatpush1.xpose.msra.mxu0 0.0
  %3142 = vmatprep.subr.mxu0 0.0
  %3143 = vmatpush1.xpose.msra.mxu0 0.0
  %3144 = vmatprep.subr.mxu0 0.0
  %3145 = vmatpush1.xpose.msra.mxu0 %v3112
  %3146 = vmatprep.subr.mxu0 0.0
  %3147 = vmatpush2.xpose.msra.mxu0 0.0
  %3148 = vmatprep.subr.mxu0 0.0
  %3149 = vmatpush2.xpose.msra.mxu0 0.0
  %3150 = vmatprep.subr.mxu0 0.0
  %3151 = vmatpush2.xpose.msra.mxu0 0.0
  %3152 = vmatprep.subr.mxu0 0.0
  %3153 = vmatpush2.xpose.msra.mxu0 0.0
  %3154 = vmatprep.subr.mxu0 0.0
  %3155 = vmatpush2.xpose.msra.mxu0 0.0
  %3156 = vmatprep.subr.mxu0 0.0
  %3157 = vmatpush2.xpose.msra.mxu0 0.0
  %3158 = vmatprep.subr.mxu0 0.0
  %3159 = vmatpush2.xpose.msra.mxu0 0.0
  %3160 = vmatprep.subr.mxu0 0.0
  %3161 = vmatpush2.xpose.msra.mxu0 0.0
  %3162 = vmatprep.subr.mxu0 0.0
  %3163 = vmatpush2.xpose.msra.mxu0 0.0
  %3164 = vmatprep.subr.mxu0 0.0
  %3165 = vmatpush2.xpose.msra.mxu0 0.0
  %3166 = vmatprep.subr.mxu0 0.0
  %3167 = vmatpush2.xpose.msra.mxu0 0.0
  %3168 = vmatprep.subr.mxu0 0.0
  %3169 = vmatpush2.xpose.msra.mxu0 0.0
  %3170 = vmatprep.subr.mxu0 0.0
  %3171 = vmatpush2.xpose.msra.mxu0 0.0
  %3172 = vmatprep.subr.mxu0 0.0
  %3173 = vmatpush2.xpose.msra.mxu0 0.0
  %3174 = vmatprep.subr.mxu0 0.0
  %3175 = vmatpush2.xpose.msra.mxu0 0.0
  %3176 = vmatprep.subr.mxu0 0.0
  %3177 = vmatpush2.xpose.msra.mxu0 0.0
  %3178 = vmatprep.mubr.f32.mxu0 0.0
  %3179 = vmatmul.mubr.f32.gmra.mxu0 %v3110
  %v3180 = vpop.f32.mrf.mxu0
  %v3181 = vadd.f32 0.0, %v3180
  %v3182 = vpop.f32.mrf.mxu0
  %3183 = vdwg.mxu0
  %v3184 = vsel %vm241, %v3103, -inf
  %3185 = vmax.xlane.f32.xlu0 %v3184
  %v3186 = vpop.xlane.xlu0 %3185
  %v3187 = vsel %vm241, %v3181, -inf
  %3188 = vmax.xlane.f32.xlu0 %v3187
  %v3189 = vpop.xlane.xlu0 %3188
  %v3190 = vsub.f32 %v3103, %v3186
  %v3191 = vsub.f32 %v3181, %v3189
  %v3192 = vmul.f32 %v3190, 1.442695
  %v3193 = vpow.pop %v3192
  %v3194 = vmul.f32 %v3191, 1.442695
  %v3195 = vpow.pop %v3194
  %v3196 = vsel %vm241, %v3193, 0.0
  %3197 = vadd.xlane.f32.xlu0 %v3196
  %v3198 = vpop.xlane.xlu0 %3197
  %v3199 = vsel %vm241, %v3195, 0.0
  %3200 = vadd.xlane.f32.xlu0 %v3199
  %v3201 = vpop.xlane.xlu0 %3200
  %v3202 = vrcp.pop %v3198
  %v3203 = vmul.f32 %v3193, %v3202
  %v3204 = vrcp.pop %v3201
  %v3205 = vmul.f32 %v3195, %v3204
  %3206 = vrot.lane.b32.xlu0 %v2028, 40
  %v3207 = vpop.permute.xlu0 %3206
  %v3210 = vsel %vm241, %v3203, 0
  %3212 = vmatprep.subr.mxu0 0.0
  %3213 = vmatpush1.msra.mxu0 0.0
  %3214 = vmatprep.subr.mxu0 0.0
  %3215 = vmatpush1.msra.mxu0 0.0
  %3216 = vmatprep.subr.mxu0 0.0
  %3217 = vmatpush1.msra.mxu0 0.0
  %3218 = vmatprep.subr.mxu0 0.0
  %3219 = vmatpush1.msra.mxu0 0.0
  %3220 = vmatprep.subr.mxu0 0.0
  %3221 = vmatpush1.msra.mxu0 0.0
  %3222 = vmatprep.subr.mxu0 0.0
  %3223 = vmatpush1.msra.mxu0 0.0
  %3224 = vmatprep.subr.mxu0 0.0
  %3225 = vmatpush1.msra.mxu0 0.0
  %3226 = vmatprep.subr.mxu0 0.0
  %3227 = vmatpush1.msra.mxu0 0.0
  %3228 = vmatprep.subr.mxu0 0.0
  %3229 = vmatpush1.msra.mxu0 0.0
  %3230 = vmatprep.subr.mxu0 0.0
  %3231 = vmatpush1.msra.mxu0 0.0
  %3232 = vmatprep.subr.mxu0 0.0
  %3233 = vmatpush1.msra.mxu0 0.0
  %3234 = vmatprep.subr.mxu0 0.0
  %3235 = vmatpush1.msra.mxu0 0.0
  %3236 = vmatprep.subr.mxu0 0.0
  %3237 = vmatpush1.msra.mxu0 0.0
  %3238 = vmatprep.subr.mxu0 0.0
  %3239 = vmatpush1.msra.mxu0 0.0
  %3240 = vmatprep.subr.mxu0 0.0
  %3241 = vmatpush1.msra.mxu0 0.0
  %3242 = vmatprep.subr.mxu0 0.0
  %3243 = vmatpush1.msra.mxu0 %v3207
  %3244 = vmatprep.subr.mxu0 0.0
  %3245 = vmatpush2.msra.mxu0 0.0
  %3246 = vmatprep.subr.mxu0 0.0
  %3247 = vmatpush2.msra.mxu0 0.0
  %3248 = vmatprep.subr.mxu0 0.0
  %3249 = vmatpush2.msra.mxu0 0.0
  %3250 = vmatprep.subr.mxu0 0.0
  %3251 = vmatpush2.msra.mxu0 0.0
  %3252 = vmatprep.subr.mxu0 0.0
  %3253 = vmatpush2.msra.mxu0 0.0
  %3254 = vmatprep.subr.mxu0 0.0
  %3255 = vmatpush2.msra.mxu0 0.0
  %3256 = vmatprep.subr.mxu0 0.0
  %3257 = vmatpush2.msra.mxu0 0.0
  %3258 = vmatprep.subr.mxu0 0.0
  %3259 = vmatpush2.msra.mxu0 0.0
  %3260 = vmatprep.subr.mxu0 0.0
  %3261 = vmatpush2.msra.mxu0 0.0
  %3262 = vmatprep.subr.mxu0 0.0
  %3263 = vmatpush2.msra.mxu0 0.0
  %3264 = vmatprep.subr.mxu0 0.0
  %3265 = vmatpush2.msra.mxu0 0.0
  %3266 = vmatprep.subr.mxu0 0.0
  %3267 = vmatpush2.msra.mxu0 0.0
  %3268 = vmatprep.subr.mxu0 0.0
  %3269 = vmatpush2.msra.mxu0 0.0
  %3270 = vmatprep.subr.mxu0 0.0
  %3271 = vmatpush2.msra.mxu0 0.0
  %3272 = vmatprep.subr.mxu0 0.0
  %3273 = vmatpush2.msra.mxu0 0.0
  %3274 = vmatprep.subr.mxu0 0.0
  %3275 = vmatpush2.msra.mxu0 0.0
  %3276 = vmatprep.mubr.f32.mxu0 0.0
  %3277 = vmatmul.mubr.f32.gmra.mxu0 %v3210
  %v3278 = vpop.f32.mrf.mxu0
  %v3279 = vadd.f32 0.0, %v3278
  %v3280 = vpop.f32.mrf.mxu0
  %3281 = vdwg.mxu0
  %3282 = vrot.lane.b32.xlu0 %v2033, 40
  %v3283 = vpop.permute.xlu0 %3282
  %v3286 = vsel %vm241, %v3205, 0
  %3288 = vmatprep.subr.mxu0 0.0
  %3289 = vmatpush1.msra.mxu0 0.0
  %3290 = vmatprep.subr.mxu0 0.0
  %3291 = vmatpush1.msra.mxu0 0.0
  %3292 = vmatprep.subr.mxu0 0.0
  %3293 = vmatpush1.msra.mxu0 0.0
  %3294 = vmatprep.subr.mxu0 0.0
  %3295 = vmatpush1.msra.mxu0 0.0
  %3296 = vmatprep.subr.mxu0 0.0
  %3297 = vmatpush1.msra.mxu0 0.0
  %3298 = vmatprep.subr.mxu0 0.0
  %3299 = vmatpush1.msra.mxu0 0.0
  %3300 = vmatprep.subr.mxu0 0.0
  %3301 = vmatpush1.msra.mxu0 0.0
  %3302 = vmatprep.subr.mxu0 0.0
  %3303 = vmatpush1.msra.mxu0 0.0
  %3304 = vmatprep.subr.mxu0 0.0
  %3305 = vmatpush1.msra.mxu0 0.0
  %3306 = vmatprep.subr.mxu0 0.0
  %3307 = vmatpush1.msra.mxu0 0.0
  %3308 = vmatprep.subr.mxu0 0.0
  %3309 = vmatpush1.msra.mxu0 0.0
  %3310 = vmatprep.subr.mxu0 0.0
  %3311 = vmatpush1.msra.mxu0 0.0
  %3312 = vmatprep.subr.mxu0 0.0
  %3313 = vmatpush1.msra.mxu0 0.0
  %3314 = vmatprep.subr.mxu0 0.0
  %3315 = vmatpush1.msra.mxu0 0.0
  %3316 = vmatprep.subr.mxu0 0.0
  %3317 = vmatpush1.msra.mxu0 0.0
  %3318 = vmatprep.subr.mxu0 0.0
  %3319 = vmatpush1.msra.mxu0 %v3283
  %3320 = vmatprep.subr.mxu0 0.0
  %3321 = vmatpush2.msra.mxu0 0.0
  %3322 = vmatprep.subr.mxu0 0.0
  %3323 = vmatpush2.msra.mxu0 0.0
  %3324 = vmatprep.subr.mxu0 0.0
  %3325 = vmatpush2.msra.mxu0 0.0
  %3326 = vmatprep.subr.mxu0 0.0
  %3327 = vmatpush2.msra.mxu0 0.0
  %3328 = vmatprep.subr.mxu0 0.0
  %3329 = vmatpush2.msra.mxu0 0.0
  %3330 = vmatprep.subr.mxu0 0.0
  %3331 = vmatpush2.msra.mxu0 0.0
  %3332 = vmatprep.subr.mxu0 0.0
  %3333 = vmatpush2.msra.mxu0 0.0
  %3334 = vmatprep.subr.mxu0 0.0
  %3335 = vmatpush2.msra.mxu0 0.0
  %3336 = vmatprep.subr.mxu0 0.0
  %3337 = vmatpush2.msra.mxu0 0.0
  %3338 = vmatprep.subr.mxu0 0.0
  %3339 = vmatpush2.msra.mxu0 0.0
  %3340 = vmatprep.subr.mxu0 0.0
  %3341 = vmatpush2.msra.mxu0 0.0
  %3342 = vmatprep.subr.mxu0 0.0
  %3343 = vmatpush2.msra.mxu0 0.0
  %3344 = vmatprep.subr.mxu0 0.0
  %3345 = vmatpush2.msra.mxu0 0.0
  %3346 = vmatprep.subr.mxu0 0.0
  %3347 = vmatpush2.msra.mxu0 0.0
  %3348 = vmatprep.subr.mxu0 0.0
  %3349 = vmatpush2.msra.mxu0 0.0
  %3350 = vmatprep.subr.mxu0 0.0
  %3351 = vmatpush2.msra.mxu0 0.0
  %3352 = vmatprep.mubr.f32.mxu0 0.0
  %3353 = vmatmul.mubr.f32.gmra.mxu0 %v3286
  %v3354 = vpop.f32.mrf.mxu0
  %v3355 = vadd.f32 0.0, %v3354
  %v3356 = vpop.f32.mrf.mxu0
  %3357 = vdwg.mxu0
  %3360 = vrot.lane.b32.xlu0 %v2619, 8
  %v3361 = vpop.permute.xlu0 %3360
  %3362 = vrot.lane.b32.xlu0 %v2695, 8
  %v3363 = vpop.permute.xlu0 %3362
  %3368 = vrot.lane.b32.xlu0 %v2949, 16
  %v3369 = vpop.permute.xlu0 %3368
  %3370 = vrot.lane.b32.xlu0 %v3025, 16
  %v3371 = vpop.permute.xlu0 %3370
  %3376 = vrot.lane.b32.xlu0 %v3279, 24
  %v3377 = vpop.permute.xlu0 %3376
  %3378 = vrot.lane.b32.xlu0 %v3355, 24
  %v3379 = vpop.permute.xlu0 %3378
  %v3382 = vsel %vm241, %v2289, %v3361
  %v3383 = vsel %vm241, %v2365, %v3363
  %v3384 = vsel %vm1585, %v3382, %v3369
  %v3385 = vsel %vm1585, %v3383, %v3371
  %v3386 = vsel %vm1588, %v3384, %v3377
  %v3387 = vsel %vm1588, %v3385, %v3379
  %v3388 = vlaneseq
  %v3389 = vshrl.u32 %v3388, 7
  %v3390 = vsub.s32 1, %v3389
  %v3391 = vrot.slane %v1950, %v3390
  %v3393 = vsel %vm154, %v3386, 0
  %v3396 = vsel %vm154, %v3387, 0
  %3398 = vmatprep.subr.mxu0 0.0
  %3399 = vmatpush1.msra.mxu0 0.0
  %3400 = vmatprep.subr.mxu0 0.0
  %3401 = vmatpush1.msra.mxu0 0.0
  %3402 = vmatprep.subr.mxu0 0.0
  %3403 = vmatpush1.msra.mxu0 0.0
  %3404 = vmatprep.subr.mxu0 0.0
  %3405 = vmatpush1.msra.mxu0 0.0
  %3406 = vmatprep.subr.mxu0 0.0
  %3407 = vmatpush1.msra.mxu0 0.0
  %3408 = vmatprep.subr.mxu0 0.0
  %3409 = vmatpush1.msra.mxu0 0.0
  %3410 = vmatprep.subr.mxu0 0.0
  %3411 = vmatpush1.msra.mxu0 0.0
  %3412 = vmatprep.subr.mxu0 0.0
  %3413 = vmatpush1.msra.mxu0 0.0
  %3414 = vmatprep.subr.mxu0 0.0
  %3415 = vmatpush1.msra.mxu0 0.0
  %3416 = vmatprep.subr.mxu0 0.0
  %3417 = vmatpush1.msra.mxu0 0.0
  %3418 = vmatprep.subr.mxu0 0.0
  %3419 = vmatpush1.msra.mxu0 0.0
  %3420 = vmatprep.subr.mxu0 0.0
  %3421 = vmatpush1.msra.mxu0 0.0
  %3422 = vmatprep.subr.mxu0 0.0
  %3423 = vmatpush1.msra.mxu0 %v1937
  %3424 = vmatprep.subr.mxu0 0.0
  %3425 = vmatpush1.msra.mxu0 %v1936
  %3426 = vmatprep.subr.mxu0 0.0
  %3427 = vmatpush1.msra.mxu0 %v1935
  %3428 = vmatprep.subr.mxu0 0.0
  %3429 = vmatpush1.msra.mxu0 %v1934
  %3430 = vmatprep.subr.mxu0 0.0
  %3431 = vmatpush2.msra.mxu0 0.0
  %3432 = vmatprep.subr.mxu0 0.0
  %3433 = vmatpush2.msra.mxu0 0.0
  %3434 = vmatprep.subr.mxu0 0.0
  %3435 = vmatpush2.msra.mxu0 0.0
  %3436 = vmatprep.subr.mxu0 0.0
  %3437 = vmatpush2.msra.mxu0 0.0
  %3438 = vmatprep.subr.mxu0 0.0
  %3439 = vmatpush2.msra.mxu0 0.0
  %3440 = vmatprep.subr.mxu0 0.0
  %3441 = vmatpush2.msra.mxu0 0.0
  %3442 = vmatprep.subr.mxu0 0.0
  %3443 = vmatpush2.msra.mxu0 0.0
  %3444 = vmatprep.subr.mxu0 0.0
  %3445 = vmatpush2.msra.mxu0 0.0
  %3446 = vmatprep.subr.mxu0 0.0
  %3447 = vmatpush2.msra.mxu0 0.0
  %3448 = vmatprep.subr.mxu0 0.0
  %3449 = vmatpush2.msra.mxu0 0.0
  %3450 = vmatprep.subr.mxu0 0.0
  %3451 = vmatpush2.msra.mxu0 0.0
  %3452 = vmatprep.subr.mxu0 0.0
  %3453 = vmatpush2.msra.mxu0 0.0
  %3454 = vmatprep.subr.mxu0 0.0
  %3455 = vmatpush2.msra.mxu0 0.0
  %3456 = vmatprep.subr.mxu0 0.0
  %3457 = vmatpush2.msra.mxu0 0.0
  %3458 = vmatprep.subr.mxu0 0.0
  %3459 = vmatpush2.msra.mxu0 0.0
  %3460 = vmatprep.subr.mxu0 0.0
  %3461 = vmatpush2.msra.mxu0 0.0
  %3462 = vmatprep.mubr.f32.mxu0 0.0
  %3463 = vmatmul.mubr.f32.gmra.mxu0 %v3393
  %v3464 = vpop.f32.mrf.mxu0
  %v3465 = vadd.f32 %v3391, %v3464
  %v3466 = vpop.f32.mrf.mxu0
  %3467 = vmatprep.mubr.f32.mxu0 0.0
  %3468 = vmatmul.mubr.f32.gmra.mxu0 %v3396
  %v3469 = vpop.f32.mrf.mxu0
  %v3470 = vadd.f32 %v3391, %v3469
  %v3471 = vpop.f32.mrf.mxu0
  %3472 = vdwg.mxu0
  %v3473 = vadd.f32 %v1928, %v3465
  %v3474 = vadd.f32 %v1929, %v3470
  %v3475 = vsel %vm154, %v3473, 0.0
  %3476 = vadd.xlane.f32.xlu0 %v3475
  %v3477 = vpop.xlane.xlu0 %3476
  %v3478 = vsel %vm154, %v3474, 0.0
  %3479 = vadd.xlane.f32.xlu0 %v3478
  %v3480 = vpop.xlane.xlu0 %3479
  %v3481 = vmul.f32 %v3477, %v1684
  %v3482 = vmul.f32 %v3480, %v1684
  %v3483 = vsub.f32 %v3473, %v3481
  %v3484 = vsub.f32 %v3474, %v3482
  %v3485 = vmul.f32 %v3483, %v3483
  %v3486 = vmul.f32 %v3484, %v3484
  %v3487 = vsel %vm154, %v3485, 0.0
  %3488 = vadd.xlane.f32.xlu0 %v3487
  %v3489 = vpop.xlane.xlu0 %3488
  %v3490 = vsel %vm154, %v3486, 0.0
  %3491 = vadd.xlane.f32.xlu0 %v3490
  %v3492 = vpop.xlane.xlu0 %3491
  %v3493 = vmul.f32 %v3489, %v1684
  %v3494 = vmul.f32 %v3492, %v1684
  %v3495 = vadd.f32 %v3493, 1e-05
  %v3496 = vadd.f32 %v3494, 1e-05
  %v3497 = vrsqrt.pop %v3495
  %v3498 = vrsqrt.pop %v3496
  %v3499 = vmul.f32 %v3483, %v3497
  %v3500 = vmul.f32 %v3484, %v3498
  %v3501 = vlaneseq
  %v3502 = vshrl.u32 %v3501, 7
  %v3503 = vsub.s32 4, %v3502
  %v3504 = vrot.slane %v1950, %v3503
  %v3505 = vmul.f32 %v3499, %v3504
  %v3506 = vmul.f32 %v3500, %v3504
  %v3507 = vlaneseq
  %v3508 = vshrl.u32 %v3507, 7
  %v3509 = vsub.s32 5, %v3508
  %v3510 = vrot.slane %v1950, %v3509
  %v3511 = vadd.f32 %v3505, %v3510
  %v3512 = vadd.f32 %v3506, %v3510
  %v3513 = vlaneseq
  %v3514 = vshrl.u32 %v3513, 7
  %v3515 = vsub.s32 2, %v3514
  %v3516 = vrot.slane %v1950, %v3515
  %v3518 = vsel %vm154, %v3511, 0
  %v3521 = vsel %vm154, %v3512, 0
  %3523 = vmatprep.subr.mxu0 0.0
  %3524 = vmatpush1.msra.mxu0 0.0
  %3525 = vmatprep.subr.mxu0 0.0
  %3526 = vmatpush1.msra.mxu0 0.0
  %3527 = vmatprep.subr.mxu0 0.0
  %3528 = vmatpush1.msra.mxu0 0.0
  %3529 = vmatprep.subr.mxu0 0.0
  %3530 = vmatpush1.msra.mxu0 0.0
  %3531 = vmatprep.subr.mxu0 0.0
  %3532 = vmatpush1.msra.mxu0 0.0
  %3533 = vmatprep.subr.mxu0 0.0
  %3534 = vmatpush1.msra.mxu0 0.0
  %3535 = vmatprep.subr.mxu0 0.0
  %3536 = vmatpush1.msra.mxu0 0.0
  %3537 = vmatprep.subr.mxu0 0.0
  %3538 = vmatpush1.msra.mxu0 0.0
  %3539 = vmatprep.subr.mxu0 0.0
  %3540 = vmatpush1.msra.mxu0 0.0
  %3541 = vmatprep.subr.mxu0 0.0
  %3542 = vmatpush1.msra.mxu0 0.0
  %3543 = vmatprep.subr.mxu0 0.0
  %3544 = vmatpush1.msra.mxu0 0.0
  %3545 = vmatprep.subr.mxu0 0.0
  %3546 = vmatpush1.msra.mxu0 0.0
  %3547 = vmatprep.subr.mxu0 0.0
  %3548 = vmatpush1.msra.mxu0 %v1941
  %3549 = vmatprep.subr.mxu0 0.0
  %3550 = vmatpush1.msra.mxu0 %v1940
  %3551 = vmatprep.subr.mxu0 0.0
  %3552 = vmatpush1.msra.mxu0 %v1939
  %3553 = vmatprep.subr.mxu0 0.0
  %3554 = vmatpush1.msra.mxu0 %v1938
  %3555 = vmatprep.subr.mxu0 0.0
  %3556 = vmatpush2.msra.mxu0 0.0
  %3557 = vmatprep.subr.mxu0 0.0
  %3558 = vmatpush2.msra.mxu0 0.0
  %3559 = vmatprep.subr.mxu0 0.0
  %3560 = vmatpush2.msra.mxu0 0.0
  %3561 = vmatprep.subr.mxu0 0.0
  %3562 = vmatpush2.msra.mxu0 0.0
  %3563 = vmatprep.subr.mxu0 0.0
  %3564 = vmatpush2.msra.mxu0 0.0
  %3565 = vmatprep.subr.mxu0 0.0
  %3566 = vmatpush2.msra.mxu0 0.0
  %3567 = vmatprep.subr.mxu0 0.0
  %3568 = vmatpush2.msra.mxu0 0.0
  %3569 = vmatprep.subr.mxu0 0.0
  %3570 = vmatpush2.msra.mxu0 0.0
  %3571 = vmatprep.subr.mxu0 0.0
  %3572 = vmatpush2.msra.mxu0 0.0
  %3573 = vmatprep.subr.mxu0 0.0
  %3574 = vmatpush2.msra.mxu0 0.0
  %3575 = vmatprep.subr.mxu0 0.0
  %3576 = vmatpush2.msra.mxu0 0.0
  %3577 = vmatprep.subr.mxu0 0.0
  %3578 = vmatpush2.msra.mxu0 0.0
  %3579 = vmatprep.subr.mxu0 0.0
  %3580 = vmatpush2.msra.mxu0 0.0
  %3581 = vmatprep.subr.mxu0 0.0
  %3582 = vmatpush2.msra.mxu0 0.0
  %3583 = vmatprep.subr.mxu0 0.0
  %3584 = vmatpush2.msra.mxu0 0.0
  %3585 = vmatprep.subr.mxu0 0.0
  %3586 = vmatpush2.msra.mxu0 0.0
  %3587 = vmatprep.mubr.f32.mxu0 0.0
  %3588 = vmatmul.mubr.f32.gmra.mxu0 %v3518
  %v3589 = vpop.f32.mrf.mxu0
  %v3590 = vadd.f32 %v3516, %v3589
  %v3591 = vpop.f32.mrf.mxu0
  %3592 = vmatprep.mubr.f32.mxu0 0.0
  %3593 = vmatmul.mubr.f32.gmra.mxu0 %v3521
  %v3594 = vpop.f32.mrf.mxu0
  %v3595 = vadd.f32 %v3516, %v3594
  %v3596 = vpop.f32.mrf.mxu0
  %3597 = vdwg.mxu0
  %v3598 = vmax.f32 %v3590, 0.0
  %v3599 = vmax.f32 %v3595, 0.0
  %v3600 = vlaneseq
  %v3601 = vshrl.u32 %v3600, 7
  %v3602 = vsub.s32 3, %v3601
  %v3603 = vrot.slane %v1950, %v3602
  %v3605 = vsel %vm1808, %v3598, 0
  %v3608 = vsel %vm1808, %v3599, 0
  %3610 = vmatprep.subr.mxu0 0.0
  %3611 = vmatpush1.msra.mxu0 0.0
  %3612 = vmatprep.subr.mxu0 0.0
  %3613 = vmatpush1.msra.mxu0 0.0
  %3614 = vmatprep.subr.mxu0 0.0
  %3615 = vmatpush1.msra.mxu0 0.0
  %3616 = vmatprep.subr.mxu0 0.0
  %3617 = vmatpush1.msra.mxu0 0.0
  %3618 = vmatprep.subr.mxu0 0.0
  %3619 = vmatpush1.msra.mxu0 0.0
  %3620 = vmatprep.subr.mxu0 0.0
  %3621 = vmatpush1.msra.mxu0 0.0
  %3622 = vmatprep.subr.mxu0 0.0
  %3623 = vmatpush1.msra.mxu0 0.0
  %3624 = vmatprep.subr.mxu0 0.0
  %3625 = vmatpush1.msra.mxu0 0.0
  %3626 = vmatprep.subr.mxu0 0.0
  %3627 = vmatpush1.msra.mxu0 %v1949
  %3628 = vmatprep.subr.mxu0 0.0
  %3629 = vmatpush1.msra.mxu0 %v1948
  %3630 = vmatprep.subr.mxu0 0.0
  %3631 = vmatpush1.msra.mxu0 %v1947
  %3632 = vmatprep.subr.mxu0 0.0
  %3633 = vmatpush1.msra.mxu0 %v1946
  %3634 = vmatprep.subr.mxu0 0.0
  %3635 = vmatpush1.msra.mxu0 %v1945
  %3636 = vmatprep.subr.mxu0 0.0
  %3637 = vmatpush1.msra.mxu0 %v1944
  %3638 = vmatprep.subr.mxu0 0.0
  %3639 = vmatpush1.msra.mxu0 %v1943
  %3640 = vmatprep.subr.mxu0 0.0
  %3641 = vmatpush1.msra.mxu0 %v1942
  %3642 = vmatprep.subr.mxu0 0.0
  %3643 = vmatpush2.msra.mxu0 0.0
  %3644 = vmatprep.subr.mxu0 0.0
  %3645 = vmatpush2.msra.mxu0 0.0
  %3646 = vmatprep.subr.mxu0 0.0
  %3647 = vmatpush2.msra.mxu0 0.0
  %3648 = vmatprep.subr.mxu0 0.0
  %3649 = vmatpush2.msra.mxu0 0.0
  %3650 = vmatprep.subr.mxu0 0.0
  %3651 = vmatpush2.msra.mxu0 0.0
  %3652 = vmatprep.subr.mxu0 0.0
  %3653 = vmatpush2.msra.mxu0 0.0
  %3654 = vmatprep.subr.mxu0 0.0
  %3655 = vmatpush2.msra.mxu0 0.0
  %3656 = vmatprep.subr.mxu0 0.0
  %3657 = vmatpush2.msra.mxu0 0.0
  %3658 = vmatprep.subr.mxu0 0.0
  %3659 = vmatpush2.msra.mxu0 0.0
  %3660 = vmatprep.subr.mxu0 0.0
  %3661 = vmatpush2.msra.mxu0 0.0
  %3662 = vmatprep.subr.mxu0 0.0
  %3663 = vmatpush2.msra.mxu0 0.0
  %3664 = vmatprep.subr.mxu0 0.0
  %3665 = vmatpush2.msra.mxu0 0.0
  %3666 = vmatprep.subr.mxu0 0.0
  %3667 = vmatpush2.msra.mxu0 0.0
  %3668 = vmatprep.subr.mxu0 0.0
  %3669 = vmatpush2.msra.mxu0 0.0
  %3670 = vmatprep.subr.mxu0 0.0
  %3671 = vmatpush2.msra.mxu0 0.0
  %3672 = vmatprep.subr.mxu0 0.0
  %3673 = vmatpush2.msra.mxu0 0.0
  %3674 = vmatprep.mubr.f32.mxu0 0.0
  %3675 = vmatmul.mubr.f32.gmra.mxu0 %v3605
  %v3676 = vpop.f32.mrf.mxu0
  %v3677 = vadd.f32 %v3603, %v3676
  %v3678 = vpop.f32.mrf.mxu0
  %3679 = vmatprep.mubr.f32.mxu0 0.0
  %3680 = vmatmul.mubr.f32.gmra.mxu0 %v3608
  %v3681 = vpop.f32.mrf.mxu0
  %v3682 = vadd.f32 %v3603, %v3681
  %v3683 = vpop.f32.mrf.mxu0
  %3684 = vdwg.mxu0
  %v3685 = vadd.f32 %v3511, %v3677
  %v3686 = vadd.f32 %v3512, %v3682
  %v3687 = vsel %vm154, %v3685, 0.0
  %3688 = vadd.xlane.f32.xlu0 %v3687
  %v3689 = vpop.xlane.xlu0 %3688
  %v3690 = vsel %vm154, %v3686, 0.0
  %3691 = vadd.xlane.f32.xlu0 %v3690
  %v3692 = vpop.xlane.xlu0 %3691
  %v3693 = vmul.f32 %v3689, %v1684
  %v3694 = vmul.f32 %v3692, %v1684
  %v3695 = vsub.f32 %v3685, %v3693
  %v3696 = vsub.f32 %v3686, %v3694
  %v3697 = vmul.f32 %v3695, %v3695
  %v3698 = vmul.f32 %v3696, %v3696
  %v3699 = vsel %vm154, %v3697, 0.0
  %3700 = vadd.xlane.f32.xlu0 %v3699
  %v3701 = vpop.xlane.xlu0 %3700
  %v3702 = vsel %vm154, %v3698, 0.0
  %3703 = vadd.xlane.f32.xlu0 %v3702
  %v3704 = vpop.xlane.xlu0 %3703
  %v3705 = vmul.f32 %v3701, %v1684
  %v3706 = vmul.f32 %v3704, %v1684
  %v3707 = vadd.f32 %v3705, 1e-05
  %v3708 = vadd.f32 %v3706, 1e-05
  %v3709 = vrsqrt.pop %v3707
  %v3710 = vrsqrt.pop %v3708
  %v3711 = vmul.f32 %v3695, %v3709
  %v3712 = vmul.f32 %v3696, %v3710
  %v3713 = vlaneseq
  %v3714 = vshrl.u32 %v3713, 7
  %v3715 = vsub.s32 6, %v3714
  %v3716 = vrot.slane %v1950, %v3715
  %v3717 = vmul.f32 %v3711, %v3716
  %v3718 = vmul.f32 %v3712, %v3716
  %v3719 = vlaneseq
  %v3720 = vshrl.u32 %v3719, 7
  %v3721 = vsub.s32 7, %v3720
  %v3722 = vrot.slane %v1950, %v3721
  %v3723 = vadd.f32 %v3717, %v3722
  %v3724 = vadd.f32 %v3718, %v3722
  %v3725 = vsel %vm154, %v3723, 0.0
  %v3726 = vrot.slane %v3725, 4
  %v3727 = vadd.f32 %v3725, %v3726
  %v3728 = vrot.slane %v3727, 2
  %v3729 = vadd.f32 %v3727, %v3728
  %v3730 = vrot.slane %v3729, 1
  %v3731 = vadd.f32 %v3729, %v3730
  %v3732 = vsel %vm154, %v3724, 0.0
  %v3733 = vrot.slane %v3732, 4
  %v3734 = vadd.f32 %v3732, %v3733
  %v3735 = vrot.slane %v3734, 2
  %v3736 = vadd.f32 %v3734, %v3735
  %v3737 = vrot.slane %v3736, 1
  %v3738 = vadd.f32 %v3736, %v3737
  %v3739 = vrcp.pop 8.0
  %v3740 = vmul.f32 %v3731, %v3739
  %v3741 = vmul.f32 %v3738, %v3739
  %v3742 = vld [vmem:[%s2 + $0x150] sm:$0x1]
  %v3743 = vld [vmem:[%s2 + $0x151] sm:$0x1]
  %v3744 = vlaneseq
  %v3745 = vshrl.u32 %v3744, 7
  %v3746 = vsub.s32 0, %v3745
  %v3747 = vrot.slane %v3742, %v3746
  %v3748 = vmul.f32 %v3740, %v3747
  %v3749 = vmul.f32 %v3741, %v3747
  %v3752 = vrot.slane %v3749, 7
  %vm3753 = vcmask 1041409
  %v3754 = vsel %vm3753, %v3752, %v3748
  %vm3756 = vcmask 254976
  %v3757 = vsel %vm3756, %v3754, 0.0
  %3758 = vadd.xlane.f32.xlu0 %v3757
  %v3759 = vpop.xlane.xlu0 %3758
  %v3760 = vlaneseq
  %v3761 = vshrl.u32 %v3760, 7
  %v3762 = vsub.s32 0, %v3761
  %v3763 = vrot.slane %v3743, %v3762
  %v3764 = vadd.f32 %v3759, %v3763
  %v3765 = vsub.f32 0.0, %v3764
  %v3766 = vmul.f32 %v3765, 1.442695
  %v3767 = vpow.pop %v3766
  %v3768 = vadd.f32 %v3767, 1.0
  %v3769 = vrcp.pop %v3768
  %v3770 = vmul.f32 1.0, %v3769
  %vm3771 = vcmask 1024
  %3772 = vst.msk [vmem:[%s3] sm:$0x3] %vm3771, %v3770
  // Predicated region
  $region14: #{sentiment_transformer.1} parent=0 // pred_check
    _
  $region15: #{sentiment_transformer.1} parent=0 // pred_check_branch
    %3774 = sbr.rel (0) target = $region17
  $region16: #{sentiment_transformer.1} parent=0 // pred_region
    _
  $region17: #{sentiment_transformer.1} parent=0 // pred_fallthru
    _
  // Predicated region
  $region18: #{sentiment_transformer.1} parent=0 // pred_check
    _
  $region19: #{sentiment_transformer.1} parent=0 // pred_check_branch
    %3776 = sbr.rel (0) target = $region21
  $region20: #{sentiment_transformer.1} parent=0 // pred_region
    _
  $region21: #{sentiment_transformer.1} parent=0 // pred_fallthru
    _

</llo_original>
